<compile_context>
chip_gen: v7x
topology: tpu7x:2x2x1
jax: 0.10.0
libtpu: 0.0.40
codegen_flags: <defaults>
</compile_context>

<pallas_src>
import jax
import jax.numpy as jnp
from jax import lax
from jax.experimental import pallas as pl
from jax.experimental.pallas import tpu as pltpu

_INV_SQRT2 = 0.7071067811865476
_BN_EPS = 1e-5


def _gelu_exact(x):
    # Matches torch.nn.functional.gelu default (erf-based, not tanh approx).
    return x * 0.5 * (1.0 + lax.erf(x * _INV_SQRT2))


def _round_up(n, m):
    return (n + m - 1) // m * m


# ----------------------------------------------------------------------------- kernel
def draftnet_kernel(x_ref, pack_ref,
                    w1_ref, b1_ref,
                    w2_ref, b2_ref,
                    w3_ref, b3_ref,
                    out_ref):
    # x/pack/weights arrive as bf16 (inputs are exactly representable); biases f32.
    # MXU runs bf16 x bf16 -> f32 accumulate; all elementwise math (GELU, bias,
    # pack mask) stays f32 (v5e has no bf16 VPU/EUP, and the VPU has slack anyway).
    h = jnp.dot(x_ref[...], w1_ref[...],
                preferred_element_type=jnp.float32) + b1_ref[...]
    h = _gelu_exact(h)                      # dropout == identity in eval

    h = jnp.dot(h.astype(jnp.bfloat16), w2_ref[...],
                preferred_element_type=jnp.float32) + b2_ref[...]
    h = _gelu_exact(h)
    # eval-mode BatchNorm is pre-folded into w3/b3 (see prepare_params).

    y = jnp.dot(h.astype(jnp.bfloat16), w3_ref[...],
                preferred_element_type=jnp.float32) + b3_ref[...]
    out_ref[...] = y * pack_ref[...].astype(jnp.float32)


# --------------------------------------------------------------------------- wrapper
def prepare_params(raw, pad_to=128):
    """Fold eval-mode BatchNorm into the output layer, zero-pad the card dim and
    hidden dims to lane-aligned (multiple-of-128) sizes, and cast weights to bf16
    (biases stay f32, shape (1, F))."""
    w1, b1 = raw["w1"], raw["b1"]            # (C, H0), (1, H0)
    w2, b2 = raw["w2"], raw["b2"]            # (H0, H1), (1, H1)
    w3, b3 = raw["w3"], raw["b3"]            # (H1, C), (1, C)

    # bn(h) = h * s + t  with running stats (eval mode).
    s = raw["gamma"] * lax.rsqrt(raw["var"] + _BN_EPS)      # (1, H1)
    t = raw["beta"] - raw["mean"] * s                        # (1, H1)
    w3f = w3 * s.reshape(-1, 1)                              # scale rows of (H1, C)
    b3f = b3 + t @ w3                                        # (1, C)

    C, H0 = w1.shape
    H1 = w2.shape[1]
    Cp = _round_up(C, pad_to)                                # e.g. 270 -> 384
    H0p, H1p = _round_up(H0, pad_to), _round_up(H1, pad_to)  # 400->512, 300->384
    # NOTE: if this ever becomes MXU-bound on v6e/v7x (256x256 MXU), pad H1 to 512;
    # 128-alignment is enough while the kernel is DMA/overhead-bound.

    def pad2(a, rows, cols):
        return jnp.pad(a, ((0, rows - a.shape[0]), (0, cols - a.shape[1])))

    # Padded lanes are exactly 0: zero x columns meet zero-padded w1 rows,
    # gelu(0*W + 0) = 0 keeps padded hidden lanes inert through the zero-padded
    # weight rows, and padded output columns are masked by the zero-padded pack
    # and sliced away in the wrapper.
    return dict(
        w1=pad2(w1, Cp, H0p).astype(jnp.bfloat16),  b1=pad2(b1, 1, H0p),
        w2=pad2(w2, H0p, H1p).astype(jnp.bfloat16), b2=pad2(b2, 1, H1p),
        w3=pad2(w3f, H1p, Cp).astype(jnp.bfloat16), b3=pad2(b3f, 1, Cp),
    )


def _tensorcores_per_chip():
    """2 TensorCores per Pallas device on v7x and megacore chips (v4/v5p)."""
    try:
        kind = jax.devices()[0].device_kind.lower()
    except Exception:
        return 1
    return 2 if any(tag in kind for tag in ("v7", "v5p", "v4")) else 1


def _choose_batch_tiling(B, block_b):
    """Few fat grid steps (amortize ~0.35us/step, fill the 256-row MXU on v6e/v7x),
    but keep >= 2 steps on 2-TensorCore chips so 'parallel' feeds both cores."""
    min_steps = 2 if _tensorcores_per_chip() >= 2 else 1
    bb = min(block_b, B)
    if min_steps > 1 and B > 8:
        bb = min(bb, _round_up(-(-B // min_steps), 8))   # ceil(B/2), sublane-aligned
    bb = max(8, _round_up(bb, 8))
    Bp = _round_up(B, bb)
    return bb, Bp


def draftnet_forward(x, pack, params, block_b=256):
    """x, pack: (B, C) float32. Returns (B, C) float32."""
    B, C = x.shape
    w1, b1 = params["w1"], params["b1"]
    w2, b2 = params["w2"], params["b2"]
    w3, b3 = params["w3"], params["b3"]
    Cp, H0p = w1.shape
    H1p = w2.shape[1]
    assert C <= Cp, "params were prepared for a smaller card set than x"

    bb, Bp = _choose_batch_tiling(B, block_b)
    grid = (Bp // bb,)

    # x is small integer counts and pack is a 0/1 mask -> exactly representable in
    # bf16; casting in the wrapper halves the two largest input DMA streams.
    def pad_act(a):
        return jnp.pad(a.astype(jnp.bfloat16), ((0, Bp - B), (0, Cp - C)))

    x_p, pack_p = pad_act(x), pad_act(pack)

    # Activations stream over the batch grid (double-buffered by BlockSpec).
    act_spec = pl.BlockSpec((bb, Cp), lambda i: (i, 0))
    out_spec = pl.BlockSpec((bb, Cp), lambda i: (i, 0))

    def resident(shape):
        # Constant block index across the grid -> DMA'd once, VMEM-resident.
        # (pipeline_mode=pl.Buffered(1) could drop the unused second buffer, but at
        #  ~0.85 MiB of weights vs >= 64 MiB VMEM it is not worth the risk today.)
        return pl.BlockSpec(shape, lambda i: (0, 0))

    flops = 2 * Bp * (Cp * H0p + H0p * H1p + H1p * Cp)
    transcendentals = Bp * (H0p + H1p)
    bytes_accessed = (Bp * Cp * (2 + 2 + 4)                      # x, pack (bf16) + out (f32)
                      + (Cp * H0p + H0p * H1p + H1p * Cp) * 2    # bf16 weights
                      + (H0p + H1p + Cp) * 4)                    # f32 biases

    out = pl.pallas_call(
        draftnet_kernel,
        out_shape=jax.ShapeDtypeStruct((Bp, Cp), jnp.float32),
        grid=grid,
        in_specs=[
            act_spec, act_spec,
            resident((Cp, H0p)), resident((1, H0p)),
            resident((H0p, H1p)), resident((1, H1p)),
            resident((H1p, Cp)), resident((1, Cp)),
        ],
        out_specs=out_spec,
        compiler_params=pltpu.CompilerParams(
            dimension_semantics=("parallel",)),
        cost_estimate=pl.CostEstimate(
            flops=flops,
            transcendentals=transcendentals,
            bytes_accessed=bytes_accessed),
    )(x_p, pack_p, w1, b1, w2, b2, w3, b3)

    return out[:B, :C]


# ------------------------------------------------------------------- reference / init
def draftnet_reference(x, pack, raw):
    """Pure-JAX f32 reference of the original module (unfolded BN, unpadded dims)."""
    h = _gelu_exact(x @ raw["w1"] + raw["b1"])
    h = _gelu_exact(h @ raw["w2"] + raw["b2"])
    h = (h - raw["mean"]) * lax.rsqrt(raw["var"] + _BN_EPS) * raw["gamma"] + raw["beta"]
    return (h @ raw["w3"] + raw["b3"]) * pack


def init_params(key, n_cards, hidden_dims=(400, 300)):
    """Deterministic synthetic parameters with PyTorch-Linear-style scaling."""
    h0, h1 = hidden_dims
    ks = jax.random.split(key, 10)

    def lin(kw, kb, fan_in, fan_out):
        bound = 1.0 / jnp.sqrt(fan_in)
        w = jax.random.uniform(kw, (fan_in, fan_out), jnp.float32, -bound, bound)
        b = jax.random.uniform(kb, (1, fan_out), jnp.float32, -bound, bound)
        return w, b

    w1, b1 = lin(ks[0], ks[1], n_cards, h0)
    w2, b2 = lin(ks[2], ks[3], h0, h1)
    w3, b3 = lin(ks[4], ks[5], h1, n_cards)

    gamma = jax.random.uniform(ks[6], (1, h1), jnp.float32, 0.5, 1.5)
    beta = jax.random.uniform(ks[7], (1, h1), jnp.float32, -0.1, 0.1)
    mean = jax.random.uniform(ks[8], (1, h1), jnp.float32, -0.5, 0.5)
    var = jax.random.uniform(ks[9], (1, h1), jnp.float32, 0.5, 1.5)

    return dict(w1=w1, b1=b1, w2=w2, b2=b2, w3=w3, b3=b3,
                gamma=gamma, beta=beta, mean=mean, var=var)


if __name__ == "__main__":
    B = 256          # batch of pool states (amortizes weight DMA / call overhead)
    N_CARDS = 270    # len(cardnames); realistic non-128-multiple set size (pads to 384)

    key = jax.random.PRNGKey(0)
    k_param, k_x, k_pack = jax.random.split(key, 3)

    raw = init_params(k_param, N_CARDS)
    params = prepare_params(raw)

    # x: card counts in the current pool; pack: 0/1 mask of cards in the pack.
    x = jax.random.randint(k_x, (B, N_CARDS), 0, 3).astype(jnp.float32)
    pack = (jax.random.uniform(k_pack, (B, N_CARDS)) < 0.06).astype(jnp.float32)

    out = draftnet_forward(x, pack, params, block_b=256)
    jax.block_until_ready(out)
    assert out.shape == (B, N_CARDS) and out.dtype == jnp.float32

    ref = draftnet_reference(x, pack, raw)
    assert jnp.allclose(out, ref, atol=5e-2, rtol=5e-2), (
        f"max abs err {float(jnp.max(jnp.abs(out - ref)))}")
    print("KERNEL_OK")
</pallas_src>

<mosaic_0001>
module attributes {stable_mosaic.version = 11 : i64} {
  func.func @draftnet_kernel(%arg0: i32, %arg1: memref<256x384xbf16, #tpu.memory_space<vmem>>, %arg2: memref<256x384xbf16, #tpu.memory_space<vmem>>, %arg3: memref<384x512xbf16, #tpu.memory_space<vmem>>, %arg4: memref<1x512xf32, #tpu.memory_space<vmem>>, %arg5: memref<512x384xbf16, #tpu.memory_space<vmem>>, %arg6: memref<1x384xf32, #tpu.memory_space<vmem>>, %arg7: memref<384x384xbf16, #tpu.memory_space<vmem>>, %arg8: memref<1x384xf32, #tpu.memory_space<vmem>>, %arg9: memref<256x384xf32, #tpu.memory_space<vmem>>) attributes {dimension_semantics = [#tpu.dimension_semantics<parallel>], iteration_bounds = array<i64: 1>, scalar_prefetch = 0 : i64, scratch_operands = 0 : i64, tpu.core_type = #tpu.core_type<tc>, window_params = [{transform_indices = @transform_0, window_bounds = array<i64: 256, 384>}, {transform_indices = @transform_1, window_bounds = array<i64: 256, 384>}, {pipeline_mode = #tpu.pipeline_mode<synchronous>, transform_indices = @transform_2, window_bounds = array<i64: 384, 512>}, {pipeline_mode = #tpu.pipeline_mode<synchronous>, transform_indices = @transform_3, window_bounds = array<i64: 1, 512>}, {pipeline_mode = #tpu.pipeline_mode<synchronous>, transform_indices = @transform_4, window_bounds = array<i64: 512, 384>}, {pipeline_mode = #tpu.pipeline_mode<synchronous>, transform_indices = @transform_5, window_bounds = array<i64: 1, 384>}, {pipeline_mode = #tpu.pipeline_mode<synchronous>, transform_indices = @transform_6, window_bounds = array<i64: 384, 384>}, {pipeline_mode = #tpu.pipeline_mode<synchronous>, transform_indices = @transform_7, window_bounds = array<i64: 1, 384>}, {transform_indices = @transform_8, window_bounds = array<i64: 256, 384>}]} {
    %c0 = arith.constant 0 : index
    %c0_0 = arith.constant 0 : index
    %0 = vector.load %arg1[%c0, %c0_0] : memref<256x384xbf16, #tpu.memory_space<vmem>>, vector<256x384xbf16>
    %c0_1 = arith.constant 0 : index
    %c0_2 = arith.constant 0 : index
    %1 = vector.load %arg3[%c0_1, %c0_2] : memref<384x512xbf16, #tpu.memory_space<vmem>>, vector<384x512xbf16>
    %cst = arith.constant dense<0.000000e+00> : vector<256x512xf32>
    %2 = tpu.matmul %0, %1, %cst {dimension_numbers = #tpu.dot_dimension_numbers<[1], [0], [0], [1], [0, 0, 1, 1], [], []>} : vector<256x384xbf16>, vector<384x512xbf16>, vector<256x512xf32> -> vector<256x512xf32>
    %c0_3 = arith.constant 0 : index
    %c0_4 = arith.constant 0 : index
    %3 = vector.load %arg4[%c0_3, %c0_4] : memref<1x512xf32, #tpu.memory_space<vmem>>, vector<1x512xf32>
    %4 = vector.broadcast %3 : vector<1x512xf32> to vector<256x512xf32>
    %5 = arith.addf %2, %4 : vector<256x512xf32>
    %cst_5 = arith.constant 5.000000e-01 : f32
    %6 = vector.broadcast %cst_5 : f32 to vector<256x512xf32>
    %7 = arith.mulf %5, %6 : vector<256x512xf32>
    %cst_6 = arith.constant 0.707106769 : f32
    %8 = vector.broadcast %cst_6 : f32 to vector<256x512xf32>
    %9 = arith.mulf %5, %8 : vector<256x512xf32>
    %10 = math.erf %9 : vector<256x512xf32>
    %cst_7 = arith.constant 1.000000e+00 : f32
    %11 = vector.broadcast %cst_7 : f32 to vector<256x512xf32>
    %12 = arith.addf %11, %10 : vector<256x512xf32>
    %13 = arith.mulf %7, %12 : vector<256x512xf32>
    %14 = arith.truncf %13 : vector<256x512xf32> to vector<256x512xbf16>
    %c0_8 = arith.constant 0 : index
    %c0_9 = arith.constant 0 : index
    %15 = vector.load %arg5[%c0_8, %c0_9] : memref<512x384xbf16, #tpu.memory_space<vmem>>, vector<512x384xbf16>
    %cst_10 = arith.constant dense<0.000000e+00> : vector<256x384xf32>
    %16 = tpu.matmul %14, %15, %cst_10 {dimension_numbers = #tpu.dot_dimension_numbers<[1], [0], [0], [1], [0, 0, 1, 1], [], []>} : vector<256x512xbf16>, vector<512x384xbf16>, vector<256x384xf32> -> vector<256x384xf32>
    %c0_11 = arith.constant 0 : index
    %c0_12 = arith.constant 0 : index
    %17 = vector.load %arg6[%c0_11, %c0_12] : memref<1x384xf32, #tpu.memory_space<vmem>>, vector<1x384xf32>
    %18 = vector.broadcast %17 : vector<1x384xf32> to vector<256x384xf32>
    %19 = arith.addf %16, %18 : vector<256x384xf32>
    %cst_13 = arith.constant 5.000000e-01 : f32
    %20 = vector.broadcast %cst_13 : f32 to vector<256x384xf32>
    %21 = arith.mulf %19, %20 : vector<256x384xf32>
    %cst_14 = arith.constant 0.707106769 : f32
    %22 = vector.broadcast %cst_14 : f32 to vector<256x384xf32>
    %23 = arith.mulf %19, %22 : vector<256x384xf32>
    %24 = math.erf %23 : vector<256x384xf32>
    %cst_15 = arith.constant 1.000000e+00 : f32
    %25 = vector.broadcast %cst_15 : f32 to vector<256x384xf32>
    %26 = arith.addf %25, %24 : vector<256x384xf32>
    %27 = arith.mulf %21, %26 : vector<256x384xf32>
    %28 = arith.truncf %27 : vector<256x384xf32> to vector<256x384xbf16>
    %c0_16 = arith.constant 0 : index
    %c0_17 = arith.constant 0 : index
    %29 = vector.load %arg7[%c0_16, %c0_17] : memref<384x384xbf16, #tpu.memory_space<vmem>>, vector<384x384xbf16>
    %cst_18 = arith.constant dense<0.000000e+00> : vector<256x384xf32>
    %30 = tpu.matmul %28, %29, %cst_18 {dimension_numbers = #tpu.dot_dimension_numbers<[1], [0], [0], [1], [0, 0, 1, 1], [], []>} : vector<256x384xbf16>, vector<384x384xbf16>, vector<256x384xf32> -> vector<256x384xf32>
    %c0_19 = arith.constant 0 : index
    %c0_20 = arith.constant 0 : index
    %31 = vector.load %arg8[%c0_19, %c0_20] : memref<1x384xf32, #tpu.memory_space<vmem>>, vector<1x384xf32>
    %32 = vector.broadcast %31 : vector<1x384xf32> to vector<256x384xf32>
    %33 = arith.addf %30, %32 : vector<256x384xf32>
    %c0_21 = arith.constant 0 : index
    %c0_22 = arith.constant 0 : index
    %34 = vector.load %arg2[%c0_21, %c0_22] : memref<256x384xbf16, #tpu.memory_space<vmem>>, vector<256x384xbf16>
    %35 = arith.extf %34 : vector<256x384xbf16> to vector<256x384xf32>
    %36 = arith.mulf %33, %35 : vector<256x384xf32>
    %c0_23 = arith.constant 0 : index
    %c0_24 = arith.constant 0 : index
    %37 = vector.load %arg9[%c0_23, %c0_24] : memref<256x384xf32, #tpu.memory_space<vmem>>, vector<256x384xf32>
    tpu.vector_store %arg9[%c0_23, %c0_24], %36 {strides = array<i32>} : memref<256x384xf32, #tpu.memory_space<vmem>>, vector<256x384xf32>,
    return
  }
  func.func @transform_0(%arg0: i32) -> (i32, i32) {
    %c0_i32 = arith.constant 0 : i32
    %c0_i32_0 = arith.constant 0 : i32
    return %arg0, %c0_i32 : i32, i32
  }
  func.func @transform_1(%arg0: i32) -> (i32, i32) {
    %c0_i32 = arith.constant 0 : i32
    %c0_i32_0 = arith.constant 0 : i32
    return %arg0, %c0_i32 : i32, i32
  }
  func.func @transform_2(%arg0: i32) -> (i32, i32) {
    %c0_i32 = arith.constant 0 : i32
    %c0_i32_0 = arith.constant 0 : i32
    %c0_i32_1 = arith.constant 0 : i32
    return %c0_i32, %c0_i32_0 : i32, i32
  }
  func.func @transform_3(%arg0: i32) -> (i32, i32) {
    %c0_i32 = arith.constant 0 : i32
    %c0_i32_0 = arith.constant 0 : i32
    %c0_i32_1 = arith.constant 0 : i32
    return %c0_i32, %c0_i32_0 : i32, i32
  }
  func.func @transform_4(%arg0: i32) -> (i32, i32) {
    %c0_i32 = arith.constant 0 : i32
    %c0_i32_0 = arith.constant 0 : i32
    %c0_i32_1 = arith.constant 0 : i32
    return %c0_i32, %c0_i32_0 : i32, i32
  }
  func.func @transform_5(%arg0: i32) -> (i32, i32) {
    %c0_i32 = arith.constant 0 : i32
    %c0_i32_0 = arith.constant 0 : i32
    %c0_i32_1 = arith.constant 0 : i32
    return %c0_i32, %c0_i32_0 : i32, i32
  }
  func.func @transform_6(%arg0: i32) -> (i32, i32) {
    %c0_i32 = arith.constant 0 : i32
    %c0_i32_0 = arith.constant 0 : i32
    %c0_i32_1 = arith.constant 0 : i32
    return %c0_i32, %c0_i32_0 : i32, i32
  }
  func.func @transform_7(%arg0: i32) -> (i32, i32) {
    %c0_i32 = arith.constant 0 : i32
    %c0_i32_0 = arith.constant 0 : i32
    %c0_i32_1 = arith.constant 0 : i32
    return %c0_i32, %c0_i32_0 : i32, i32
  }
  func.func @transform_8(%arg0: i32) -> (i32, i32) {
    %c0_i32 = arith.constant 0 : i32
    %c0_i32_0 = arith.constant 0 : i32
    return %arg0, %c0_i32 : i32, i32
  }
}

</mosaic_0001>

<llo_original>
// kernel: tpu_custom_call.1
$region0: #{tpu_custom_call.1}
  #allocation0 [shape = 'u32[]', space=smem, size = 0x4, offset = 0x4, fixed_abs, tag = 'smem constant byte address 0x4 - core index']
  #allocation1 [shape = 'u32[144,128]{1,0:T(1,128)}', space=vmem, size = 0x12000, scoped, tag = 'internal scratch']
  %s0 = inlined_call_operand.hbm [shape: bf16[256,384], index: 0, kind: input, shape index: {}]
  %s1 = inlined_call_operand.hbm [shape: bf16[256,384], index: 1, kind: input, shape index: {}]
  %s2 = inlined_call_operand.hbm [shape: bf16[384,512], index: 2, kind: input, shape index: {}]
  %s3 = inlined_call_operand.vmem [shape: f32[1,512], index: 3, kind: input, shape index: {}]
  %s4 = inlined_call_operand.hbm [shape: bf16[512,384], index: 4, kind: input, shape index: {}]
  %s5 = inlined_call_operand.vmem [shape: f32[1,384], index: 5, kind: input, shape index: {}]
  %s6 = inlined_call_operand.hbm [shape: bf16[384,384], index: 6, kind: input, shape index: {}]
  %s7 = inlined_call_operand.vmem [shape: f32[1,384], index: 7, kind: input, shape index: {}]
  %s8 = inlined_call_operand.hbm [shape: f32[256,384], index: 8, kind: output, shape index: {}]
  %s9 = sld [smem:[#allocation0]]
  $region62: #{tpu_custom_call.1} parent=0
    _
  %s11 = ssub.s32 1, %s9
  %s12 = scalar_select 0, %s11, %s9
  $region1: #{tpu_custom_call.1} parent=0
    #allocation2 [shape = 'u8[196608]{0}', space=vmem, size = 0x30000, scoped, tag = 'input window, operand 0, single buffered']
    #allocation3 [shape = 's32[1]{0}', space=sflag, size = 0x4, scoped, tag = 'scoped memory for tpu_custom_call.1']
    #allocation4 [shape = 's32[1]{0}', space=sflag, size = 0x4, scoped, tag = 'scoped memory for tpu_custom_call.1']
    #allocation5 [shape = 'u8[196608]{0}', space=vmem, size = 0x30000, scoped, tag = 'input window, operand 1, single buffered']
    #allocation6 [shape = 's32[1]{0}', space=sflag, size = 0x4, scoped, tag = 'scoped memory for tpu_custom_call.1']
    #allocation7 [shape = 'u8[393216]{0}', space=vmem, size = 0x60000, scoped, tag = 'input window, operand 2, single buffered']
    #allocation8 [shape = 'u8[393216]{0}', space=vmem, size = 0x60000, scoped, tag = 'input window, operand 4, single buffered']
    #allocation9 [shape = 's32[1]{0}', space=sflag, size = 0x4, scoped, tag = 'scoped memory for tpu_custom_call.1']
    #allocation10 [shape = 'u8[294912]{0}', space=vmem, size = 0x48000, scoped, tag = 'input window, operand 6, single buffered']
    #allocation11 [shape = 'u8[393216]{0}', space=vmem, size = 0x60000, scoped, tag = 'output window, operand 0, single buffered']
    %13 = vsyncpa [#allocation3], 0
    %14 = vsyncpa [#allocation6], 0
    %15 = vsyncpa [#allocation9], 0
    %16 = vsyncpa [#allocation4], 0
    // Predicated region
    $region2: #{tpu_custom_call.1} parent=1 // pred_check
      _
    $region3: #{tpu_custom_call.1} parent=1 // pred_check_branch
      %18 = sbr.rel (0) target = $region5
    $region4: #{tpu_custom_call.1} parent=1 // pred_region
      %s20 = ssub.s32 6144, 6144
      %21 = vsyncadd [#allocation3], %s20
      %s22 = sshll.u32 [#allocation2], 4
      %s23 = int_to_ptr.vmem [resolvable:$true] %s22
      %28 = dma.hbm_to_vmem [thread:$0]  %s0, 6144, %s23, [#allocation3], 192, 192, 12
    $region5: #{tpu_custom_call.1} parent=1 // pred_fallthru
      _
    // Predicated region
    $region6: #{tpu_custom_call.1} parent=1 // pred_check
      _
    $region7: #{tpu_custom_call.1} parent=1 // pred_check_branch
      %30 = sbr.rel (0) target = $region9
    $region8: #{tpu_custom_call.1} parent=1 // pred_region
      %s32 = ssub.s32 6144, 6144
      %33 = vsyncadd [#allocation6], %s32
      %s34 = sshll.u32 [#allocation5], 4
      %s35 = int_to_ptr.vmem [resolvable:$true] %s34
      %40 = dma.hbm_to_vmem [thread:$0]  %s1, 6144, %s35, [#allocation6], 192, 192, 12
    $region9: #{tpu_custom_call.1} parent=1 // pred_fallthru
      _
    // Predicated region
    $region10: #{tpu_custom_call.1} parent=1 // pred_check
      _
    $region11: #{tpu_custom_call.1} parent=1 // pred_check_branch
      %42 = sbr.rel (0) target = $region13
    $region12: #{tpu_custom_call.1} parent=1 // pred_region
      %s44 = ssub.s32 12288, 12288
      %45 = vsyncadd [#allocation6], %s44
      %s46 = sshll.u32 [#allocation7], 4
      %s47 = int_to_ptr.vmem [resolvable:$true] %s46
      %52 = dma.hbm_to_vmem [thread:$0]  %s2, 12288, %s47, [#allocation6], 256, 256, 16
    $region13: #{tpu_custom_call.1} parent=1 // pred_fallthru
      _
    // Predicated region
    $region14: #{tpu_custom_call.1} parent=1 // pred_check
      _
    $region15: #{tpu_custom_call.1} parent=1 // pred_check_branch
      %54 = sbr.rel (0) target = $region17
    $region16: #{tpu_custom_call.1} parent=1 // pred_region
      _
    $region17: #{tpu_custom_call.1} parent=1 // pred_fallthru
      _
    // Predicated region
    $region18: #{tpu_custom_call.1} parent=1 // pred_check
      _
    $region19: #{tpu_custom_call.1} parent=1 // pred_check_branch
      %56 = sbr.rel (0) target = $region21
    $region20: #{tpu_custom_call.1} parent=1 // pred_region
      %s58 = ssub.s32 12288, 12288
      %59 = vsyncadd [#allocation9], %s58
      %s60 = sshll.u32 [#allocation8], 4
      %s61 = int_to_ptr.vmem [resolvable:$true] %s60
      %66 = dma.hbm_to_vmem [thread:$0]  %s4, 12288, %s61, [#allocation9], 192, 192, 12
    $region21: #{tpu_custom_call.1} parent=1 // pred_fallthru
      _
    // Predicated region
    $region22: #{tpu_custom_call.1} parent=1 // pred_check
      _
    $region23: #{tpu_custom_call.1} parent=1 // pred_check_branch
      %68 = sbr.rel (0) target = $region25
    $region24: #{tpu_custom_call.1} parent=1 // pred_region
      _
    $region25: #{tpu_custom_call.1} parent=1 // pred_fallthru
      _
    // Predicated region
    $region26: #{tpu_custom_call.1} parent=1 // pred_check
      _
    $region27: #{tpu_custom_call.1} parent=1 // pred_check_branch
      %70 = sbr.rel (0) target = $region29
    $region28: #{tpu_custom_call.1} parent=1 // pred_region
      %s72 = ssub.s32 9216, 9216
      %73 = vsyncadd [#allocation9], %s72
      %s74 = sshll.u32 [#allocation10], 4
      %s75 = int_to_ptr.vmem [resolvable:$true] %s74
      %80 = dma.hbm_to_vmem [thread:$0]  %s6, 9216, %s75, [#allocation9], 192, 192, 12
    $region29: #{tpu_custom_call.1} parent=1 // pred_fallthru
      _
    // Predicated region
    $region30: #{tpu_custom_call.1} parent=1 // pred_check
      _
    $region31: #{tpu_custom_call.1} parent=1 // pred_check_branch
      %82 = sbr.rel (0) target = $region33
    $region32: #{tpu_custom_call.1} parent=1 // pred_region
      _
    $region33: #{tpu_custom_call.1} parent=1 // pred_fallthru
      _
    // Predicated region
    $region34: #{tpu_custom_call.1} parent=1 // pred_check
      _
    $region35: #{tpu_custom_call.1} parent=1 // pred_check_branch
      %84 = sbr.rel (0) target = $region37
    $region36: #{tpu_custom_call.1} parent=1 // pred_region
      %85 = dma.done [#allocation3], 6144
    $region37: #{tpu_custom_call.1} parent=1 // pred_fallthru
      _
    // Predicated region
    $region38: #{tpu_custom_call.1} parent=1 // pred_check
      _
    $region39: #{tpu_custom_call.1} parent=1 // pred_check_branch
      %87 = sbr.rel (0) target = $region41
    $region40: #{tpu_custom_call.1} parent=1 // pred_region
      %88 = dma.done [#allocation6], 6144
    $region41: #{tpu_custom_call.1} parent=1 // pred_fallthru
      _
    // Predicated region
    $region42: #{tpu_custom_call.1} parent=1 // pred_check
      _
    $region43: #{tpu_custom_call.1} parent=1 // pred_check_branch
      %90 = sbr.rel (0) target = $region45
    $region44: #{tpu_custom_call.1} parent=1 // pred_region
      %91 = dma.done [#allocation6], 12288
    $region45: #{tpu_custom_call.1} parent=1 // pred_fallthru
      _
    // Predicated region
    $region46: #{tpu_custom_call.1} parent=1 // pred_check
      _
    $region47: #{tpu_custom_call.1} parent=1 // pred_check_branch
      %93 = sbr.rel (0) target = $region49
    $region48: #{tpu_custom_call.1} parent=1 // pred_region
      %94 = dma.done [#allocation9], 12288
    $region49: #{tpu_custom_call.1} parent=1 // pred_fallthru
      _
    // Predicated region
    $region50: #{tpu_custom_call.1} parent=1 // pred_check
      _
    $region51: #{tpu_custom_call.1} parent=1 // pred_check_branch
      %96 = sbr.rel (0) target = $region53
    $region52: #{tpu_custom_call.1} parent=1 // pred_region
      %97 = dma.done [#allocation9], 9216
    $region53: #{tpu_custom_call.1} parent=1 // pred_fallthru
      _
    %v99 = vld [vmem:[#allocation2] sm:$0xff]
    %v100 = vld [vmem:[#allocation2 + $0x8] sm:$0xf]
    %v101 = vld [vmem:[#allocation2 + $0xc] sm:$0xff]
    %v102 = vld [vmem:[#allocation2 + $0x14] sm:$0xf]
    %v103 = vld [vmem:[#allocation2 + $0x18] sm:$0xff]
    %v104 = vld [vmem:[#allocation2 + $0x20] sm:$0xf]
    %v105 = vld [vmem:[#allocation2 + $0x24] sm:$0xff]
    %v106 = vld [vmem:[#allocation2 + $0x2c] sm:$0xf]
    %v107 = vld [vmem:[#allocation2 + $0x30] sm:$0xff]
    %v108 = vld [vmem:[#allocation2 + $0x38] sm:$0xf]
    %v109 = vld [vmem:[#allocation2 + $0x3c] sm:$0xff]
    %v110 = vld [vmem:[#allocation2 + $0x44] sm:$0xf]
    %v111 = vld [vmem:[#allocation2 + $0x48] sm:$0xff]
    %v112 = vld [vmem:[#allocation2 + $0x50] sm:$0xf]
    %v113 = vld [vmem:[#allocation2 + $0x54] sm:$0xff]
    %v114 = vld [vmem:[#allocation2 + $0x5c] sm:$0xf]
    %v115 = vld [vmem:[#allocation2 + $0x60] sm:$0xff]
    %v116 = vld [vmem:[#allocation2 + $0x68] sm:$0xf]
    %v117 = vld [vmem:[#allocation2 + $0x6c] sm:$0xff]
    %v118 = vld [vmem:[#allocation2 + $0x74] sm:$0xf]
    %v119 = vld [vmem:[#allocation2 + $0x78] sm:$0xff]
    %v120 = vld [vmem:[#allocation2 + $0x80] sm:$0xf]
    %v121 = vld [vmem:[#allocation2 + $0x84] sm:$0xff]
    %v122 = vld [vmem:[#allocation2 + $0x8c] sm:$0xf]
    %v123 = vld [vmem:[#allocation2 + $0x90] sm:$0xff]
    %v124 = vld [vmem:[#allocation2 + $0x98] sm:$0xf]
    %v125 = vld [vmem:[#allocation2 + $0x9c] sm:$0xff]
    %v126 = vld [vmem:[#allocation2 + $0xa4] sm:$0xf]
    %v127 = vld [vmem:[#allocation2 + $0xa8] sm:$0xff]
    %v128 = vld [vmem:[#allocation2 + $0xb0] sm:$0xf]
    %v129 = vld [vmem:[#allocation2 + $0xb4] sm:$0xff]
    %v130 = vld [vmem:[#allocation2 + $0xbc] sm:$0xf]
    %v131 = vld [vmem:[#allocation2 + $0xc0] sm:$0xff]
    %v132 = vld [vmem:[#allocation2 + $0xc8] sm:$0xf]
    %v133 = vld [vmem:[#allocation2 + $0xcc] sm:$0xff]
    %v134 = vld [vmem:[#allocation2 + $0xd4] sm:$0xf]
    %v135 = vld [vmem:[#allocation2 + $0xd8] sm:$0xff]
    %v136 = vld [vmem:[#allocation2 + $0xe0] sm:$0xf]
    %v137 = vld [vmem:[#allocation2 + $0xe4] sm:$0xff]
    %v138 = vld [vmem:[#allocation2 + $0xec] sm:$0xf]
    %v139 = vld [vmem:[#allocation2 + $0xf0] sm:$0xff]
    %v140 = vld [vmem:[#allocation2 + $0xf8] sm:$0xf]
    %v141 = vld [vmem:[#allocation2 + $0xfc] sm:$0xff]
    %v142 = vld [vmem:[#allocation2 + $0x104] sm:$0xf]
    %v143 = vld [vmem:[#allocation2 + $0x108] sm:$0xff]
    %v144 = vld [vmem:[#allocation2 + $0x110] sm:$0xf]
    %v145 = vld [vmem:[#allocation2 + $0x114] sm:$0xff]
    %v146 = vld [vmem:[#allocation2 + $0x11c] sm:$0xf]
    %v147 = vld [vmem:[#allocation2 + $0x120] sm:$0xff]
    %v148 = vld [vmem:[#allocation2 + $0x128] sm:$0xf]
    %v149 = vld [vmem:[#allocation2 + $0x12c] sm:$0xff]
    %v150 = vld [vmem:[#allocation2 + $0x134] sm:$0xf]
    %v151 = vld [vmem:[#allocation2 + $0x138] sm:$0xff]
    %v152 = vld [vmem:[#allocation2 + $0x140] sm:$0xf]
    %v153 = vld [vmem:[#allocation2 + $0x144] sm:$0xff]
    %v154 = vld [vmem:[#allocation2 + $0x14c] sm:$0xf]
    %v155 = vld [vmem:[#allocation2 + $0x150] sm:$0xff]
    %v156 = vld [vmem:[#allocation2 + $0x158] sm:$0xf]
    %v157 = vld [vmem:[#allocation2 + $0x15c] sm:$0xff]
    %v158 = vld [vmem:[#allocation2 + $0x164] sm:$0xf]
    %v159 = vld [vmem:[#allocation2 + $0x168] sm:$0xff]
    %v160 = vld [vmem:[#allocation2 + $0x170] sm:$0xf]
    %v161 = vld [vmem:[#allocation2 + $0x174] sm:$0xff]
    %v162 = vld [vmem:[#allocation2 + $0x17c] sm:$0xf]
    %v163 = vld [vmem:[#allocation7] sm:$0xff]
    %v164 = vld [vmem:[#allocation7 + $0x8] sm:$0xff]
    %v165 = vld [vmem:[#allocation7 + $0x10] sm:$0xff]
    %v166 = vld [vmem:[#allocation7 + $0x18] sm:$0xff]
    %v167 = vld [vmem:[#allocation7 + $0x20] sm:$0xff]
    %v168 = vld [vmem:[#allocation7 + $0x28] sm:$0xff]
    %v169 = vld [vmem:[#allocation7 + $0x30] sm:$0xff]
    %v170 = vld [vmem:[#allocation7 + $0x38] sm:$0xff]
    %v171 = vld [vmem:[#allocation7 + $0x40] sm:$0xff]
    %v172 = vld [vmem:[#allocation7 + $0x48] sm:$0xff]
    %v173 = vld [vmem:[#allocation7 + $0x50] sm:$0xff]
    %v174 = vld [vmem:[#allocation7 + $0x58] sm:$0xff]
    %v175 = vld [vmem:[#allocation7 + $0x60] sm:$0xff]
    %v176 = vld [vmem:[#allocation7 + $0x68] sm:$0xff]
    %v177 = vld [vmem:[#allocation7 + $0x70] sm:$0xff]
    %v178 = vld [vmem:[#allocation7 + $0x78] sm:$0xff]
    %v179 = vld [vmem:[#allocation7 + $0x80] sm:$0xff]
    %v180 = vld [vmem:[#allocation7 + $0x88] sm:$0xff]
    %v181 = vld [vmem:[#allocation7 + $0x90] sm:$0xff]
    %v182 = vld [vmem:[#allocation7 + $0x98] sm:$0xff]
    %v183 = vld [vmem:[#allocation7 + $0xa0] sm:$0xff]
    %v184 = vld [vmem:[#allocation7 + $0xa8] sm:$0xff]
    %v185 = vld [vmem:[#allocation7 + $0xb0] sm:$0xff]
    %v186 = vld [vmem:[#allocation7 + $0xb8] sm:$0xff]
    %v187 = vld [vmem:[#allocation7 + $0xc0] sm:$0xff]
    %v188 = vld [vmem:[#allocation7 + $0xc8] sm:$0xff]
    %v189 = vld [vmem:[#allocation7 + $0xd0] sm:$0xff]
    %v190 = vld [vmem:[#allocation7 + $0xd8] sm:$0xff]
    %v191 = vld [vmem:[#allocation7 + $0xe0] sm:$0xff]
    %v192 = vld [vmem:[#allocation7 + $0xe8] sm:$0xff]
    %v193 = vld [vmem:[#allocation7 + $0xf0] sm:$0xff]
    %v194 = vld [vmem:[#allocation7 + $0xf8] sm:$0xff]
    %v195 = vld [vmem:[#allocation7 + $0x100] sm:$0xff]
    %v196 = vld [vmem:[#allocation7 + $0x108] sm:$0xff]
    %v197 = vld [vmem:[#allocation7 + $0x110] sm:$0xff]
    %v198 = vld [vmem:[#allocation7 + $0x118] sm:$0xff]
    %v199 = vld [vmem:[#allocation7 + $0x120] sm:$0xff]
    %v200 = vld [vmem:[#allocation7 + $0x128] sm:$0xff]
    %v201 = vld [vmem:[#allocation7 + $0x130] sm:$0xff]
    %v202 = vld [vmem:[#allocation7 + $0x138] sm:$0xff]
    %v203 = vld [vmem:[#allocation7 + $0x140] sm:$0xff]
    %v204 = vld [vmem:[#allocation7 + $0x148] sm:$0xff]
    %v205 = vld [vmem:[#allocation7 + $0x150] sm:$0xff]
    %v206 = vld [vmem:[#allocation7 + $0x158] sm:$0xff]
    %v207 = vld [vmem:[#allocation7 + $0x160] sm:$0xff]
    %v208 = vld [vmem:[#allocation7 + $0x168] sm:$0xff]
    %v209 = vld [vmem:[#allocation7 + $0x170] sm:$0xff]
    %v210 = vld [vmem:[#allocation7 + $0x178] sm:$0xff]
    %v211 = vld [vmem:[#allocation7 + $0x180] sm:$0xff]
    %v212 = vld [vmem:[#allocation7 + $0x188] sm:$0xff]
    %v213 = vld [vmem:[#allocation7 + $0x190] sm:$0xff]
    %v214 = vld [vmem:[#allocation7 + $0x198] sm:$0xff]
    %v215 = vld [vmem:[#allocation7 + $0x1a0] sm:$0xff]
    %v216 = vld [vmem:[#allocation7 + $0x1a8] sm:$0xff]
    %v217 = vld [vmem:[#allocation7 + $0x1b0] sm:$0xff]
    %v218 = vld [vmem:[#allocation7 + $0x1b8] sm:$0xff]
    %v219 = vld [vmem:[#allocation7 + $0x1c0] sm:$0xff]
    %v220 = vld [vmem:[#allocation7 + $0x1c8] sm:$0xff]
    %v221 = vld [vmem:[#allocation7 + $0x1d0] sm:$0xff]
    %v222 = vld [vmem:[#allocation7 + $0x1d8] sm:$0xff]
    %v223 = vld [vmem:[#allocation7 + $0x1e0] sm:$0xff]
    %v224 = vld [vmem:[#allocation7 + $0x1e8] sm:$0xff]
    %v225 = vld [vmem:[#allocation7 + $0x1f0] sm:$0xff]
    %v226 = vld [vmem:[#allocation7 + $0x1f8] sm:$0xff]
    %v227 = vld [vmem:[#allocation7 + $0x200] sm:$0xff]
    %v228 = vld [vmem:[#allocation7 + $0x208] sm:$0xff]
    %v229 = vld [vmem:[#allocation7 + $0x210] sm:$0xff]
    %v230 = vld [vmem:[#allocation7 + $0x218] sm:$0xff]
    %v231 = vld [vmem:[#allocation7 + $0x220] sm:$0xff]
    %v232 = vld [vmem:[#allocation7 + $0x228] sm:$0xff]
    %v233 = vld [vmem:[#allocation7 + $0x230] sm:$0xff]
    %v234 = vld [vmem:[#allocation7 + $0x238] sm:$0xff]
    %v235 = vld [vmem:[#allocation7 + $0x240] sm:$0xff]
    %v236 = vld [vmem:[#allocation7 + $0x248] sm:$0xff]
    %v237 = vld [vmem:[#allocation7 + $0x250] sm:$0xff]
    %v238 = vld [vmem:[#allocation7 + $0x258] sm:$0xff]
    %v239 = vld [vmem:[#allocation7 + $0x260] sm:$0xff]
    %v240 = vld [vmem:[#allocation7 + $0x268] sm:$0xff]
    %v241 = vld [vmem:[#allocation7 + $0x270] sm:$0xff]
    %v242 = vld [vmem:[#allocation7 + $0x278] sm:$0xff]
    %v243 = vld [vmem:[#allocation7 + $0x280] sm:$0xff]
    %v244 = vld [vmem:[#allocation7 + $0x288] sm:$0xff]
    %v245 = vld [vmem:[#allocation7 + $0x290] sm:$0xff]
    %v246 = vld [vmem:[#allocation7 + $0x298] sm:$0xff]
    %v247 = vld [vmem:[#allocation7 + $0x2a0] sm:$0xff]
    %v248 = vld [vmem:[#allocation7 + $0x2a8] sm:$0xff]
    %v249 = vld [vmem:[#allocation7 + $0x2b0] sm:$0xff]
    %v250 = vld [vmem:[#allocation7 + $0x2b8] sm:$0xff]
    %v251 = vld [vmem:[#allocation7 + $0x2c0] sm:$0xff]
    %v252 = vld [vmem:[#allocation7 + $0x2c8] sm:$0xff]
    %v253 = vld [vmem:[#allocation7 + $0x2d0] sm:$0xff]
    %v254 = vld [vmem:[#allocation7 + $0x2d8] sm:$0xff]
    %v255 = vld [vmem:[#allocation7 + $0x2e0] sm:$0xff]
    %v256 = vld [vmem:[#allocation7 + $0x2e8] sm:$0xff]
    %v257 = vld [vmem:[#allocation7 + $0x2f0] sm:$0xff]
    %v258 = vld [vmem:[#allocation7 + $0x2f8] sm:$0xff]
    %v259 = vld [vmem:[%s3] sm:$0xf]
    %v261 = vlaneseq
    %v262 = vshrl.u32 %v261, 7
    %v263 = vsub.s32 0, %v262
    %v264 = vrot.slane %v259, %v263
    %v265 = vlaneseq
    %v266 = vshrl.u32 %v265, 7
    %v267 = vsub.s32 1, %v266
    %v268 = vrot.slane %v259, %v267
    %v269 = vlaneseq
    %v270 = vshrl.u32 %v269, 7
    %v271 = vsub.s32 2, %v270
    %v272 = vrot.slane %v259, %v271
    %v273 = vlaneseq
    %v274 = vshrl.u32 %v273, 7
    %v275 = vsub.s32 3, %v274
    %v276 = vrot.slane %v259, %v275
    %v345 = vunpack.c.l.b16 %v99
    %v346 = vunpack.c.h.b16 %v99
    %v347 = vunpack.c.l.b16 %v100
    %v348 = vunpack.c.l.b16 %v101
    %v349 = vunpack.c.h.b16 %v101
    %v350 = vunpack.c.l.b16 %v102
    %v351 = vunpack.c.l.b16 %v103
    %v352 = vunpack.c.h.b16 %v103
    %v353 = vunpack.c.l.b16 %v104
    %v354 = vunpack.c.l.b16 %v105
    %v355 = vunpack.c.h.b16 %v105
    %v356 = vunpack.c.l.b16 %v106
    %v357 = vunpack.c.l.b16 %v107
    %v358 = vunpack.c.h.b16 %v107
    %v359 = vunpack.c.l.b16 %v108
    %v360 = vunpack.c.l.b16 %v109
    %v361 = vunpack.c.h.b16 %v109
    %v362 = vunpack.c.l.b16 %v110
    %v363 = vunpack.c.l.b16 %v111
    %v364 = vunpack.c.h.b16 %v111
    %v365 = vunpack.c.l.b16 %v112
    %v366 = vunpack.c.l.b16 %v113
    %v367 = vunpack.c.h.b16 %v113
    %v368 = vunpack.c.l.b16 %v114
    %v369 = vunpack.c.l.b16 %v115
    %v370 = vunpack.c.h.b16 %v115
    %v371 = vunpack.c.l.b16 %v116
    %v372 = vunpack.c.l.b16 %v117
    %v373 = vunpack.c.h.b16 %v117
    %v374 = vunpack.c.l.b16 %v118
    %v375 = vunpack.c.l.b16 %v119
    %v376 = vunpack.c.h.b16 %v119
    %v377 = vunpack.c.l.b16 %v120
    %v378 = vunpack.c.l.b16 %v121
    %v379 = vunpack.c.h.b16 %v121
    %v380 = vunpack.c.l.b16 %v122
    %v381 = vunpack.c.l.b16 %v123
    %v382 = vunpack.c.h.b16 %v123
    %v383 = vunpack.c.l.b16 %v124
    %v384 = vunpack.c.l.b16 %v125
    %v385 = vunpack.c.h.b16 %v125
    %v386 = vunpack.c.l.b16 %v126
    %v387 = vunpack.c.l.b16 %v127
    %v388 = vunpack.c.h.b16 %v127
    %v389 = vunpack.c.l.b16 %v128
    %v390 = vunpack.c.l.b16 %v129
    %v391 = vunpack.c.h.b16 %v129
    %v392 = vunpack.c.l.b16 %v130
    %v393 = vunpack.c.l.b16 %v131
    %v394 = vunpack.c.h.b16 %v131
    %v395 = vunpack.c.l.b16 %v132
    %v396 = vunpack.c.l.b16 %v133
    %v397 = vunpack.c.h.b16 %v133
    %v398 = vunpack.c.l.b16 %v134
    %v399 = vunpack.c.l.b16 %v135
    %v400 = vunpack.c.h.b16 %v135
    %v401 = vunpack.c.l.b16 %v136
    %v402 = vunpack.c.l.b16 %v137
    %v403 = vunpack.c.h.b16 %v137
    %v404 = vunpack.c.l.b16 %v138
    %v405 = vunpack.c.l.b16 %v139
    %v406 = vunpack.c.h.b16 %v139
    %v407 = vunpack.c.l.b16 %v140
    %v408 = vunpack.c.l.b16 %v141
    %v409 = vunpack.c.h.b16 %v141
    %v410 = vunpack.c.l.b16 %v142
    %v411 = vunpack.c.l.b16 %v143
    %v412 = vunpack.c.h.b16 %v143
    %v413 = vunpack.c.l.b16 %v144
    %v414 = vunpack.c.l.b16 %v145
    %v415 = vunpack.c.h.b16 %v145
    %v416 = vunpack.c.l.b16 %v146
    %v417 = vunpack.c.l.b16 %v147
    %v418 = vunpack.c.h.b16 %v147
    %v419 = vunpack.c.l.b16 %v148
    %v420 = vunpack.c.l.b16 %v149
    %v421 = vunpack.c.h.b16 %v149
    %v422 = vunpack.c.l.b16 %v150
    %v423 = vunpack.c.l.b16 %v151
    %v424 = vunpack.c.h.b16 %v151
    %v425 = vunpack.c.l.b16 %v152
    %v426 = vunpack.c.l.b16 %v153
    %v427 = vunpack.c.h.b16 %v153
    %v428 = vunpack.c.l.b16 %v154
    %v429 = vunpack.c.l.b16 %v155
    %v430 = vunpack.c.h.b16 %v155
    %v431 = vunpack.c.l.b16 %v156
    %v432 = vunpack.c.l.b16 %v157
    %v433 = vunpack.c.h.b16 %v157
    %v434 = vunpack.c.l.b16 %v158
    %v435 = vunpack.c.l.b16 %v159
    %v436 = vunpack.c.h.b16 %v159
    %v437 = vunpack.c.l.b16 %v160
    %v438 = vunpack.c.l.b16 %v161
    %v439 = vunpack.c.h.b16 %v161
    %v440 = vunpack.c.l.b16 %v162
    %v441 = vpack.c.b16 %v348, %v345
    %v442 = vpack.c.b16 %v349, %v346
    %v443 = vpack.c.b16 %v350, %v347
    %v444 = vpack.c.b16 %v354, %v351
    %v445 = vpack.c.b16 %v355, %v352
    %v446 = vpack.c.b16 %v356, %v353
    %v447 = vpack.c.b16 %v360, %v357
    %v448 = vpack.c.b16 %v361, %v358
    %v449 = vpack.c.b16 %v362, %v359
    %v450 = vpack.c.b16 %v366, %v363
    %v451 = vpack.c.b16 %v367, %v364
    %v452 = vpack.c.b16 %v368, %v365
    %v453 = vpack.c.b16 %v372, %v369
    %v454 = vpack.c.b16 %v373, %v370
    %v455 = vpack.c.b16 %v374, %v371
    %v456 = vpack.c.b16 %v378, %v375
    %v457 = vpack.c.b16 %v379, %v376
    %v458 = vpack.c.b16 %v380, %v377
    %v459 = vpack.c.b16 %v384, %v381
    %v460 = vpack.c.b16 %v385, %v382
    %v461 = vpack.c.b16 %v386, %v383
    %v462 = vpack.c.b16 %v390, %v387
    %v463 = vpack.c.b16 %v391, %v388
    %v464 = vpack.c.b16 %v392, %v389
    %v465 = vpack.c.b16 %v396, %v393
    %v466 = vpack.c.b16 %v397, %v394
    %v467 = vpack.c.b16 %v398, %v395
    %v468 = vpack.c.b16 %v402, %v399
    %v469 = vpack.c.b16 %v403, %v400
    %v470 = vpack.c.b16 %v404, %v401
    %v471 = vpack.c.b16 %v408, %v405
    %v472 = vpack.c.b16 %v409, %v406
    %v473 = vpack.c.b16 %v410, %v407
    %v474 = vpack.c.b16 %v414, %v411
    %v475 = vpack.c.b16 %v415, %v412
    %v476 = vpack.c.b16 %v416, %v413
    %v477 = vpack.c.b16 %v420, %v417
    %v478 = vpack.c.b16 %v421, %v418
    %v479 = vpack.c.b16 %v422, %v419
    %v480 = vpack.c.b16 %v426, %v423
    %v481 = vpack.c.b16 %v427, %v424
    %v482 = vpack.c.b16 %v428, %v425
    %v483 = vpack.c.b16 %v432, %v429
    %v484 = vpack.c.b16 %v433, %v430
    %v485 = vpack.c.b16 %v434, %v431
    %v486 = vpack.c.b16 %v438, %v435
    %v487 = vpack.c.b16 %v439, %v436
    %v488 = vpack.c.b16 %v440, %v437
    %v633 = vunpack.c.l.b16 %v163
    %v634 = vunpack.c.h.b16 %v163
    %v635 = vunpack.c.l.b16 %v164
    %v636 = vunpack.c.h.b16 %v164
    %v637 = vunpack.c.l.b16 %v165
    %v638 = vunpack.c.h.b16 %v165
    %v639 = vunpack.c.l.b16 %v166
    %v640 = vunpack.c.h.b16 %v166
    %v641 = vunpack.c.l.b16 %v167
    %v642 = vunpack.c.h.b16 %v167
    %v643 = vunpack.c.l.b16 %v168
    %v644 = vunpack.c.h.b16 %v168
    %v645 = vunpack.c.l.b16 %v169
    %v646 = vunpack.c.h.b16 %v169
    %v647 = vunpack.c.l.b16 %v170
    %v648 = vunpack.c.h.b16 %v170
    %v649 = vunpack.c.l.b16 %v171
    %v650 = vunpack.c.h.b16 %v171
    %v651 = vunpack.c.l.b16 %v172
    %v652 = vunpack.c.h.b16 %v172
    %v653 = vunpack.c.l.b16 %v173
    %v654 = vunpack.c.h.b16 %v173
    %v655 = vunpack.c.l.b16 %v174
    %v656 = vunpack.c.h.b16 %v174
    %v657 = vunpack.c.l.b16 %v175
    %v658 = vunpack.c.h.b16 %v175
    %v659 = vunpack.c.l.b16 %v176
    %v660 = vunpack.c.h.b16 %v176
    %v661 = vunpack.c.l.b16 %v177
    %v662 = vunpack.c.h.b16 %v177
    %v663 = vunpack.c.l.b16 %v178
    %v664 = vunpack.c.h.b16 %v178
    %v665 = vunpack.c.l.b16 %v179
    %v666 = vunpack.c.h.b16 %v179
    %v667 = vunpack.c.l.b16 %v180
    %v668 = vunpack.c.h.b16 %v180
    %v669 = vunpack.c.l.b16 %v181
    %v670 = vunpack.c.h.b16 %v181
    %v671 = vunpack.c.l.b16 %v182
    %v672 = vunpack.c.h.b16 %v182
    %v673 = vunpack.c.l.b16 %v183
    %v674 = vunpack.c.h.b16 %v183
    %v675 = vunpack.c.l.b16 %v184
    %v676 = vunpack.c.h.b16 %v184
    %v677 = vunpack.c.l.b16 %v185
    %v678 = vunpack.c.h.b16 %v185
    %v679 = vunpack.c.l.b16 %v186
    %v680 = vunpack.c.h.b16 %v186
    %v681 = vunpack.c.l.b16 %v187
    %v682 = vunpack.c.h.b16 %v187
    %v683 = vunpack.c.l.b16 %v188
    %v684 = vunpack.c.h.b16 %v188
    %v685 = vunpack.c.l.b16 %v189
    %v686 = vunpack.c.h.b16 %v189
    %v687 = vunpack.c.l.b16 %v190
    %v688 = vunpack.c.h.b16 %v190
    %v689 = vunpack.c.l.b16 %v191
    %v690 = vunpack.c.h.b16 %v191
    %v691 = vunpack.c.l.b16 %v192
    %v692 = vunpack.c.h.b16 %v192
    %v693 = vunpack.c.l.b16 %v193
    %v694 = vunpack.c.h.b16 %v193
    %v695 = vunpack.c.l.b16 %v194
    %v696 = vunpack.c.h.b16 %v194
    %v697 = vunpack.c.l.b16 %v195
    %v698 = vunpack.c.h.b16 %v195
    %v699 = vunpack.c.l.b16 %v196
    %v700 = vunpack.c.h.b16 %v196
    %v701 = vunpack.c.l.b16 %v197
    %v702 = vunpack.c.h.b16 %v197
    %v703 = vunpack.c.l.b16 %v198
    %v704 = vunpack.c.h.b16 %v198
    %v705 = vunpack.c.l.b16 %v199
    %v706 = vunpack.c.h.b16 %v199
    %v707 = vunpack.c.l.b16 %v200
    %v708 = vunpack.c.h.b16 %v200
    %v709 = vunpack.c.l.b16 %v201
    %v710 = vunpack.c.h.b16 %v201
    %v711 = vunpack.c.l.b16 %v202
    %v712 = vunpack.c.h.b16 %v202
    %v713 = vunpack.c.l.b16 %v203
    %v714 = vunpack.c.h.b16 %v203
    %v715 = vunpack.c.l.b16 %v204
    %v716 = vunpack.c.h.b16 %v204
    %v717 = vunpack.c.l.b16 %v205
    %v718 = vunpack.c.h.b16 %v205
    %v719 = vunpack.c.l.b16 %v206
    %v720 = vunpack.c.h.b16 %v206
    %v721 = vunpack.c.l.b16 %v207
    %v722 = vunpack.c.h.b16 %v207
    %v723 = vunpack.c.l.b16 %v208
    %v724 = vunpack.c.h.b16 %v208
    %v725 = vunpack.c.l.b16 %v209
    %v726 = vunpack.c.h.b16 %v209
    %v727 = vunpack.c.l.b16 %v210
    %v728 = vunpack.c.h.b16 %v210
    %v729 = vunpack.c.l.b16 %v211
    %v730 = vunpack.c.h.b16 %v211
    %v731 = vunpack.c.l.b16 %v212
    %v732 = vunpack.c.h.b16 %v212
    %v733 = vunpack.c.l.b16 %v213
    %v734 = vunpack.c.h.b16 %v213
    %v735 = vunpack.c.l.b16 %v214
    %v736 = vunpack.c.h.b16 %v214
    %v737 = vunpack.c.l.b16 %v215
    %v738 = vunpack.c.h.b16 %v215
    %v739 = vunpack.c.l.b16 %v216
    %v740 = vunpack.c.h.b16 %v216
    %v741 = vunpack.c.l.b16 %v217
    %v742 = vunpack.c.h.b16 %v217
    %v743 = vunpack.c.l.b16 %v218
    %v744 = vunpack.c.h.b16 %v218
    %v745 = vunpack.c.l.b16 %v219
    %v746 = vunpack.c.h.b16 %v219
    %v747 = vunpack.c.l.b16 %v220
    %v748 = vunpack.c.h.b16 %v220
    %v749 = vunpack.c.l.b16 %v221
    %v750 = vunpack.c.h.b16 %v221
    %v751 = vunpack.c.l.b16 %v222
    %v752 = vunpack.c.h.b16 %v222
    %v753 = vunpack.c.l.b16 %v223
    %v754 = vunpack.c.h.b16 %v223
    %v755 = vunpack.c.l.b16 %v224
    %v756 = vunpack.c.h.b16 %v224
    %v757 = vunpack.c.l.b16 %v225
    %v758 = vunpack.c.h.b16 %v225
    %v759 = vunpack.c.l.b16 %v226
    %v760 = vunpack.c.h.b16 %v226
    %v761 = vunpack.c.l.b16 %v227
    %v762 = vunpack.c.h.b16 %v227
    %v763 = vunpack.c.l.b16 %v228
    %v764 = vunpack.c.h.b16 %v228
    %v765 = vunpack.c.l.b16 %v229
    %v766 = vunpack.c.h.b16 %v229
    %v767 = vunpack.c.l.b16 %v230
    %v768 = vunpack.c.h.b16 %v230
    %v769 = vunpack.c.l.b16 %v231
    %v770 = vunpack.c.h.b16 %v231
    %v771 = vunpack.c.l.b16 %v232
    %v772 = vunpack.c.h.b16 %v232
    %v773 = vunpack.c.l.b16 %v233
    %v774 = vunpack.c.h.b16 %v233
    %v775 = vunpack.c.l.b16 %v234
    %v776 = vunpack.c.h.b16 %v234
    %v777 = vunpack.c.l.b16 %v235
    %v778 = vunpack.c.h.b16 %v235
    %v779 = vunpack.c.l.b16 %v236
    %v780 = vunpack.c.h.b16 %v236
    %v781 = vunpack.c.l.b16 %v237
    %v782 = vunpack.c.h.b16 %v237
    %v783 = vunpack.c.l.b16 %v238
    %v784 = vunpack.c.h.b16 %v238
    %v785 = vunpack.c.l.b16 %v239
    %v786 = vunpack.c.h.b16 %v239
    %v787 = vunpack.c.l.b16 %v240
    %v788 = vunpack.c.h.b16 %v240
    %v789 = vunpack.c.l.b16 %v241
    %v790 = vunpack.c.h.b16 %v241
    %v791 = vunpack.c.l.b16 %v242
    %v792 = vunpack.c.h.b16 %v242
    %v793 = vunpack.c.l.b16 %v243
    %v794 = vunpack.c.h.b16 %v243
    %v795 = vunpack.c.l.b16 %v244
    %v796 = vunpack.c.h.b16 %v244
    %v797 = vunpack.c.l.b16 %v245
    %v798 = vunpack.c.h.b16 %v245
    %v799 = vunpack.c.l.b16 %v246
    %v800 = vunpack.c.h.b16 %v246
    %v801 = vunpack.c.l.b16 %v247
    %v802 = vunpack.c.h.b16 %v247
    %v803 = vunpack.c.l.b16 %v248
    %v804 = vunpack.c.h.b16 %v248
    %v805 = vunpack.c.l.b16 %v249
    %v806 = vunpack.c.h.b16 %v249
    %v807 = vunpack.c.l.b16 %v250
    %v808 = vunpack.c.h.b16 %v250
    %v809 = vunpack.c.l.b16 %v251
    %v810 = vunpack.c.h.b16 %v251
    %v811 = vunpack.c.l.b16 %v252
    %v812 = vunpack.c.h.b16 %v252
    %v813 = vunpack.c.l.b16 %v253
    %v814 = vunpack.c.h.b16 %v253
    %v815 = vunpack.c.l.b16 %v254
    %v816 = vunpack.c.h.b16 %v254
    %v817 = vunpack.c.l.b16 %v255
    %v818 = vunpack.c.h.b16 %v255
    %v819 = vunpack.c.l.b16 %v256
    %v820 = vunpack.c.h.b16 %v256
    %v821 = vunpack.c.l.b16 %v257
    %v822 = vunpack.c.h.b16 %v257
    %v823 = vunpack.c.l.b16 %v258
    %v824 = vunpack.c.h.b16 %v258
    %v825 = vpack.c.b16 %v637, %v633
    %v826 = vpack.c.b16 %v638, %v634
    %v827 = vpack.c.b16 %v639, %v635
    %v828 = vpack.c.b16 %v640, %v636
    %v829 = vpack.c.b16 %v645, %v641
    %v830 = vpack.c.b16 %v646, %v642
    %v831 = vpack.c.b16 %v647, %v643
    %v832 = vpack.c.b16 %v648, %v644
    %v833 = vpack.c.b16 %v653, %v649
    %v834 = vpack.c.b16 %v654, %v650
    %v835 = vpack.c.b16 %v655, %v651
    %v836 = vpack.c.b16 %v656, %v652
    %v837 = vpack.c.b16 %v661, %v657
    %v838 = vpack.c.b16 %v662, %v658
    %v839 = vpack.c.b16 %v663, %v659
    %v840 = vpack.c.b16 %v664, %v660
    %v841 = vpack.c.b16 %v669, %v665
    %v842 = vpack.c.b16 %v670, %v666
    %v843 = vpack.c.b16 %v671, %v667
    %v844 = vpack.c.b16 %v672, %v668
    %v845 = vpack.c.b16 %v677, %v673
    %v846 = vpack.c.b16 %v678, %v674
    %v847 = vpack.c.b16 %v679, %v675
    %v848 = vpack.c.b16 %v680, %v676
    %v849 = vpack.c.b16 %v685, %v681
    %v850 = vpack.c.b16 %v686, %v682
    %v851 = vpack.c.b16 %v687, %v683
    %v852 = vpack.c.b16 %v688, %v684
    %v853 = vpack.c.b16 %v693, %v689
    %v854 = vpack.c.b16 %v694, %v690
    %v855 = vpack.c.b16 %v695, %v691
    %v856 = vpack.c.b16 %v696, %v692
    %v857 = vpack.c.b16 %v701, %v697
    %v858 = vpack.c.b16 %v702, %v698
    %v859 = vpack.c.b16 %v703, %v699
    %v860 = vpack.c.b16 %v704, %v700
    %v861 = vpack.c.b16 %v709, %v705
    %v862 = vpack.c.b16 %v710, %v706
    %v863 = vpack.c.b16 %v711, %v707
    %v864 = vpack.c.b16 %v712, %v708
    %v865 = vpack.c.b16 %v717, %v713
    %v866 = vpack.c.b16 %v718, %v714
    %v867 = vpack.c.b16 %v719, %v715
    %v868 = vpack.c.b16 %v720, %v716
    %v869 = vpack.c.b16 %v725, %v721
    %v870 = vpack.c.b16 %v726, %v722
    %v871 = vpack.c.b16 %v727, %v723
    %v872 = vpack.c.b16 %v728, %v724
    %v873 = vpack.c.b16 %v733, %v729
    %v874 = vpack.c.b16 %v734, %v730
    %v875 = vpack.c.b16 %v735, %v731
    %v876 = vpack.c.b16 %v736, %v732
    %v877 = vpack.c.b16 %v741, %v737
    %v878 = vpack.c.b16 %v742, %v738
    %v879 = vpack.c.b16 %v743, %v739
    %v880 = vpack.c.b16 %v744, %v740
    %v881 = vpack.c.b16 %v749, %v745
    %v882 = vpack.c.b16 %v750, %v746
    %v883 = vpack.c.b16 %v751, %v747
    %v884 = vpack.c.b16 %v752, %v748
    %v885 = vpack.c.b16 %v757, %v753
    %v886 = vpack.c.b16 %v758, %v754
    %v887 = vpack.c.b16 %v759, %v755
    %v888 = vpack.c.b16 %v760, %v756
    %v889 = vpack.c.b16 %v765, %v761
    %v890 = vpack.c.b16 %v766, %v762
    %v891 = vpack.c.b16 %v767, %v763
    %v892 = vpack.c.b16 %v768, %v764
    %v893 = vpack.c.b16 %v773, %v769
    %v894 = vpack.c.b16 %v774, %v770
    %v895 = vpack.c.b16 %v775, %v771
    %v896 = vpack.c.b16 %v776, %v772
    %v897 = vpack.c.b16 %v781, %v777
    %v898 = vpack.c.b16 %v782, %v778
    %v899 = vpack.c.b16 %v783, %v779
    %v900 = vpack.c.b16 %v784, %v780
    %v901 = vpack.c.b16 %v789, %v785
    %v902 = vpack.c.b16 %v790, %v786
    %v903 = vpack.c.b16 %v791, %v787
    %v904 = vpack.c.b16 %v792, %v788
    %v905 = vpack.c.b16 %v797, %v793
    %v906 = vpack.c.b16 %v798, %v794
    %v907 = vpack.c.b16 %v799, %v795
    %v908 = vpack.c.b16 %v800, %v796
    %v909 = vpack.c.b16 %v805, %v801
    %v910 = vpack.c.b16 %v806, %v802
    %v911 = vpack.c.b16 %v807, %v803
    %v912 = vpack.c.b16 %v808, %v804
    %v913 = vpack.c.b16 %v813, %v809
    %v914 = vpack.c.b16 %v814, %v810
    %v915 = vpack.c.b16 %v815, %v811
    %v916 = vpack.c.b16 %v816, %v812
    %v917 = vpack.c.b16 %v821, %v817
    %v918 = vpack.c.b16 %v822, %v818
    %v919 = vpack.c.b16 %v823, %v819
    %v920 = vpack.c.b16 %v824, %v820
    %1017 = vmatprep.subr.bf16.mxu0 %v826
    %1018 = vmatpush1.bf16.msra.mxu0 %v825
    %1019 = vmatprep.subr.bf16.mxu0 %v830
    %1020 = vmatpush1.bf16.msra.mxu0 %v829
    %1021 = vmatprep.subr.bf16.mxu0 %v834
    %1022 = vmatpush1.bf16.msra.mxu0 %v833
    %1023 = vmatprep.subr.bf16.mxu0 %v838
    %1024 = vmatpush1.bf16.msra.mxu0 %v837
    %1025 = vmatprep.subr.bf16.mxu0 %v842
    %1026 = vmatpush1.bf16.msra.mxu0 %v841
    %1027 = vmatprep.subr.bf16.mxu0 %v846
    %1028 = vmatpush1.bf16.msra.mxu0 %v845
    %1029 = vmatprep.subr.bf16.mxu0 %v850
    %1030 = vmatpush1.bf16.msra.mxu0 %v849
    %1031 = vmatprep.subr.bf16.mxu0 %v854
    %1032 = vmatpush1.bf16.msra.mxu0 %v853
    %1033 = vmatprep.subr.bf16.mxu0 %v858
    %1034 = vmatpush1.bf16.msra.mxu0 %v857
    %1035 = vmatprep.subr.bf16.mxu0 %v862
    %1036 = vmatpush1.bf16.msra.mxu0 %v861
    %1037 = vmatprep.subr.bf16.mxu0 %v866
    %1038 = vmatpush1.bf16.msra.mxu0 %v865
    %1039 = vmatprep.subr.bf16.mxu0 %v870
    %1040 = vmatpush1.bf16.msra.mxu0 %v869
    %1041 = vmatprep.subr.bf16.mxu0 %v874
    %1042 = vmatpush1.bf16.msra.mxu0 %v873
    %1043 = vmatprep.subr.bf16.mxu0 %v878
    %1044 = vmatpush1.bf16.msra.mxu0 %v877
    %1045 = vmatprep.subr.bf16.mxu0 %v882
    %1046 = vmatpush1.bf16.msra.mxu0 %v881
    %1047 = vmatprep.subr.bf16.mxu0 %v886
    %1048 = vmatpush1.bf16.msra.mxu0 %v885
    %1049 = vmatprep.mubr.bf16.mxu0 %v442
    %1050 = vmatmul.mubr.bf16.gmra.mrb[0].mxu0 %v441
    %v1051 = vpop.f32.mrb[0].mxu0
    %v1052 = vadd.f32 %v264, %v1051
    %v1053 = vpop.f32.mrb[0].mxu0
    %v1054 = vadd.f32 %v268, %v1053
    %v1055 = vpop.f32.mrb[0].mxu0
    %v1056 = vadd.f32 %v264, %v1055
    %v1057 = vpop.f32.mrb[0].mxu0
    %v1058 = vadd.f32 %v268, %v1057
    %1059 = vmatprep.mubr.bf16.mxu0 %v445
    %1060 = vmatmul.mubr.bf16.gmra.mrb[0].mxu0 %v444
    %v1061 = vpop.f32.mrb[0].mxu0
    %v1062 = vadd.f32 %v264, %v1061
    %v1063 = vpop.f32.mrb[0].mxu0
    %v1064 = vadd.f32 %v268, %v1063
    %v1065 = vpop.f32.mrb[0].mxu0
    %v1066 = vadd.f32 %v264, %v1065
    %v1067 = vpop.f32.mrb[0].mxu0
    %v1068 = vadd.f32 %v268, %v1067
    %1069 = vmatprep.mubr.bf16.mxu0 %v448
    %1070 = vmatmul.mubr.bf16.gmra.mrb[0].mxu0 %v447
    %v1071 = vpop.f32.mrb[0].mxu0
    %v1072 = vadd.f32 %v264, %v1071
    %v1073 = vpop.f32.mrb[0].mxu0
    %v1074 = vadd.f32 %v268, %v1073
    %v1075 = vpop.f32.mrb[0].mxu0
    %v1076 = vadd.f32 %v264, %v1075
    %v1077 = vpop.f32.mrb[0].mxu0
    %v1078 = vadd.f32 %v268, %v1077
    %1079 = vmatprep.mubr.bf16.mxu0 %v451
    %1080 = vmatmul.mubr.bf16.gmra.mrb[0].mxu0 %v450
    %v1081 = vpop.f32.mrb[0].mxu0
    %v1082 = vadd.f32 %v264, %v1081
    %v1083 = vpop.f32.mrb[0].mxu0
    %v1084 = vadd.f32 %v268, %v1083
    %v1085 = vpop.f32.mrb[0].mxu0
    %v1086 = vadd.f32 %v264, %v1085
    %v1087 = vpop.f32.mrb[0].mxu0
    %v1088 = vadd.f32 %v268, %v1087
    %1089 = vmatprep.mubr.bf16.mxu0 %v454
    %1090 = vmatmul.mubr.bf16.gmra.mrb[0].mxu0 %v453
    %v1091 = vpop.f32.mrb[0].mxu0
    %v1092 = vadd.f32 %v264, %v1091
    %v1093 = vpop.f32.mrb[0].mxu0
    %v1094 = vadd.f32 %v268, %v1093
    %v1095 = vpop.f32.mrb[0].mxu0
    %v1096 = vadd.f32 %v264, %v1095
    %v1097 = vpop.f32.mrb[0].mxu0
    %v1098 = vadd.f32 %v268, %v1097
    %1099 = vmatprep.mubr.bf16.mxu0 %v457
    %1100 = vmatmul.mubr.bf16.gmra.mrb[0].mxu0 %v456
    %v1101 = vpop.f32.mrb[0].mxu0
    %v1102 = vadd.f32 %v264, %v1101
    %v1103 = vpop.f32.mrb[0].mxu0
    %v1104 = vadd.f32 %v268, %v1103
    %v1105 = vpop.f32.mrb[0].mxu0
    %v1106 = vadd.f32 %v264, %v1105
    %v1107 = vpop.f32.mrb[0].mxu0
    %v1108 = vadd.f32 %v268, %v1107
    %1109 = vmatprep.mubr.bf16.mxu0 %v460
    %1110 = vmatmul.mubr.bf16.gmra.mrb[0].mxu0 %v459
    %v1111 = vpop.f32.mrb[0].mxu0
    %v1112 = vadd.f32 %v264, %v1111
    %v1113 = vpop.f32.mrb[0].mxu0
    %v1114 = vadd.f32 %v268, %v1113
    %v1115 = vpop.f32.mrb[0].mxu0
    %v1116 = vadd.f32 %v264, %v1115
    %v1117 = vpop.f32.mrb[0].mxu0
    %v1118 = vadd.f32 %v268, %v1117
    %1119 = vmatprep.mubr.bf16.mxu0 %v463
    %1120 = vmatmul.mubr.bf16.gmra.mrb[0].mxu0 %v462
    %v1121 = vpop.f32.mrb[0].mxu0
    %v1122 = vadd.f32 %v264, %v1121
    %v1123 = vpop.f32.mrb[0].mxu0
    %v1124 = vadd.f32 %v268, %v1123
    %v1125 = vpop.f32.mrb[0].mxu0
    %v1126 = vadd.f32 %v264, %v1125
    %v1127 = vpop.f32.mrb[0].mxu0
    %v1128 = vadd.f32 %v268, %v1127
    %1129 = vmatprep.mubr.bf16.mxu0 %v466
    %1130 = vmatmul.mubr.bf16.gmra.mrb[0].mxu0 %v465
    %v1131 = vpop.f32.mrb[0].mxu0
    %v1132 = vadd.f32 %v264, %v1131
    %v1133 = vpop.f32.mrb[0].mxu0
    %v1134 = vadd.f32 %v268, %v1133
    %v1135 = vpop.f32.mrb[0].mxu0
    %v1136 = vadd.f32 %v264, %v1135
    %v1137 = vpop.f32.mrb[0].mxu0
    %v1138 = vadd.f32 %v268, %v1137
    %1139 = vmatprep.mubr.bf16.mxu0 %v469
    %1140 = vmatmul.mubr.bf16.gmra.mrb[0].mxu0 %v468
    %v1141 = vpop.f32.mrb[0].mxu0
    %v1142 = vadd.f32 %v264, %v1141
    %v1143 = vpop.f32.mrb[0].mxu0
    %v1144 = vadd.f32 %v268, %v1143
    %v1145 = vpop.f32.mrb[0].mxu0
    %v1146 = vadd.f32 %v264, %v1145
    %v1147 = vpop.f32.mrb[0].mxu0
    %v1148 = vadd.f32 %v268, %v1147
    %1149 = vmatprep.mubr.bf16.mxu0 %v472
    %1150 = vmatmul.mubr.bf16.gmra.mrb[0].mxu0 %v471
    %v1151 = vpop.f32.mrb[0].mxu0
    %v1152 = vadd.f32 %v264, %v1151
    %v1153 = vpop.f32.mrb[0].mxu0
    %v1154 = vadd.f32 %v268, %v1153
    %v1155 = vpop.f32.mrb[0].mxu0
    %v1156 = vadd.f32 %v264, %v1155
    %v1157 = vpop.f32.mrb[0].mxu0
    %v1158 = vadd.f32 %v268, %v1157
    %1159 = vmatprep.mubr.bf16.mxu0 %v475
    %1160 = vmatmul.mubr.bf16.gmra.mrb[0].mxu0 %v474
    %v1161 = vpop.f32.mrb[0].mxu0
    %v1162 = vadd.f32 %v264, %v1161
    %v1163 = vpop.f32.mrb[0].mxu0
    %v1164 = vadd.f32 %v268, %v1163
    %v1165 = vpop.f32.mrb[0].mxu0
    %v1166 = vadd.f32 %v264, %v1165
    %v1167 = vpop.f32.mrb[0].mxu0
    %v1168 = vadd.f32 %v268, %v1167
    %1169 = vmatprep.mubr.bf16.mxu0 %v478
    %1170 = vmatmul.mubr.bf16.gmra.mrb[0].mxu0 %v477
    %v1171 = vpop.f32.mrb[0].mxu0
    %v1172 = vadd.f32 %v264, %v1171
    %v1173 = vpop.f32.mrb[0].mxu0
    %v1174 = vadd.f32 %v268, %v1173
    %v1175 = vpop.f32.mrb[0].mxu0
    %v1176 = vadd.f32 %v264, %v1175
    %v1177 = vpop.f32.mrb[0].mxu0
    %v1178 = vadd.f32 %v268, %v1177
    %1179 = vmatprep.mubr.bf16.mxu0 %v481
    %1180 = vmatmul.mubr.bf16.gmra.mrb[0].mxu0 %v480
    %v1181 = vpop.f32.mrb[0].mxu0
    %v1182 = vadd.f32 %v264, %v1181
    %v1183 = vpop.f32.mrb[0].mxu0
    %v1184 = vadd.f32 %v268, %v1183
    %v1185 = vpop.f32.mrb[0].mxu0
    %v1186 = vadd.f32 %v264, %v1185
    %v1187 = vpop.f32.mrb[0].mxu0
    %v1188 = vadd.f32 %v268, %v1187
    %1189 = vmatprep.mubr.bf16.mxu0 %v484
    %1190 = vmatmul.mubr.bf16.gmra.mrb[0].mxu0 %v483
    %v1191 = vpop.f32.mrb[0].mxu0
    %v1192 = vadd.f32 %v264, %v1191
    %v1193 = vpop.f32.mrb[0].mxu0
    %v1194 = vadd.f32 %v268, %v1193
    %v1195 = vpop.f32.mrb[0].mxu0
    %v1196 = vadd.f32 %v264, %v1195
    %v1197 = vpop.f32.mrb[0].mxu0
    %v1198 = vadd.f32 %v268, %v1197
    %1199 = vmatprep.mubr.bf16.mxu0 %v487
    %1200 = vmatmul.mubr.bf16.gmra.mrb[0].mxu0 %v486
    %v1201 = vpop.f32.mrb[0].mxu0
    %v1202 = vadd.f32 %v264, %v1201
    %v1203 = vpop.f32.mrb[0].mxu0
    %v1204 = vadd.f32 %v268, %v1203
    %v1205 = vpop.f32.mrb[0].mxu0
    %v1206 = vadd.f32 %v264, %v1205
    %v1207 = vpop.f32.mrb[0].mxu0
    %v1208 = vadd.f32 %v268, %v1207
    %1209 = vdwg.mxu0
    %1210 = vmatprep.subr.bf16.mxu0 %v890
    %1211 = vmatpush1.bf16.msra.mxu0 %v889
    %1212 = vmatprep.subr.bf16.mxu0 %v894
    %1213 = vmatpush1.bf16.msra.mxu0 %v893
    %1214 = vmatprep.subr.bf16.mxu0 %v898
    %1215 = vmatpush1.bf16.msra.mxu0 %v897
    %1216 = vmatprep.subr.bf16.mxu0 %v902
    %1217 = vmatpush1.bf16.msra.mxu0 %v901
    %1218 = vmatprep.subr.bf16.mxu0 %v906
    %1219 = vmatpush1.bf16.msra.mxu0 %v905
    %1220 = vmatprep.subr.bf16.mxu0 %v910
    %1221 = vmatpush1.bf16.msra.mxu0 %v909
    %1222 = vmatprep.subr.bf16.mxu0 %v914
    %1223 = vmatpush1.bf16.msra.mxu0 %v913
    %1224 = vmatprep.subr.bf16.mxu0 %v918
    %1225 = vmatpush1.bf16.msra.mxu0 %v917
    %1226 = vmatprep.subr.bf16.mxu0 0
    %1227 = vmatpush1.bf16.msra.mxu0 0
    %1228 = vmatprep.subr.bf16.mxu0 0
    %1229 = vmatpush1.bf16.msra.mxu0 0
    %1230 = vmatprep.subr.bf16.mxu0 0
    %1231 = vmatpush1.bf16.msra.mxu0 0
    %1232 = vmatprep.subr.bf16.mxu0 0
    %1233 = vmatpush1.bf16.msra.mxu0 0
    %1234 = vmatprep.subr.bf16.mxu0 0
    %1235 = vmatpush1.bf16.msra.mxu0 0
    %1236 = vmatprep.subr.bf16.mxu0 0
    %1237 = vmatpush1.bf16.msra.mxu0 0
    %1238 = vmatprep.subr.bf16.mxu0 0
    %1239 = vmatpush1.bf16.msra.mxu0 0
    %1240 = vmatprep.subr.bf16.mxu0 0
    %1241 = vmatpush1.bf16.msra.mxu0 0
    %1242 = vmatprep.mubr.bf16.mxu0 0
    %1243 = vmatmul.mubr.bf16.gmra.mrb[0].mxu0 %v443
    %v1244 = vpop.f32.mrb[0].mxu0
    %v1245 = vadd.f32 %v1052, %v1244
    %v1246 = vpop.f32.mrb[0].mxu0
    %v1247 = vadd.f32 %v1054, %v1246
    %v1248 = vpop.f32.mrb[0].mxu0
    %v1249 = vadd.f32 %v1056, %v1248
    %v1250 = vpop.f32.mrb[0].mxu0
    %v1251 = vadd.f32 %v1058, %v1250
    %1252 = vmatprep.mubr.bf16.mxu0 0
    %1253 = vmatmul.mubr.bf16.gmra.mrb[0].mxu0 %v446
    %v1254 = vpop.f32.mrb[0].mxu0
    %v1255 = vadd.f32 %v1062, %v1254
    %v1256 = vpop.f32.mrb[0].mxu0
    %v1257 = vadd.f32 %v1064, %v1256
    %v1258 = vpop.f32.mrb[0].mxu0
    %v1259 = vadd.f32 %v1066, %v1258
    %v1260 = vpop.f32.mrb[0].mxu0
    %v1261 = vadd.f32 %v1068, %v1260
    %1262 = vmatprep.mubr.bf16.mxu0 0
    %1263 = vmatmul.mubr.bf16.gmra.mrb[0].mxu0 %v449
    %v1264 = vpop.f32.mrb[0].mxu0
    %v1265 = vadd.f32 %v1072, %v1264
    %v1266 = vpop.f32.mrb[0].mxu0
    %v1267 = vadd.f32 %v1074, %v1266
    %v1268 = vpop.f32.mrb[0].mxu0
    %v1269 = vadd.f32 %v1076, %v1268
    %v1270 = vpop.f32.mrb[0].mxu0
    %v1271 = vadd.f32 %v1078, %v1270
    %1272 = vmatprep.mubr.bf16.mxu0 0
    %1273 = vmatmul.mubr.bf16.gmra.mrb[0].mxu0 %v452
    %v1274 = vpop.f32.mrb[0].mxu0
    %v1275 = vadd.f32 %v1082, %v1274
    %v1276 = vpop.f32.mrb[0].mxu0
    %v1277 = vadd.f32 %v1084, %v1276
    %v1278 = vpop.f32.mrb[0].mxu0
    %v1279 = vadd.f32 %v1086, %v1278
    %v1280 = vpop.f32.mrb[0].mxu0
    %v1281 = vadd.f32 %v1088, %v1280
    %1282 = vmatprep.mubr.bf16.mxu0 0
    %1283 = vmatmul.mubr.bf16.gmra.mrb[0].mxu0 %v455
    %v1284 = vpop.f32.mrb[0].mxu0
    %v1285 = vadd.f32 %v1092, %v1284
    %v1286 = vpop.f32.mrb[0].mxu0
    %v1287 = vadd.f32 %v1094, %v1286
    %v1288 = vpop.f32.mrb[0].mxu0
    %v1289 = vadd.f32 %v1096, %v1288
    %v1290 = vpop.f32.mrb[0].mxu0
    %v1291 = vadd.f32 %v1098, %v1290
    %1292 = vmatprep.mubr.bf16.mxu0 0
    %1293 = vmatmul.mubr.bf16.gmra.mrb[0].mxu0 %v458
    %v1294 = vpop.f32.mrb[0].mxu0
    %v1295 = vadd.f32 %v1102, %v1294
    %v1296 = vpop.f32.mrb[0].mxu0
    %v1297 = vadd.f32 %v1104, %v1296
    %v1298 = vpop.f32.mrb[0].mxu0
    %v1299 = vadd.f32 %v1106, %v1298
    %v1300 = vpop.f32.mrb[0].mxu0
    %v1301 = vadd.f32 %v1108, %v1300
    %1302 = vmatprep.mubr.bf16.mxu0 0
    %1303 = vmatmul.mubr.bf16.gmra.mrb[0].mxu0 %v461
    %v1304 = vpop.f32.mrb[0].mxu0
    %v1305 = vadd.f32 %v1112, %v1304
    %v1306 = vpop.f32.mrb[0].mxu0
    %v1307 = vadd.f32 %v1114, %v1306
    %v1308 = vpop.f32.mrb[0].mxu0
    %v1309 = vadd.f32 %v1116, %v1308
    %v1310 = vpop.f32.mrb[0].mxu0
    %v1311 = vadd.f32 %v1118, %v1310
    %1312 = vmatprep.mubr.bf16.mxu0 0
    %1313 = vmatmul.mubr.bf16.gmra.mrb[0].mxu0 %v464
    %v1314 = vpop.f32.mrb[0].mxu0
    %v1315 = vadd.f32 %v1122, %v1314
    %v1316 = vpop.f32.mrb[0].mxu0
    %v1317 = vadd.f32 %v1124, %v1316
    %v1318 = vpop.f32.mrb[0].mxu0
    %v1319 = vadd.f32 %v1126, %v1318
    %v1320 = vpop.f32.mrb[0].mxu0
    %v1321 = vadd.f32 %v1128, %v1320
    %1322 = vmatprep.mubr.bf16.mxu0 0
    %1323 = vmatmul.mubr.bf16.gmra.mrb[0].mxu0 %v467
    %v1324 = vpop.f32.mrb[0].mxu0
    %v1325 = vadd.f32 %v1132, %v1324
    %v1326 = vpop.f32.mrb[0].mxu0
    %v1327 = vadd.f32 %v1134, %v1326
    %v1328 = vpop.f32.mrb[0].mxu0
    %v1329 = vadd.f32 %v1136, %v1328
    %v1330 = vpop.f32.mrb[0].mxu0
    %v1331 = vadd.f32 %v1138, %v1330
    %1332 = vmatprep.mubr.bf16.mxu0 0
    %1333 = vmatmul.mubr.bf16.gmra.mrb[0].mxu0 %v470
    %v1334 = vpop.f32.mrb[0].mxu0
    %v1335 = vadd.f32 %v1142, %v1334
    %v1336 = vpop.f32.mrb[0].mxu0
    %v1337 = vadd.f32 %v1144, %v1336
    %v1338 = vpop.f32.mrb[0].mxu0
    %v1339 = vadd.f32 %v1146, %v1338
    %v1340 = vpop.f32.mrb[0].mxu0
    %v1341 = vadd.f32 %v1148, %v1340
    %1342 = vmatprep.mubr.bf16.mxu0 0
    %1343 = vmatmul.mubr.bf16.gmra.mrb[0].mxu0 %v473
    %v1344 = vpop.f32.mrb[0].mxu0
    %v1345 = vadd.f32 %v1152, %v1344
    %v1346 = vpop.f32.mrb[0].mxu0
    %v1347 = vadd.f32 %v1154, %v1346
    %v1348 = vpop.f32.mrb[0].mxu0
    %v1349 = vadd.f32 %v1156, %v1348
    %v1350 = vpop.f32.mrb[0].mxu0
    %v1351 = vadd.f32 %v1158, %v1350
    %1352 = vmatprep.mubr.bf16.mxu0 0
    %1353 = vmatmul.mubr.bf16.gmra.mrb[0].mxu0 %v476
    %v1354 = vpop.f32.mrb[0].mxu0
    %v1355 = vadd.f32 %v1162, %v1354
    %v1356 = vpop.f32.mrb[0].mxu0
    %v1357 = vadd.f32 %v1164, %v1356
    %v1358 = vpop.f32.mrb[0].mxu0
    %v1359 = vadd.f32 %v1166, %v1358
    %v1360 = vpop.f32.mrb[0].mxu0
    %v1361 = vadd.f32 %v1168, %v1360
    %1362 = vmatprep.mubr.bf16.mxu0 0
    %1363 = vmatmul.mubr.bf16.gmra.mrb[0].mxu0 %v479
    %v1364 = vpop.f32.mrb[0].mxu0
    %v1365 = vadd.f32 %v1172, %v1364
    %v1366 = vpop.f32.mrb[0].mxu0
    %v1367 = vadd.f32 %v1174, %v1366
    %v1368 = vpop.f32.mrb[0].mxu0
    %v1369 = vadd.f32 %v1176, %v1368
    %v1370 = vpop.f32.mrb[0].mxu0
    %v1371 = vadd.f32 %v1178, %v1370
    %1372 = vmatprep.mubr.bf16.mxu0 0
    %1373 = vmatmul.mubr.bf16.gmra.mrb[0].mxu0 %v482
    %v1374 = vpop.f32.mrb[0].mxu0
    %v1375 = vadd.f32 %v1182, %v1374
    %v1376 = vpop.f32.mrb[0].mxu0
    %v1377 = vadd.f32 %v1184, %v1376
    %v1378 = vpop.f32.mrb[0].mxu0
    %v1379 = vadd.f32 %v1186, %v1378
    %v1380 = vpop.f32.mrb[0].mxu0
    %v1381 = vadd.f32 %v1188, %v1380
    %1382 = vmatprep.mubr.bf16.mxu0 0
    %1383 = vmatmul.mubr.bf16.gmra.mrb[0].mxu0 %v485
    %v1384 = vpop.f32.mrb[0].mxu0
    %v1385 = vadd.f32 %v1192, %v1384
    %v1386 = vpop.f32.mrb[0].mxu0
    %v1387 = vadd.f32 %v1194, %v1386
    %v1388 = vpop.f32.mrb[0].mxu0
    %v1389 = vadd.f32 %v1196, %v1388
    %v1390 = vpop.f32.mrb[0].mxu0
    %v1391 = vadd.f32 %v1198, %v1390
    %1392 = vmatprep.mubr.bf16.mxu0 0
    %1393 = vmatmul.mubr.bf16.gmra.mrb[0].mxu0 %v488
    %v1394 = vpop.f32.mrb[0].mxu0
    %v1395 = vadd.f32 %v1202, %v1394
    %v1396 = vpop.f32.mrb[0].mxu0
    %v1397 = vadd.f32 %v1204, %v1396
    %v1398 = vpop.f32.mrb[0].mxu0
    %v1399 = vadd.f32 %v1206, %v1398
    %v1400 = vpop.f32.mrb[0].mxu0
    %v1401 = vadd.f32 %v1208, %v1400
    %1402 = vdwg.mxu0
    %1403 = vmatprep.subr.bf16.mxu0 %v828
    %1404 = vmatpush1.bf16.msra.mxu0 %v827
    %1405 = vmatprep.subr.bf16.mxu0 %v832
    %1406 = vmatpush1.bf16.msra.mxu0 %v831
    %1407 = vmatprep.subr.bf16.mxu0 %v836
    %1408 = vmatpush1.bf16.msra.mxu0 %v835
    %1409 = vmatprep.subr.bf16.mxu0 %v840
    %1410 = vmatpush1.bf16.msra.mxu0 %v839
    %1411 = vmatprep.subr.bf16.mxu0 %v844
    %1412 = vmatpush1.bf16.msra.mxu0 %v843
    %1413 = vmatprep.subr.bf16.mxu0 %v848
    %1414 = vmatpush1.bf16.msra.mxu0 %v847
    %1415 = vmatprep.subr.bf16.mxu0 %v852
    %1416 = vmatpush1.bf16.msra.mxu0 %v851
    %1417 = vmatprep.subr.bf16.mxu0 %v856
    %1418 = vmatpush1.bf16.msra.mxu0 %v855
    %1419 = vmatprep.subr.bf16.mxu0 %v860
    %1420 = vmatpush1.bf16.msra.mxu0 %v859
    %1421 = vmatprep.subr.bf16.mxu0 %v864
    %1422 = vmatpush1.bf16.msra.mxu0 %v863
    %1423 = vmatprep.subr.bf16.mxu0 %v868
    %1424 = vmatpush1.bf16.msra.mxu0 %v867
    %1425 = vmatprep.subr.bf16.mxu0 %v872
    %1426 = vmatpush1.bf16.msra.mxu0 %v871
    %1427 = vmatprep.subr.bf16.mxu0 %v876
    %1428 = vmatpush1.bf16.msra.mxu0 %v875
    %1429 = vmatprep.subr.bf16.mxu0 %v880
    %1430 = vmatpush1.bf16.msra.mxu0 %v879
    %1431 = vmatprep.subr.bf16.mxu0 %v884
    %1432 = vmatpush1.bf16.msra.mxu0 %v883
    %1433 = vmatprep.subr.bf16.mxu0 %v888
    %1434 = vmatpush1.bf16.msra.mxu0 %v887
    %1435 = vmatprep.mubr.bf16.mxu0 %v442
    %1436 = vmatmul.mubr.bf16.gmra.mrb[0].mxu0 %v441
    %v1437 = vpop.f32.mrb[0].mxu0
    %v1438 = vadd.f32 %v272, %v1437
    %v1439 = vpop.f32.mrb[0].mxu0
    %v1440 = vadd.f32 %v276, %v1439
    %v1441 = vpop.f32.mrb[0].mxu0
    %v1442 = vadd.f32 %v272, %v1441
    %v1443 = vpop.f32.mrb[0].mxu0
    %v1444 = vadd.f32 %v276, %v1443
    %1445 = vmatprep.mubr.bf16.mxu0 %v445
    %1446 = vmatmul.mubr.bf16.gmra.mrb[0].mxu0 %v444
    %v1447 = vpop.f32.mrb[0].mxu0
    %v1448 = vadd.f32 %v272, %v1447
    %v1449 = vpop.f32.mrb[0].mxu0
    %v1450 = vadd.f32 %v276, %v1449
    %v1451 = vpop.f32.mrb[0].mxu0
    %v1452 = vadd.f32 %v272, %v1451
    %v1453 = vpop.f32.mrb[0].mxu0
    %v1454 = vadd.f32 %v276, %v1453
    %1455 = vmatprep.mubr.bf16.mxu0 %v448
    %1456 = vmatmul.mubr.bf16.gmra.mrb[0].mxu0 %v447
    %v1457 = vpop.f32.mrb[0].mxu0
    %v1458 = vadd.f32 %v272, %v1457
    %v1459 = vpop.f32.mrb[0].mxu0
    %v1460 = vadd.f32 %v276, %v1459
    %v1461 = vpop.f32.mrb[0].mxu0
    %v1462 = vadd.f32 %v272, %v1461
    %v1463 = vpop.f32.mrb[0].mxu0
    %v1464 = vadd.f32 %v276, %v1463
    %1465 = vmatprep.mubr.bf16.mxu0 %v451
    %1466 = vmatmul.mubr.bf16.gmra.mrb[0].mxu0 %v450
    %v1467 = vpop.f32.mrb[0].mxu0
    %v1468 = vadd.f32 %v272, %v1467
    %v1469 = vpop.f32.mrb[0].mxu0
    %v1470 = vadd.f32 %v276, %v1469
    %v1471 = vpop.f32.mrb[0].mxu0
    %v1472 = vadd.f32 %v272, %v1471
    %v1473 = vpop.f32.mrb[0].mxu0
    %v1474 = vadd.f32 %v276, %v1473
    %1475 = vmatprep.mubr.bf16.mxu0 %v454
    %1476 = vmatmul.mubr.bf16.gmra.mrb[0].mxu0 %v453
    %v1477 = vpop.f32.mrb[0].mxu0
    %v1478 = vadd.f32 %v272, %v1477
    %v1479 = vpop.f32.mrb[0].mxu0
    %v1480 = vadd.f32 %v276, %v1479
    %v1481 = vpop.f32.mrb[0].mxu0
    %v1482 = vadd.f32 %v272, %v1481
    %v1483 = vpop.f32.mrb[0].mxu0
    %v1484 = vadd.f32 %v276, %v1483
    %1485 = vmatprep.mubr.bf16.mxu0 %v457
    %1486 = vmatmul.mubr.bf16.gmra.mrb[0].mxu0 %v456
    %v1487 = vpop.f32.mrb[0].mxu0
    %v1488 = vadd.f32 %v272, %v1487
    %v1489 = vpop.f32.mrb[0].mxu0
    %v1490 = vadd.f32 %v276, %v1489
    %v1491 = vpop.f32.mrb[0].mxu0
    %v1492 = vadd.f32 %v272, %v1491
    %v1493 = vpop.f32.mrb[0].mxu0
    %v1494 = vadd.f32 %v276, %v1493
    %1495 = vmatprep.mubr.bf16.mxu0 %v460
    %1496 = vmatmul.mubr.bf16.gmra.mrb[0].mxu0 %v459
    %v1497 = vpop.f32.mrb[0].mxu0
    %v1498 = vadd.f32 %v272, %v1497
    %v1499 = vpop.f32.mrb[0].mxu0
    %v1500 = vadd.f32 %v276, %v1499
    %v1501 = vpop.f32.mrb[0].mxu0
    %v1502 = vadd.f32 %v272, %v1501
    %v1503 = vpop.f32.mrb[0].mxu0
    %v1504 = vadd.f32 %v276, %v1503
    %1505 = vmatprep.mubr.bf16.mxu0 %v463
    %1506 = vmatmul.mubr.bf16.gmra.mrb[0].mxu0 %v462
    %v1507 = vpop.f32.mrb[0].mxu0
    %v1508 = vadd.f32 %v272, %v1507
    %v1509 = vpop.f32.mrb[0].mxu0
    %v1510 = vadd.f32 %v276, %v1509
    %v1511 = vpop.f32.mrb[0].mxu0
    %v1512 = vadd.f32 %v272, %v1511
    %v1513 = vpop.f32.mrb[0].mxu0
    %v1514 = vadd.f32 %v276, %v1513
    %1515 = vmatprep.mubr.bf16.mxu0 %v466
    %1516 = vmatmul.mubr.bf16.gmra.mrb[0].mxu0 %v465
    %v1517 = vpop.f32.mrb[0].mxu0
    %v1518 = vadd.f32 %v272, %v1517
    %v1519 = vpop.f32.mrb[0].mxu0
    %v1520 = vadd.f32 %v276, %v1519
    %v1521 = vpop.f32.mrb[0].mxu0
    %v1522 = vadd.f32 %v272, %v1521
    %v1523 = vpop.f32.mrb[0].mxu0
    %v1524 = vadd.f32 %v276, %v1523
    %1525 = vmatprep.mubr.bf16.mxu0 %v469
    %1526 = vmatmul.mubr.bf16.gmra.mrb[0].mxu0 %v468
    %v1527 = vpop.f32.mrb[0].mxu0
    %v1528 = vadd.f32 %v272, %v1527
    %v1529 = vpop.f32.mrb[0].mxu0
    %v1530 = vadd.f32 %v276, %v1529
    %v1531 = vpop.f32.mrb[0].mxu0
    %v1532 = vadd.f32 %v272, %v1531
    %v1533 = vpop.f32.mrb[0].mxu0
    %v1534 = vadd.f32 %v276, %v1533
    %1535 = vmatprep.mubr.bf16.mxu0 %v472
    %1536 = vmatmul.mubr.bf16.gmra.mrb[0].mxu0 %v471
    %v1537 = vpop.f32.mrb[0].mxu0
    %v1538 = vadd.f32 %v272, %v1537
    %v1539 = vpop.f32.mrb[0].mxu0
    %v1540 = vadd.f32 %v276, %v1539
    %v1541 = vpop.f32.mrb[0].mxu0
    %v1542 = vadd.f32 %v272, %v1541
    %v1543 = vpop.f32.mrb[0].mxu0
    %v1544 = vadd.f32 %v276, %v1543
    %1545 = vmatprep.mubr.bf16.mxu0 %v475
    %1546 = vmatmul.mubr.bf16.gmra.mrb[0].mxu0 %v474
    %v1547 = vpop.f32.mrb[0].mxu0
    %v1548 = vadd.f32 %v272, %v1547
    %v1549 = vpop.f32.mrb[0].mxu0
    %v1550 = vadd.f32 %v276, %v1549
    %v1551 = vpop.f32.mrb[0].mxu0
    %v1552 = vadd.f32 %v272, %v1551
    %v1553 = vpop.f32.mrb[0].mxu0
    %v1554 = vadd.f32 %v276, %v1553
    %1555 = vmatprep.mubr.bf16.mxu0 %v478
    %1556 = vmatmul.mubr.bf16.gmra.mrb[0].mxu0 %v477
    %v1557 = vpop.f32.mrb[0].mxu0
    %v1558 = vadd.f32 %v272, %v1557
    %v1559 = vpop.f32.mrb[0].mxu0
    %v1560 = vadd.f32 %v276, %v1559
    %v1561 = vpop.f32.mrb[0].mxu0
    %v1562 = vadd.f32 %v272, %v1561
    %v1563 = vpop.f32.mrb[0].mxu0
    %v1564 = vadd.f32 %v276, %v1563
    %1565 = vmatprep.mubr.bf16.mxu0 %v481
    %1566 = vmatmul.mubr.bf16.gmra.mrb[0].mxu0 %v480
    %v1567 = vpop.f32.mrb[0].mxu0
    %v1568 = vadd.f32 %v272, %v1567
    %v1569 = vpop.f32.mrb[0].mxu0
    %v1570 = vadd.f32 %v276, %v1569
    %v1571 = vpop.f32.mrb[0].mxu0
    %v1572 = vadd.f32 %v272, %v1571
    %v1573 = vpop.f32.mrb[0].mxu0
    %v1574 = vadd.f32 %v276, %v1573
    %1575 = vmatprep.mubr.bf16.mxu0 %v484
    %1576 = vmatmul.mubr.bf16.gmra.mrb[0].mxu0 %v483
    %v1577 = vpop.f32.mrb[0].mxu0
    %v1578 = vadd.f32 %v272, %v1577
    %v1579 = vpop.f32.mrb[0].mxu0
    %v1580 = vadd.f32 %v276, %v1579
    %v1581 = vpop.f32.mrb[0].mxu0
    %v1582 = vadd.f32 %v272, %v1581
    %v1583 = vpop.f32.mrb[0].mxu0
    %v1584 = vadd.f32 %v276, %v1583
    %1585 = vmatprep.mubr.bf16.mxu0 %v487
    %1586 = vmatmul.mubr.bf16.gmra.mrb[0].mxu0 %v486
    %v1587 = vpop.f32.mrb[0].mxu0
    %v1588 = vadd.f32 %v272, %v1587
    %v1589 = vpop.f32.mrb[0].mxu0
    %v1590 = vadd.f32 %v276, %v1589
    %v1591 = vpop.f32.mrb[0].mxu0
    %v1592 = vadd.f32 %v272, %v1591
    %v1593 = vpop.f32.mrb[0].mxu0
    %v1594 = vadd.f32 %v276, %v1593
    %1595 = vdwg.mxu0
    %1596 = vmatprep.subr.bf16.mxu0 %v892
    %1597 = vmatpush1.bf16.msra.mxu0 %v891
    %1598 = vmatprep.subr.bf16.mxu0 %v896
    %1599 = vmatpush1.bf16.msra.mxu0 %v895
    %1600 = vmatprep.subr.bf16.mxu0 %v900
    %1601 = vmatpush1.bf16.msra.mxu0 %v899
    %1602 = vmatprep.subr.bf16.mxu0 %v904
    %1603 = vmatpush1.bf16.msra.mxu0 %v903
    %1604 = vmatprep.subr.bf16.mxu0 %v908
    %1605 = vmatpush1.bf16.msra.mxu0 %v907
    %1606 = vmatprep.subr.bf16.mxu0 %v912
    %1607 = vmatpush1.bf16.msra.mxu0 %v911
    %1608 = vmatprep.subr.bf16.mxu0 %v916
    %1609 = vmatpush1.bf16.msra.mxu0 %v915
    %1610 = vmatprep.subr.bf16.mxu0 %v920
    %1611 = vmatpush1.bf16.msra.mxu0 %v919
    %1612 = vmatprep.subr.bf16.mxu0 0
    %1613 = vmatpush1.bf16.msra.mxu0 0
    %1614 = vmatprep.subr.bf16.mxu0 0
    %1615 = vmatpush1.bf16.msra.mxu0 0
    %1616 = vmatprep.subr.bf16.mxu0 0
    %1617 = vmatpush1.bf16.msra.mxu0 0
    %1618 = vmatprep.subr.bf16.mxu0 0
    %1619 = vmatpush1.bf16.msra.mxu0 0
    %1620 = vmatprep.subr.bf16.mxu0 0
    %1621 = vmatpush1.bf16.msra.mxu0 0
    %1622 = vmatprep.subr.bf16.mxu0 0
    %1623 = vmatpush1.bf16.msra.mxu0 0
    %1624 = vmatprep.subr.bf16.mxu0 0
    %1625 = vmatpush1.bf16.msra.mxu0 0
    %1626 = vmatprep.subr.bf16.mxu0 0
    %1627 = vmatpush1.bf16.msra.mxu0 0
    %1628 = vmatprep.mubr.bf16.mxu0 0
    %1629 = vmatmul.mubr.bf16.gmra.mrb[0].mxu0 %v443
    %v1630 = vpop.f32.mrb[0].mxu0
    %v1631 = vadd.f32 %v1438, %v1630
    %v1632 = vpop.f32.mrb[0].mxu0
    %v1633 = vadd.f32 %v1440, %v1632
    %v1634 = vpop.f32.mrb[0].mxu0
    %v1635 = vadd.f32 %v1442, %v1634
    %v1636 = vpop.f32.mrb[0].mxu0
    %v1637 = vadd.f32 %v1444, %v1636
    %1638 = vmatprep.mubr.bf16.mxu0 0
    %1639 = vmatmul.mubr.bf16.gmra.mrb[0].mxu0 %v446
    %v1640 = vpop.f32.mrb[0].mxu0
    %v1641 = vadd.f32 %v1448, %v1640
    %v1642 = vpop.f32.mrb[0].mxu0
    %v1643 = vadd.f32 %v1450, %v1642
    %v1644 = vpop.f32.mrb[0].mxu0
    %v1645 = vadd.f32 %v1452, %v1644
    %v1646 = vpop.f32.mrb[0].mxu0
    %v1647 = vadd.f32 %v1454, %v1646
    %1648 = vmatprep.mubr.bf16.mxu0 0
    %1649 = vmatmul.mubr.bf16.gmra.mrb[0].mxu0 %v449
    %v1650 = vpop.f32.mrb[0].mxu0
    %v1651 = vadd.f32 %v1458, %v1650
    %v1652 = vpop.f32.mrb[0].mxu0
    %v1653 = vadd.f32 %v1460, %v1652
    %v1654 = vpop.f32.mrb[0].mxu0
    %v1655 = vadd.f32 %v1462, %v1654
    %v1656 = vpop.f32.mrb[0].mxu0
    %v1657 = vadd.f32 %v1464, %v1656
    %1658 = vmatprep.mubr.bf16.mxu0 0
    %1659 = vmatmul.mubr.bf16.gmra.mrb[0].mxu0 %v452
    %v1660 = vpop.f32.mrb[0].mxu0
    %v1661 = vadd.f32 %v1468, %v1660
    %v1662 = vpop.f32.mrb[0].mxu0
    %v1663 = vadd.f32 %v1470, %v1662
    %v1664 = vpop.f32.mrb[0].mxu0
    %v1665 = vadd.f32 %v1472, %v1664
    %v1666 = vpop.f32.mrb[0].mxu0
    %v1667 = vadd.f32 %v1474, %v1666
    %1668 = vmatprep.mubr.bf16.mxu0 0
    %1669 = vmatmul.mubr.bf16.gmra.mrb[0].mxu0 %v455
    %v1670 = vpop.f32.mrb[0].mxu0
    %v1671 = vadd.f32 %v1478, %v1670
    %v1672 = vpop.f32.mrb[0].mxu0
    %v1673 = vadd.f32 %v1480, %v1672
    %v1674 = vpop.f32.mrb[0].mxu0
    %v1675 = vadd.f32 %v1482, %v1674
    %v1676 = vpop.f32.mrb[0].mxu0
    %v1677 = vadd.f32 %v1484, %v1676
    %1678 = vmatprep.mubr.bf16.mxu0 0
    %1679 = vmatmul.mubr.bf16.gmra.mrb[0].mxu0 %v458
    %v1680 = vpop.f32.mrb[0].mxu0
    %v1681 = vadd.f32 %v1488, %v1680
    %v1682 = vpop.f32.mrb[0].mxu0
    %v1683 = vadd.f32 %v1490, %v1682
    %v1684 = vpop.f32.mrb[0].mxu0
    %v1685 = vadd.f32 %v1492, %v1684
    %v1686 = vpop.f32.mrb[0].mxu0
    %v1687 = vadd.f32 %v1494, %v1686
    %1688 = vmatprep.mubr.bf16.mxu0 0
    %1689 = vmatmul.mubr.bf16.gmra.mrb[0].mxu0 %v461
    %v1690 = vpop.f32.mrb[0].mxu0
    %v1691 = vadd.f32 %v1498, %v1690
    %v1692 = vpop.f32.mrb[0].mxu0
    %v1693 = vadd.f32 %v1500, %v1692
    %v1694 = vpop.f32.mrb[0].mxu0
    %v1695 = vadd.f32 %v1502, %v1694
    %v1696 = vpop.f32.mrb[0].mxu0
    %v1697 = vadd.f32 %v1504, %v1696
    %1698 = vmatprep.mubr.bf16.mxu0 0
    %1699 = vmatmul.mubr.bf16.gmra.mrb[0].mxu0 %v464
    %v1700 = vpop.f32.mrb[0].mxu0
    %v1701 = vadd.f32 %v1508, %v1700
    %v1702 = vpop.f32.mrb[0].mxu0
    %v1703 = vadd.f32 %v1510, %v1702
    %v1704 = vpop.f32.mrb[0].mxu0
    %v1705 = vadd.f32 %v1512, %v1704
    %v1706 = vpop.f32.mrb[0].mxu0
    %v1707 = vadd.f32 %v1514, %v1706
    %1708 = vmatprep.mubr.bf16.mxu0 0
    %1709 = vmatmul.mubr.bf16.gmra.mrb[0].mxu0 %v467
    %v1710 = vpop.f32.mrb[0].mxu0
    %v1711 = vadd.f32 %v1518, %v1710
    %v1712 = vpop.f32.mrb[0].mxu0
    %v1713 = vadd.f32 %v1520, %v1712
    %v1714 = vpop.f32.mrb[0].mxu0
    %v1715 = vadd.f32 %v1522, %v1714
    %v1716 = vpop.f32.mrb[0].mxu0
    %v1717 = vadd.f32 %v1524, %v1716
    %1718 = vmatprep.mubr.bf16.mxu0 0
    %1719 = vmatmul.mubr.bf16.gmra.mrb[0].mxu0 %v470
    %v1720 = vpop.f32.mrb[0].mxu0
    %v1721 = vadd.f32 %v1528, %v1720
    %v1722 = vpop.f32.mrb[0].mxu0
    %v1723 = vadd.f32 %v1530, %v1722
    %v1724 = vpop.f32.mrb[0].mxu0
    %v1725 = vadd.f32 %v1532, %v1724
    %v1726 = vpop.f32.mrb[0].mxu0
    %v1727 = vadd.f32 %v1534, %v1726
    %1728 = vmatprep.mubr.bf16.mxu0 0
    %1729 = vmatmul.mubr.bf16.gmra.mrb[0].mxu0 %v473
    %v1730 = vpop.f32.mrb[0].mxu0
    %v1731 = vadd.f32 %v1538, %v1730
    %v1732 = vpop.f32.mrb[0].mxu0
    %v1733 = vadd.f32 %v1540, %v1732
    %v1734 = vpop.f32.mrb[0].mxu0
    %v1735 = vadd.f32 %v1542, %v1734
    %v1736 = vpop.f32.mrb[0].mxu0
    %v1737 = vadd.f32 %v1544, %v1736
    %1738 = vmatprep.mubr.bf16.mxu0 0
    %1739 = vmatmul.mubr.bf16.gmra.mrb[0].mxu0 %v476
    %v1740 = vpop.f32.mrb[0].mxu0
    %v1741 = vadd.f32 %v1548, %v1740
    %v1742 = vpop.f32.mrb[0].mxu0
    %v1743 = vadd.f32 %v1550, %v1742
    %v1744 = vpop.f32.mrb[0].mxu0
    %v1745 = vadd.f32 %v1552, %v1744
    %v1746 = vpop.f32.mrb[0].mxu0
    %v1747 = vadd.f32 %v1554, %v1746
    %1748 = vmatprep.mubr.bf16.mxu0 0
    %1749 = vmatmul.mubr.bf16.gmra.mrb[0].mxu0 %v479
    %v1750 = vpop.f32.mrb[0].mxu0
    %v1751 = vadd.f32 %v1558, %v1750
    %v1752 = vpop.f32.mrb[0].mxu0
    %v1753 = vadd.f32 %v1560, %v1752
    %v1754 = vpop.f32.mrb[0].mxu0
    %v1755 = vadd.f32 %v1562, %v1754
    %v1756 = vpop.f32.mrb[0].mxu0
    %v1757 = vadd.f32 %v1564, %v1756
    %1758 = vmatprep.mubr.bf16.mxu0 0
    %1759 = vmatmul.mubr.bf16.gmra.mrb[0].mxu0 %v482
    %v1760 = vpop.f32.mrb[0].mxu0
    %v1761 = vadd.f32 %v1568, %v1760
    %v1762 = vpop.f32.mrb[0].mxu0
    %v1763 = vadd.f32 %v1570, %v1762
    %v1764 = vpop.f32.mrb[0].mxu0
    %v1765 = vadd.f32 %v1572, %v1764
    %v1766 = vpop.f32.mrb[0].mxu0
    %v1767 = vadd.f32 %v1574, %v1766
    %1768 = vmatprep.mubr.bf16.mxu0 0
    %1769 = vmatmul.mubr.bf16.gmra.mrb[0].mxu0 %v485
    %v1770 = vpop.f32.mrb[0].mxu0
    %v1771 = vadd.f32 %v1578, %v1770
    %v1772 = vpop.f32.mrb[0].mxu0
    %v1773 = vadd.f32 %v1580, %v1772
    %v1774 = vpop.f32.mrb[0].mxu0
    %v1775 = vadd.f32 %v1582, %v1774
    %v1776 = vpop.f32.mrb[0].mxu0
    %v1777 = vadd.f32 %v1584, %v1776
    %1778 = vmatprep.mubr.bf16.mxu0 0
    %1779 = vmatmul.mubr.bf16.gmra.mrb[0].mxu0 %v488
    %v1780 = vpop.f32.mrb[0].mxu0
    %v1781 = vadd.f32 %v1588, %v1780
    %v1782 = vpop.f32.mrb[0].mxu0
    %v1783 = vadd.f32 %v1590, %v1782
    %v1784 = vpop.f32.mrb[0].mxu0
    %v1785 = vadd.f32 %v1592, %v1784
    %v1786 = vpop.f32.mrb[0].mxu0
    %v1787 = vadd.f32 %v1594, %v1786
    %1788 = vdwg.mxu0
    %v1789 = vmul.f32 %v1245, 0.5
    %v1790 = vmul.f32 %v1247, 0.5
    %v1791 = vmul.f32 %v1631, 0.5
    %v1792 = vmul.f32 %v1633, 0.5
    %v1793 = vmul.f32 %v1249, 0.5
    %v1794 = vmul.f32 %v1251, 0.5
    %v1795 = vmul.f32 %v1635, 0.5
    %v1796 = vmul.f32 %v1637, 0.5
    %v1797 = vmul.f32 %v1255, 0.5
    %v1798 = vmul.f32 %v1257, 0.5
    %v1799 = vmul.f32 %v1641, 0.5
    %v1800 = vmul.f32 %v1643, 0.5
    %v1801 = vmul.f32 %v1259, 0.5
    %v1802 = vmul.f32 %v1261, 0.5
    %v1803 = vmul.f32 %v1645, 0.5
    %v1804 = vmul.f32 %v1647, 0.5
    %v1805 = vmul.f32 %v1265, 0.5
    %v1806 = vmul.f32 %v1267, 0.5
    %v1807 = vmul.f32 %v1651, 0.5
    %v1808 = vmul.f32 %v1653, 0.5
    %v1809 = vmul.f32 %v1269, 0.5
    %v1810 = vmul.f32 %v1271, 0.5
    %v1811 = vmul.f32 %v1655, 0.5
    %v1812 = vmul.f32 %v1657, 0.5
    %v1813 = vmul.f32 %v1275, 0.5
    %v1814 = vmul.f32 %v1277, 0.5
    %v1815 = vmul.f32 %v1661, 0.5
    %v1816 = vmul.f32 %v1663, 0.5
    %v1817 = vmul.f32 %v1279, 0.5
    %v1818 = vmul.f32 %v1281, 0.5
    %v1819 = vmul.f32 %v1665, 0.5
    %v1820 = vmul.f32 %v1667, 0.5
    %v1821 = vmul.f32 %v1285, 0.5
    %v1822 = vmul.f32 %v1287, 0.5
    %v1823 = vmul.f32 %v1671, 0.5
    %v1824 = vmul.f32 %v1673, 0.5
    %v1825 = vmul.f32 %v1289, 0.5
    %v1826 = vmul.f32 %v1291, 0.5
    %v1827 = vmul.f32 %v1675, 0.5
    %v1828 = vmul.f32 %v1677, 0.5
    %v1829 = vmul.f32 %v1295, 0.5
    %v1830 = vmul.f32 %v1297, 0.5
    %v1831 = vmul.f32 %v1681, 0.5
    %v1832 = vmul.f32 %v1683, 0.5
    %v1833 = vmul.f32 %v1299, 0.5
    %v1834 = vmul.f32 %v1301, 0.5
    %v1835 = vmul.f32 %v1685, 0.5
    %v1836 = vmul.f32 %v1687, 0.5
    %v1837 = vmul.f32 %v1305, 0.5
    %v1838 = vmul.f32 %v1307, 0.5
    %v1839 = vmul.f32 %v1691, 0.5
    %v1840 = vmul.f32 %v1693, 0.5
    %v1841 = vmul.f32 %v1309, 0.5
    %v1842 = vmul.f32 %v1311, 0.5
    %v1843 = vmul.f32 %v1695, 0.5
    %v1844 = vmul.f32 %v1697, 0.5
    %v1845 = vmul.f32 %v1315, 0.5
    %v1846 = vmul.f32 %v1317, 0.5
    %v1847 = vmul.f32 %v1701, 0.5
    %v1848 = vmul.f32 %v1703, 0.5
    %v1849 = vmul.f32 %v1319, 0.5
    %v1850 = vmul.f32 %v1321, 0.5
    %v1851 = vmul.f32 %v1705, 0.5
    %v1852 = vmul.f32 %v1707, 0.5
    %v1853 = vmul.f32 %v1325, 0.5
    %v1854 = vmul.f32 %v1327, 0.5
    %v1855 = vmul.f32 %v1711, 0.5
    %v1856 = vmul.f32 %v1713, 0.5
    %v1857 = vmul.f32 %v1329, 0.5
    %v1858 = vmul.f32 %v1331, 0.5
    %v1859 = vmul.f32 %v1715, 0.5
    %v1860 = vmul.f32 %v1717, 0.5
    %v1861 = vmul.f32 %v1335, 0.5
    %v1862 = vmul.f32 %v1337, 0.5
    %v1863 = vmul.f32 %v1721, 0.5
    %v1864 = vmul.f32 %v1723, 0.5
    %v1865 = vmul.f32 %v1339, 0.5
    %v1866 = vmul.f32 %v1341, 0.5
    %v1867 = vmul.f32 %v1725, 0.5
    %v1868 = vmul.f32 %v1727, 0.5
    %v1869 = vmul.f32 %v1345, 0.5
    %v1870 = vmul.f32 %v1347, 0.5
    %v1871 = vmul.f32 %v1731, 0.5
    %v1872 = vmul.f32 %v1733, 0.5
    %v1873 = vmul.f32 %v1349, 0.5
    %v1874 = vmul.f32 %v1351, 0.5
    %v1875 = vmul.f32 %v1735, 0.5
    %v1876 = vmul.f32 %v1737, 0.5
    %v1877 = vmul.f32 %v1355, 0.5
    %v1878 = vmul.f32 %v1357, 0.5
    %v1879 = vmul.f32 %v1741, 0.5
    %v1880 = vmul.f32 %v1743, 0.5
    %v1881 = vmul.f32 %v1359, 0.5
    %v1882 = vmul.f32 %v1361, 0.5
    %v1883 = vmul.f32 %v1745, 0.5
    %v1884 = vmul.f32 %v1747, 0.5
    %v1885 = vmul.f32 %v1365, 0.5
    %v1886 = vmul.f32 %v1367, 0.5
    %v1887 = vmul.f32 %v1751, 0.5
    %v1888 = vmul.f32 %v1753, 0.5
    %v1889 = vmul.f32 %v1369, 0.5
    %v1890 = vmul.f32 %v1371, 0.5
    %v1891 = vmul.f32 %v1755, 0.5
    %v1892 = vmul.f32 %v1757, 0.5
    %v1893 = vmul.f32 %v1375, 0.5
    %v1894 = vmul.f32 %v1377, 0.5
    %v1895 = vmul.f32 %v1761, 0.5
    %v1896 = vmul.f32 %v1763, 0.5
    %v1897 = vmul.f32 %v1379, 0.5
    %v1898 = vmul.f32 %v1381, 0.5
    %v1899 = vmul.f32 %v1765, 0.5
    %v1900 = vmul.f32 %v1767, 0.5
    %v1901 = vmul.f32 %v1385, 0.5
    %v1902 = vmul.f32 %v1387, 0.5
    %v1903 = vmul.f32 %v1771, 0.5
    %v1904 = vmul.f32 %v1773, 0.5
    %v1905 = vmul.f32 %v1389, 0.5
    %v1906 = vmul.f32 %v1391, 0.5
    %v1907 = vmul.f32 %v1775, 0.5
    %v1908 = vmul.f32 %v1777, 0.5
    %v1909 = vmul.f32 %v1395, 0.5
    %v1910 = vmul.f32 %v1397, 0.5
    %v1911 = vmul.f32 %v1781, 0.5
    %v1912 = vmul.f32 %v1783, 0.5
    %v1913 = vmul.f32 %v1399, 0.5
    %v1914 = vmul.f32 %v1401, 0.5
    %v1915 = vmul.f32 %v1785, 0.5
    %v1916 = vmul.f32 %v1787, 0.5
    %v1917 = vmul.f32 %v1245, 0.70710677
    %v1918 = vmul.f32 %v1247, 0.70710677
    %v1919 = vmul.f32 %v1631, 0.70710677
    %v1920 = vmul.f32 %v1633, 0.70710677
    %v1921 = vmul.f32 %v1249, 0.70710677
    %v1922 = vmul.f32 %v1251, 0.70710677
    %v1923 = vmul.f32 %v1635, 0.70710677
    %v1924 = vmul.f32 %v1637, 0.70710677
    %v1925 = vmul.f32 %v1255, 0.70710677
    %v1926 = vmul.f32 %v1257, 0.70710677
    %v1927 = vmul.f32 %v1641, 0.70710677
    %v1928 = vmul.f32 %v1643, 0.70710677
    %v1929 = vmul.f32 %v1259, 0.70710677
    %v1930 = vmul.f32 %v1261, 0.70710677
    %v1931 = vmul.f32 %v1645, 0.70710677
    %v1932 = vmul.f32 %v1647, 0.70710677
    %v1933 = vmul.f32 %v1265, 0.70710677
    %v1934 = vmul.f32 %v1267, 0.70710677
    %v1935 = vmul.f32 %v1651, 0.70710677
    %v1936 = vmul.f32 %v1653, 0.70710677
    %v1937 = vmul.f32 %v1269, 0.70710677
    %v1938 = vmul.f32 %v1271, 0.70710677
    %v1939 = vmul.f32 %v1655, 0.70710677
    %v1940 = vmul.f32 %v1657, 0.70710677
    %v1941 = vmul.f32 %v1275, 0.70710677
    %v1942 = vmul.f32 %v1277, 0.70710677
    %v1943 = vmul.f32 %v1661, 0.70710677
    %v1944 = vmul.f32 %v1663, 0.70710677
    %v1945 = vmul.f32 %v1279, 0.70710677
    %v1946 = vmul.f32 %v1281, 0.70710677
    %v1947 = vmul.f32 %v1665, 0.70710677
    %v1948 = vmul.f32 %v1667, 0.70710677
    %v1949 = vmul.f32 %v1285, 0.70710677
    %v1950 = vmul.f32 %v1287, 0.70710677
    %v1951 = vmul.f32 %v1671, 0.70710677
    %v1952 = vmul.f32 %v1673, 0.70710677
    %v1953 = vmul.f32 %v1289, 0.70710677
    %v1954 = vmul.f32 %v1291, 0.70710677
    %v1955 = vmul.f32 %v1675, 0.70710677
    %v1956 = vmul.f32 %v1677, 0.70710677
    %v1957 = vmul.f32 %v1295, 0.70710677
    %v1958 = vmul.f32 %v1297, 0.70710677
    %v1959 = vmul.f32 %v1681, 0.70710677
    %v1960 = vmul.f32 %v1683, 0.70710677
    %v1961 = vmul.f32 %v1299, 0.70710677
    %v1962 = vmul.f32 %v1301, 0.70710677
    %v1963 = vmul.f32 %v1685, 0.70710677
    %v1964 = vmul.f32 %v1687, 0.70710677
    %v1965 = vmul.f32 %v1305, 0.70710677
    %v1966 = vmul.f32 %v1307, 0.70710677
    %v1967 = vmul.f32 %v1691, 0.70710677
    %v1968 = vmul.f32 %v1693, 0.70710677
    %v1969 = vmul.f32 %v1309, 0.70710677
    %v1970 = vmul.f32 %v1311, 0.70710677
    %v1971 = vmul.f32 %v1695, 0.70710677
    %v1972 = vmul.f32 %v1697, 0.70710677
    %v1973 = vmul.f32 %v1315, 0.70710677
    %v1974 = vmul.f32 %v1317, 0.70710677
    %v1975 = vmul.f32 %v1701, 0.70710677
    %v1976 = vmul.f32 %v1703, 0.70710677
    %v1977 = vmul.f32 %v1319, 0.70710677
    %v1978 = vmul.f32 %v1321, 0.70710677
    %v1979 = vmul.f32 %v1705, 0.70710677
    %v1980 = vmul.f32 %v1707, 0.70710677
    %v1981 = vmul.f32 %v1325, 0.70710677
    %v1982 = vmul.f32 %v1327, 0.70710677
    %v1983 = vmul.f32 %v1711, 0.70710677
    %v1984 = vmul.f32 %v1713, 0.70710677
    %v1985 = vmul.f32 %v1329, 0.70710677
    %v1986 = vmul.f32 %v1331, 0.70710677
    %v1987 = vmul.f32 %v1715, 0.70710677
    %v1988 = vmul.f32 %v1717, 0.70710677
    %v1989 = vmul.f32 %v1335, 0.70710677
    %v1990 = vmul.f32 %v1337, 0.70710677
    %v1991 = vmul.f32 %v1721, 0.70710677
    %v1992 = vmul.f32 %v1723, 0.70710677
    %v1993 = vmul.f32 %v1339, 0.70710677
    %v1994 = vmul.f32 %v1341, 0.70710677
    %v1995 = vmul.f32 %v1725, 0.70710677
    %v1996 = vmul.f32 %v1727, 0.70710677
    %v1997 = vmul.f32 %v1345, 0.70710677
    %v1998 = vmul.f32 %v1347, 0.70710677
    %v1999 = vmul.f32 %v1731, 0.70710677
    %v2000 = vmul.f32 %v1733, 0.70710677
    %v2001 = vmul.f32 %v1349, 0.70710677
    %v2002 = vmul.f32 %v1351, 0.70710677
    %v2003 = vmul.f32 %v1735, 0.70710677
    %v2004 = vmul.f32 %v1737, 0.70710677
    %v2005 = vmul.f32 %v1355, 0.70710677
    %v2006 = vmul.f32 %v1357, 0.70710677
    %v2007 = vmul.f32 %v1741, 0.70710677
    %v2008 = vmul.f32 %v1743, 0.70710677
    %v2009 = vmul.f32 %v1359, 0.70710677
    %v2010 = vmul.f32 %v1361, 0.70710677
    %v2011 = vmul.f32 %v1745, 0.70710677
    %v2012 = vmul.f32 %v1747, 0.70710677
    %v2013 = vmul.f32 %v1365, 0.70710677
    %v2014 = vmul.f32 %v1367, 0.70710677
    %v2015 = vmul.f32 %v1751, 0.70710677
    %v2016 = vmul.f32 %v1753, 0.70710677
    %v2017 = vmul.f32 %v1369, 0.70710677
    %v2018 = vmul.f32 %v1371, 0.70710677
    %v2019 = vmul.f32 %v1755, 0.70710677
    %v2020 = vmul.f32 %v1757, 0.70710677
    %v2021 = vmul.f32 %v1375, 0.70710677
    %v2022 = vmul.f32 %v1377, 0.70710677
    %v2023 = vmul.f32 %v1761, 0.70710677
    %v2024 = vmul.f32 %v1763, 0.70710677
    %v2025 = vmul.f32 %v1379, 0.70710677
    %v2026 = vmul.f32 %v1381, 0.70710677
    %v2027 = vmul.f32 %v1765, 0.70710677
    %v2028 = vmul.f32 %v1767, 0.70710677
    %v2029 = vmul.f32 %v1385, 0.70710677
    %v2030 = vmul.f32 %v1387, 0.70710677
    %v2031 = vmul.f32 %v1771, 0.70710677
    %v2032 = vmul.f32 %v1773, 0.70710677
    %v2033 = vmul.f32 %v1389, 0.70710677
    %v2034 = vmul.f32 %v1391, 0.70710677
    %v2035 = vmul.f32 %v1775, 0.70710677
    %v2036 = vmul.f32 %v1777, 0.70710677
    %v2037 = vmul.f32 %v1395, 0.70710677
    %v2038 = vmul.f32 %v1397, 0.70710677
    %v2039 = vmul.f32 %v1781, 0.70710677
    %v2040 = vmul.f32 %v1783, 0.70710677
    %v2041 = vmul.f32 %v1399, 0.70710677
    %v2042 = vmul.f32 %v1401, 0.70710677
    %v2043 = vmul.f32 %v1785, 0.70710677
    %v2044 = vmul.f32 %v1787, 0.70710677
    %v2045 = verf.f32.pop %v1917
    %v2046 = verf.f32.pop %v1918
    %v2047 = verf.f32.pop %v1919
    %v2048 = verf.f32.pop %v1920
    %v2049 = verf.f32.pop %v1921
    %v2050 = verf.f32.pop %v1922
    %v2051 = verf.f32.pop %v1923
    %v2052 = verf.f32.pop %v1924
    %v2053 = verf.f32.pop %v1925
    %v2054 = verf.f32.pop %v1926
    %v2055 = verf.f32.pop %v1927
    %v2056 = verf.f32.pop %v1928
    %v2057 = verf.f32.pop %v1929
    %v2058 = verf.f32.pop %v1930
    %v2059 = verf.f32.pop %v1931
    %v2060 = verf.f32.pop %v1932
    %v2061 = verf.f32.pop %v1933
    %v2062 = verf.f32.pop %v1934
    %v2063 = verf.f32.pop %v1935
    %v2064 = verf.f32.pop %v1936
    %v2065 = verf.f32.pop %v1937
    %v2066 = verf.f32.pop %v1938
    %v2067 = verf.f32.pop %v1939
    %v2068 = verf.f32.pop %v1940
    %v2069 = verf.f32.pop %v1941
    %v2070 = verf.f32.pop %v1942
    %v2071 = verf.f32.pop %v1943
    %v2072 = verf.f32.pop %v1944
    %v2073 = verf.f32.pop %v1945
    %v2074 = verf.f32.pop %v1946
    %v2075 = verf.f32.pop %v1947
    %v2076 = verf.f32.pop %v1948
    %v2077 = verf.f32.pop %v1949
    %v2078 = verf.f32.pop %v1950
    %v2079 = verf.f32.pop %v1951
    %v2080 = verf.f32.pop %v1952
    %v2081 = verf.f32.pop %v1953
    %v2082 = verf.f32.pop %v1954
    %v2083 = verf.f32.pop %v1955
    %v2084 = verf.f32.pop %v1956
    %v2085 = verf.f32.pop %v1957
    %v2086 = verf.f32.pop %v1958
    %v2087 = verf.f32.pop %v1959
    %v2088 = verf.f32.pop %v1960
    %v2089 = verf.f32.pop %v1961
    %v2090 = verf.f32.pop %v1962
    %v2091 = verf.f32.pop %v1963
    %v2092 = verf.f32.pop %v1964
    %v2093 = verf.f32.pop %v1965
    %v2094 = verf.f32.pop %v1966
    %v2095 = verf.f32.pop %v1967
    %v2096 = verf.f32.pop %v1968
    %v2097 = verf.f32.pop %v1969
    %v2098 = verf.f32.pop %v1970
    %v2099 = verf.f32.pop %v1971
    %v2100 = verf.f32.pop %v1972
    %v2101 = verf.f32.pop %v1973
    %v2102 = verf.f32.pop %v1974
    %v2103 = verf.f32.pop %v1975
    %v2104 = verf.f32.pop %v1976
    %v2105 = verf.f32.pop %v1977
    %v2106 = verf.f32.pop %v1978
    %v2107 = verf.f32.pop %v1979
    %v2108 = verf.f32.pop %v1980
    %v2109 = verf.f32.pop %v1981
    %v2110 = verf.f32.pop %v1982
    %v2111 = verf.f32.pop %v1983
    %v2112 = verf.f32.pop %v1984
    %v2113 = verf.f32.pop %v1985
    %v2114 = verf.f32.pop %v1986
    %v2115 = verf.f32.pop %v1987
    %v2116 = verf.f32.pop %v1988
    %v2117 = verf.f32.pop %v1989
    %v2118 = verf.f32.pop %v1990
    %v2119 = verf.f32.pop %v1991
    %v2120 = verf.f32.pop %v1992
    %v2121 = verf.f32.pop %v1993
    %v2122 = verf.f32.pop %v1994
    %v2123 = verf.f32.pop %v1995
    %v2124 = verf.f32.pop %v1996
    %v2125 = verf.f32.pop %v1997
    %v2126 = verf.f32.pop %v1998
    %v2127 = verf.f32.pop %v1999
    %v2128 = verf.f32.pop %v2000
    %v2129 = verf.f32.pop %v2001
    %v2130 = verf.f32.pop %v2002
    %v2131 = verf.f32.pop %v2003
    %v2132 = verf.f32.pop %v2004
    %v2133 = verf.f32.pop %v2005
    %v2134 = verf.f32.pop %v2006
    %v2135 = verf.f32.pop %v2007
    %v2136 = verf.f32.pop %v2008
    %v2137 = verf.f32.pop %v2009
    %v2138 = verf.f32.pop %v2010
    %v2139 = verf.f32.pop %v2011
    %v2140 = verf.f32.pop %v2012
    %v2141 = verf.f32.pop %v2013
    %v2142 = verf.f32.pop %v2014
    %v2143 = verf.f32.pop %v2015
    %v2144 = verf.f32.pop %v2016
    %v2145 = verf.f32.pop %v2017
    %v2146 = verf.f32.pop %v2018
    %v2147 = verf.f32.pop %v2019
    %v2148 = verf.f32.pop %v2020
    %v2149 = verf.f32.pop %v2021
    %v2150 = verf.f32.pop %v2022
    %v2151 = verf.f32.pop %v2023
    %v2152 = verf.f32.pop %v2024
    %v2153 = verf.f32.pop %v2025
    %v2154 = verf.f32.pop %v2026
    %v2155 = verf.f32.pop %v2027
    %v2156 = verf.f32.pop %v2028
    %v2157 = verf.f32.pop %v2029
    %v2158 = verf.f32.pop %v2030
    %v2159 = verf.f32.pop %v2031
    %v2160 = verf.f32.pop %v2032
    %v2161 = verf.f32.pop %v2033
    %v2162 = verf.f32.pop %v2034
    %v2163 = verf.f32.pop %v2035
    %v2164 = verf.f32.pop %v2036
    %v2165 = verf.f32.pop %v2037
    %v2166 = verf.f32.pop %v2038
    %v2167 = verf.f32.pop %v2039
    %v2168 = verf.f32.pop %v2040
    %v2169 = verf.f32.pop %v2041
    %v2170 = verf.f32.pop %v2042
    %v2171 = verf.f32.pop %v2043
    %v2172 = verf.f32.pop %v2044
    %v2173 = vadd.f32 %v2045, 1.0
    %v2174 = vadd.f32 %v2046, 1.0
    %v2175 = vadd.f32 %v2047, 1.0
    %v2176 = vadd.f32 %v2048, 1.0
    %v2177 = vadd.f32 %v2049, 1.0
    %v2178 = vadd.f32 %v2050, 1.0
    %v2179 = vadd.f32 %v2051, 1.0
    %v2180 = vadd.f32 %v2052, 1.0
    %v2181 = vadd.f32 %v2053, 1.0
    %v2182 = vadd.f32 %v2054, 1.0
    %v2183 = vadd.f32 %v2055, 1.0
    %v2184 = vadd.f32 %v2056, 1.0
    %v2185 = vadd.f32 %v2057, 1.0
    %v2186 = vadd.f32 %v2058, 1.0
    %v2187 = vadd.f32 %v2059, 1.0
    %v2188 = vadd.f32 %v2060, 1.0
    %v2189 = vadd.f32 %v2061, 1.0
    %v2190 = vadd.f32 %v2062, 1.0
    %v2191 = vadd.f32 %v2063, 1.0
    %v2192 = vadd.f32 %v2064, 1.0
    %v2193 = vadd.f32 %v2065, 1.0
    %v2194 = vadd.f32 %v2066, 1.0
    %v2195 = vadd.f32 %v2067, 1.0
    %v2196 = vadd.f32 %v2068, 1.0
    %v2197 = vadd.f32 %v2069, 1.0
    %v2198 = vadd.f32 %v2070, 1.0
    %v2199 = vadd.f32 %v2071, 1.0
    %v2200 = vadd.f32 %v2072, 1.0
    %v2201 = vadd.f32 %v2073, 1.0
    %v2202 = vadd.f32 %v2074, 1.0
    %v2203 = vadd.f32 %v2075, 1.0
    %v2204 = vadd.f32 %v2076, 1.0
    %v2205 = vadd.f32 %v2077, 1.0
    %v2206 = vadd.f32 %v2078, 1.0
    %v2207 = vadd.f32 %v2079, 1.0
    %v2208 = vadd.f32 %v2080, 1.0
    %v2209 = vadd.f32 %v2081, 1.0
    %v2210 = vadd.f32 %v2082, 1.0
    %v2211 = vadd.f32 %v2083, 1.0
    %v2212 = vadd.f32 %v2084, 1.0
    %v2213 = vadd.f32 %v2085, 1.0
    %v2214 = vadd.f32 %v2086, 1.0
    %v2215 = vadd.f32 %v2087, 1.0
    %v2216 = vadd.f32 %v2088, 1.0
    %v2217 = vadd.f32 %v2089, 1.0
    %v2218 = vadd.f32 %v2090, 1.0
    %v2219 = vadd.f32 %v2091, 1.0
    %v2220 = vadd.f32 %v2092, 1.0
    %v2221 = vadd.f32 %v2093, 1.0
    %v2222 = vadd.f32 %v2094, 1.0
    %v2223 = vadd.f32 %v2095, 1.0
    %v2224 = vadd.f32 %v2096, 1.0
    %v2225 = vadd.f32 %v2097, 1.0
    %v2226 = vadd.f32 %v2098, 1.0
    %v2227 = vadd.f32 %v2099, 1.0
    %v2228 = vadd.f32 %v2100, 1.0
    %v2229 = vadd.f32 %v2101, 1.0
    %v2230 = vadd.f32 %v2102, 1.0
    %v2231 = vadd.f32 %v2103, 1.0
    %v2232 = vadd.f32 %v2104, 1.0
    %v2233 = vadd.f32 %v2105, 1.0
    %v2234 = vadd.f32 %v2106, 1.0
    %v2235 = vadd.f32 %v2107, 1.0
    %v2236 = vadd.f32 %v2108, 1.0
    %v2237 = vadd.f32 %v2109, 1.0
    %v2238 = vadd.f32 %v2110, 1.0
    %v2239 = vadd.f32 %v2111, 1.0
    %v2240 = vadd.f32 %v2112, 1.0
    %v2241 = vadd.f32 %v2113, 1.0
    %v2242 = vadd.f32 %v2114, 1.0
    %v2243 = vadd.f32 %v2115, 1.0
    %v2244 = vadd.f32 %v2116, 1.0
    %v2245 = vadd.f32 %v2117, 1.0
    %v2246 = vadd.f32 %v2118, 1.0
    %v2247 = vadd.f32 %v2119, 1.0
    %v2248 = vadd.f32 %v2120, 1.0
    %v2249 = vadd.f32 %v2121, 1.0
    %v2250 = vadd.f32 %v2122, 1.0
    %v2251 = vadd.f32 %v2123, 1.0
    %v2252 = vadd.f32 %v2124, 1.0
    %v2253 = vadd.f32 %v2125, 1.0
    %v2254 = vadd.f32 %v2126, 1.0
    %v2255 = vadd.f32 %v2127, 1.0
    %v2256 = vadd.f32 %v2128, 1.0
    %v2257 = vadd.f32 %v2129, 1.0
    %v2258 = vadd.f32 %v2130, 1.0
    %v2259 = vadd.f32 %v2131, 1.0
    %v2260 = vadd.f32 %v2132, 1.0
    %v2261 = vadd.f32 %v2133, 1.0
    %v2262 = vadd.f32 %v2134, 1.0
    %v2263 = vadd.f32 %v2135, 1.0
    %v2264 = vadd.f32 %v2136, 1.0
    %v2265 = vadd.f32 %v2137, 1.0
    %v2266 = vadd.f32 %v2138, 1.0
    %v2267 = vadd.f32 %v2139, 1.0
    %v2268 = vadd.f32 %v2140, 1.0
    %v2269 = vadd.f32 %v2141, 1.0
    %v2270 = vadd.f32 %v2142, 1.0
    %v2271 = vadd.f32 %v2143, 1.0
    %v2272 = vadd.f32 %v2144, 1.0
    %v2273 = vadd.f32 %v2145, 1.0
    %v2274 = vadd.f32 %v2146, 1.0
    %v2275 = vadd.f32 %v2147, 1.0
    %v2276 = vadd.f32 %v2148, 1.0
    %v2277 = vadd.f32 %v2149, 1.0
    %v2278 = vadd.f32 %v2150, 1.0
    %v2279 = vadd.f32 %v2151, 1.0
    %v2280 = vadd.f32 %v2152, 1.0
    %v2281 = vadd.f32 %v2153, 1.0
    %v2282 = vadd.f32 %v2154, 1.0
    %v2283 = vadd.f32 %v2155, 1.0
    %v2284 = vadd.f32 %v2156, 1.0
    %v2285 = vadd.f32 %v2157, 1.0
    %v2286 = vadd.f32 %v2158, 1.0
    %v2287 = vadd.f32 %v2159, 1.0
    %v2288 = vadd.f32 %v2160, 1.0
    %v2289 = vadd.f32 %v2161, 1.0
    %v2290 = vadd.f32 %v2162, 1.0
    %v2291 = vadd.f32 %v2163, 1.0
    %v2292 = vadd.f32 %v2164, 1.0
    %v2293 = vadd.f32 %v2165, 1.0
    %v2294 = vadd.f32 %v2166, 1.0
    %v2295 = vadd.f32 %v2167, 1.0
    %v2296 = vadd.f32 %v2168, 1.0
    %v2297 = vadd.f32 %v2169, 1.0
    %v2298 = vadd.f32 %v2170, 1.0
    %v2299 = vadd.f32 %v2171, 1.0
    %v2300 = vadd.f32 %v2172, 1.0
    %v2301 = vmul.f32 %v1789, %v2173
    %v2302 = vmul.f32 %v1790, %v2174
    %v2303 = vmul.f32 %v1791, %v2175
    %v2304 = vmul.f32 %v1792, %v2176
    %v2305 = vmul.f32 %v1793, %v2177
    %v2306 = vmul.f32 %v1794, %v2178
    %v2307 = vmul.f32 %v1795, %v2179
    %v2308 = vmul.f32 %v1796, %v2180
    %v2309 = vmul.f32 %v1797, %v2181
    %v2310 = vmul.f32 %v1798, %v2182
    %v2311 = vmul.f32 %v1799, %v2183
    %v2312 = vmul.f32 %v1800, %v2184
    %v2313 = vmul.f32 %v1801, %v2185
    %v2314 = vmul.f32 %v1802, %v2186
    %v2315 = vmul.f32 %v1803, %v2187
    %v2316 = vmul.f32 %v1804, %v2188
    %v2317 = vmul.f32 %v1805, %v2189
    %v2318 = vmul.f32 %v1806, %v2190
    %v2319 = vmul.f32 %v1807, %v2191
    %v2320 = vmul.f32 %v1808, %v2192
    %v2321 = vmul.f32 %v1809, %v2193
    %v2322 = vmul.f32 %v1810, %v2194
    %v2323 = vmul.f32 %v1811, %v2195
    %v2324 = vmul.f32 %v1812, %v2196
    %v2325 = vmul.f32 %v1813, %v2197
    %v2326 = vmul.f32 %v1814, %v2198
    %v2327 = vmul.f32 %v1815, %v2199
    %v2328 = vmul.f32 %v1816, %v2200
    %v2329 = vmul.f32 %v1817, %v2201
    %v2330 = vmul.f32 %v1818, %v2202
    %v2331 = vmul.f32 %v1819, %v2203
    %v2332 = vmul.f32 %v1820, %v2204
    %v2333 = vmul.f32 %v1821, %v2205
    %v2334 = vmul.f32 %v1822, %v2206
    %v2335 = vmul.f32 %v1823, %v2207
    %v2336 = vmul.f32 %v1824, %v2208
    %v2337 = vmul.f32 %v1825, %v2209
    %v2338 = vmul.f32 %v1826, %v2210
    %v2339 = vmul.f32 %v1827, %v2211
    %v2340 = vmul.f32 %v1828, %v2212
    %v2341 = vmul.f32 %v1829, %v2213
    %v2342 = vmul.f32 %v1830, %v2214
    %v2343 = vmul.f32 %v1831, %v2215
    %v2344 = vmul.f32 %v1832, %v2216
    %v2345 = vmul.f32 %v1833, %v2217
    %v2346 = vmul.f32 %v1834, %v2218
    %v2347 = vmul.f32 %v1835, %v2219
    %v2348 = vmul.f32 %v1836, %v2220
    %v2349 = vmul.f32 %v1837, %v2221
    %v2350 = vmul.f32 %v1838, %v2222
    %v2351 = vmul.f32 %v1839, %v2223
    %v2352 = vmul.f32 %v1840, %v2224
    %v2353 = vmul.f32 %v1841, %v2225
    %v2354 = vmul.f32 %v1842, %v2226
    %v2355 = vmul.f32 %v1843, %v2227
    %v2356 = vmul.f32 %v1844, %v2228
    %v2357 = vmul.f32 %v1845, %v2229
    %v2358 = vmul.f32 %v1846, %v2230
    %v2359 = vmul.f32 %v1847, %v2231
    %v2360 = vmul.f32 %v1848, %v2232
    %v2361 = vmul.f32 %v1849, %v2233
    %v2362 = vmul.f32 %v1850, %v2234
    %v2363 = vmul.f32 %v1851, %v2235
    %v2364 = vmul.f32 %v1852, %v2236
    %v2365 = vmul.f32 %v1853, %v2237
    %v2366 = vmul.f32 %v1854, %v2238
    %v2367 = vmul.f32 %v1855, %v2239
    %v2368 = vmul.f32 %v1856, %v2240
    %v2369 = vmul.f32 %v1857, %v2241
    %v2370 = vmul.f32 %v1858, %v2242
    %v2371 = vmul.f32 %v1859, %v2243
    %v2372 = vmul.f32 %v1860, %v2244
    %v2373 = vmul.f32 %v1861, %v2245
    %v2374 = vmul.f32 %v1862, %v2246
    %v2375 = vmul.f32 %v1863, %v2247
    %v2376 = vmul.f32 %v1864, %v2248
    %v2377 = vmul.f32 %v1865, %v2249
    %v2378 = vmul.f32 %v1866, %v2250
    %v2379 = vmul.f32 %v1867, %v2251
    %v2380 = vmul.f32 %v1868, %v2252
    %v2381 = vmul.f32 %v1869, %v2253
    %v2382 = vmul.f32 %v1870, %v2254
    %v2383 = vmul.f32 %v1871, %v2255
    %v2384 = vmul.f32 %v1872, %v2256
    %v2385 = vmul.f32 %v1873, %v2257
    %v2386 = vmul.f32 %v1874, %v2258
    %v2387 = vmul.f32 %v1875, %v2259
    %v2388 = vmul.f32 %v1876, %v2260
    %v2389 = vmul.f32 %v1877, %v2261
    %v2390 = vmul.f32 %v1878, %v2262
    %v2391 = vmul.f32 %v1879, %v2263
    %v2392 = vmul.f32 %v1880, %v2264
    %v2393 = vmul.f32 %v1881, %v2265
    %v2394 = vmul.f32 %v1882, %v2266
    %v2395 = vmul.f32 %v1883, %v2267
    %v2396 = vmul.f32 %v1884, %v2268
    %v2397 = vmul.f32 %v1885, %v2269
    %v2398 = vmul.f32 %v1886, %v2270
    %v2399 = vmul.f32 %v1887, %v2271
    %v2400 = vmul.f32 %v1888, %v2272
    %v2401 = vmul.f32 %v1889, %v2273
    %v2402 = vmul.f32 %v1890, %v2274
    %v2403 = vmul.f32 %v1891, %v2275
    %v2404 = vmul.f32 %v1892, %v2276
    %v2405 = vmul.f32 %v1893, %v2277
    %v2406 = vmul.f32 %v1894, %v2278
    %v2407 = vmul.f32 %v1895, %v2279
    %v2408 = vmul.f32 %v1896, %v2280
    %v2409 = vmul.f32 %v1897, %v2281
    %v2410 = vmul.f32 %v1898, %v2282
    %v2411 = vmul.f32 %v1899, %v2283
    %v2412 = vmul.f32 %v1900, %v2284
    %v2413 = vmul.f32 %v1901, %v2285
    %v2414 = vmul.f32 %v1902, %v2286
    %v2415 = vmul.f32 %v1903, %v2287
    %v2416 = vmul.f32 %v1904, %v2288
    %v2417 = vmul.f32 %v1905, %v2289
    %v2418 = vmul.f32 %v1906, %v2290
    %v2419 = vmul.f32 %v1907, %v2291
    %v2420 = vmul.f32 %v1908, %v2292
    %v2421 = vmul.f32 %v1909, %v2293
    %v2422 = vmul.f32 %v1910, %v2294
    %v2423 = vmul.f32 %v1911, %v2295
    %v2424 = vmul.f32 %v1912, %v2296
    %v2425 = vmul.f32 %v1913, %v2297
    %v2426 = vmul.f32 %v1914, %v2298
    %v2427 = vmul.f32 %v1915, %v2299
    %v2428 = vmul.f32 %v1916, %v2300
    %v2429 = vpack.c.bf16 %v2305, %v2301
    %v2430 = vpack.c.bf16 %v2306, %v2302
    %v2431 = vpack.c.bf16 %v2307, %v2303
    %v2432 = vpack.c.bf16 %v2308, %v2304
    %v2433 = vpack.c.bf16 %v2313, %v2309
    %v2434 = vpack.c.bf16 %v2314, %v2310
    %v2435 = vpack.c.bf16 %v2315, %v2311
    %v2436 = vpack.c.bf16 %v2316, %v2312
    %v2437 = vpack.c.bf16 %v2321, %v2317
    %v2438 = vpack.c.bf16 %v2322, %v2318
    %v2439 = vpack.c.bf16 %v2323, %v2319
    %v2440 = vpack.c.bf16 %v2324, %v2320
    %v2441 = vpack.c.bf16 %v2329, %v2325
    %v2442 = vpack.c.bf16 %v2330, %v2326
    %v2443 = vpack.c.bf16 %v2331, %v2327
    %v2444 = vpack.c.bf16 %v2332, %v2328
    %v2445 = vpack.c.bf16 %v2337, %v2333
    %v2446 = vpack.c.bf16 %v2338, %v2334
    %v2447 = vpack.c.bf16 %v2339, %v2335
    %v2448 = vpack.c.bf16 %v2340, %v2336
    %v2449 = vpack.c.bf16 %v2345, %v2341
    %v2450 = vpack.c.bf16 %v2346, %v2342
    %v2451 = vpack.c.bf16 %v2347, %v2343
    %v2452 = vpack.c.bf16 %v2348, %v2344
    %v2453 = vpack.c.bf16 %v2353, %v2349
    %v2454 = vpack.c.bf16 %v2354, %v2350
    %v2455 = vpack.c.bf16 %v2355, %v2351
    %v2456 = vpack.c.bf16 %v2356, %v2352
    %v2457 = vpack.c.bf16 %v2361, %v2357
    %v2458 = vpack.c.bf16 %v2362, %v2358
    %v2459 = vpack.c.bf16 %v2363, %v2359
    %v2460 = vpack.c.bf16 %v2364, %v2360
    %v2461 = vpack.c.bf16 %v2369, %v2365
    %v2462 = vpack.c.bf16 %v2370, %v2366
    %v2463 = vpack.c.bf16 %v2371, %v2367
    %v2464 = vpack.c.bf16 %v2372, %v2368
    %v2465 = vpack.c.bf16 %v2377, %v2373
    %v2466 = vpack.c.bf16 %v2378, %v2374
    %v2467 = vpack.c.bf16 %v2379, %v2375
    %v2468 = vpack.c.bf16 %v2380, %v2376
    %v2469 = vpack.c.bf16 %v2385, %v2381
    %v2470 = vpack.c.bf16 %v2386, %v2382
    %v2471 = vpack.c.bf16 %v2387, %v2383
    %v2472 = vpack.c.bf16 %v2388, %v2384
    %v2473 = vpack.c.bf16 %v2393, %v2389
    %v2474 = vpack.c.bf16 %v2394, %v2390
    %v2475 = vpack.c.bf16 %v2395, %v2391
    %v2476 = vpack.c.bf16 %v2396, %v2392
    %v2477 = vpack.c.bf16 %v2401, %v2397
    %v2478 = vpack.c.bf16 %v2402, %v2398
    %v2479 = vpack.c.bf16 %v2403, %v2399
    %v2480 = vpack.c.bf16 %v2404, %v2400
    %v2481 = vpack.c.bf16 %v2409, %v2405
    %v2482 = vpack.c.bf16 %v2410, %v2406
    %v2483 = vpack.c.bf16 %v2411, %v2407
    %v2484 = vpack.c.bf16 %v2412, %v2408
    %v2485 = vpack.c.bf16 %v2417, %v2413
    %v2486 = vpack.c.bf16 %v2418, %v2414
    %v2487 = vpack.c.bf16 %v2419, %v2415
    %v2488 = vpack.c.bf16 %v2420, %v2416
    %v2489 = vpack.c.bf16 %v2425, %v2421
    %v2490 = vpack.c.bf16 %v2426, %v2422
    %v2491 = vpack.c.bf16 %v2427, %v2423
    %v2492 = vpack.c.bf16 %v2428, %v2424
    %v2493 = vld [vmem:[#allocation8] sm:$0xff]
    %v2494 = vld [vmem:[#allocation8 + $0x8] sm:$0xf]
    %v2495 = vld [vmem:[#allocation8 + $0xc] sm:$0xff]
    %v2496 = vld [vmem:[#allocation8 + $0x14] sm:$0xf]
    %v2497 = vld [vmem:[#allocation8 + $0x18] sm:$0xff]
    %v2498 = vld [vmem:[#allocation8 + $0x20] sm:$0xf]
    %v2499 = vld [vmem:[#allocation8 + $0x24] sm:$0xff]
    %v2500 = vld [vmem:[#allocation8 + $0x2c] sm:$0xf]
    %v2501 = vld [vmem:[#allocation8 + $0x30] sm:$0xff]
    %v2502 = vld [vmem:[#allocation8 + $0x38] sm:$0xf]
    %v2503 = vld [vmem:[#allocation8 + $0x3c] sm:$0xff]
    %v2504 = vld [vmem:[#allocation8 + $0x44] sm:$0xf]
    %v2505 = vld [vmem:[#allocation8 + $0x48] sm:$0xff]
    %v2506 = vld [vmem:[#allocation8 + $0x50] sm:$0xf]
    %v2507 = vld [vmem:[#allocation8 + $0x54] sm:$0xff]
    %v2508 = vld [vmem:[#allocation8 + $0x5c] sm:$0xf]
    %v2509 = vld [vmem:[#allocation8 + $0x60] sm:$0xff]
    %v2510 = vld [vmem:[#allocation8 + $0x68] sm:$0xf]
    %v2511 = vld [vmem:[#allocation8 + $0x6c] sm:$0xff]
    %v2512 = vld [vmem:[#allocation8 + $0x74] sm:$0xf]
    %v2513 = vld [vmem:[#allocation8 + $0x78] sm:$0xff]
    %v2514 = vld [vmem:[#allocation8 + $0x80] sm:$0xf]
    %v2515 = vld [vmem:[#allocation8 + $0x84] sm:$0xff]
    %v2516 = vld [vmem:[#allocation8 + $0x8c] sm:$0xf]
    %v2517 = vld [vmem:[#allocation8 + $0x90] sm:$0xff]
    %v2518 = vld [vmem:[#allocation8 + $0x98] sm:$0xf]
    %v2519 = vld [vmem:[#allocation8 + $0x9c] sm:$0xff]
    %v2520 = vld [vmem:[#allocation8 + $0xa4] sm:$0xf]
    %v2521 = vld [vmem:[#allocation8 + $0xa8] sm:$0xff]
    %v2522 = vld [vmem:[#allocation8 + $0xb0] sm:$0xf]
    %v2523 = vld [vmem:[#allocation8 + $0xb4] sm:$0xff]
    %v2524 = vld [vmem:[#allocation8 + $0xbc] sm:$0xf]
    %v2525 = vld [vmem:[#allocation8 + $0xc0] sm:$0xff]
    %v2526 = vld [vmem:[#allocation8 + $0xc8] sm:$0xf]
    %v2527 = vld [vmem:[#allocation8 + $0xcc] sm:$0xff]
    %v2528 = vld [vmem:[#allocation8 + $0xd4] sm:$0xf]
    %v2529 = vld [vmem:[#allocation8 + $0xd8] sm:$0xff]
    %v2530 = vld [vmem:[#allocation8 + $0xe0] sm:$0xf]
    %v2531 = vld [vmem:[#allocation8 + $0xe4] sm:$0xff]
    %v2532 = vld [vmem:[#allocation8 + $0xec] sm:$0xf]
    %v2533 = vld [vmem:[#allocation8 + $0xf0] sm:$0xff]
    %v2534 = vld [vmem:[#allocation8 + $0xf8] sm:$0xf]
    %v2535 = vld [vmem:[#allocation8 + $0xfc] sm:$0xff]
    %v2536 = vld [vmem:[#allocation8 + $0x104] sm:$0xf]
    %v2537 = vld [vmem:[#allocation8 + $0x108] sm:$0xff]
    %v2538 = vld [vmem:[#allocation8 + $0x110] sm:$0xf]
    %v2539 = vld [vmem:[#allocation8 + $0x114] sm:$0xff]
    %v2540 = vld [vmem:[#allocation8 + $0x11c] sm:$0xf]
    %v2541 = vld [vmem:[#allocation8 + $0x120] sm:$0xff]
    %v2542 = vld [vmem:[#allocation8 + $0x128] sm:$0xf]
    %v2543 = vld [vmem:[#allocation8 + $0x12c] sm:$0xff]
    %v2544 = vld [vmem:[#allocation8 + $0x134] sm:$0xf]
    %v2545 = vld [vmem:[#allocation8 + $0x138] sm:$0xff]
    %v2546 = vld [vmem:[#allocation8 + $0x140] sm:$0xf]
    %v2547 = vld [vmem:[#allocation8 + $0x144] sm:$0xff]
    %v2548 = vld [vmem:[#allocation8 + $0x14c] sm:$0xf]
    %v2549 = vld [vmem:[#allocation8 + $0x150] sm:$0xff]
    %v2550 = vld [vmem:[#allocation8 + $0x158] sm:$0xf]
    %v2551 = vld [vmem:[#allocation8 + $0x15c] sm:$0xff]
    %v2552 = vld [vmem:[#allocation8 + $0x164] sm:$0xf]
    %v2553 = vld [vmem:[#allocation8 + $0x168] sm:$0xff]
    %v2554 = vld [vmem:[#allocation8 + $0x170] sm:$0xf]
    %v2555 = vld [vmem:[#allocation8 + $0x174] sm:$0xff]
    %v2556 = vld [vmem:[#allocation8 + $0x17c] sm:$0xf]
    %v2557 = vld [vmem:[#allocation8 + $0x180] sm:$0xff]
    %v2558 = vld [vmem:[#allocation8 + $0x188] sm:$0xf]
    %v2559 = vld [vmem:[#allocation8 + $0x18c] sm:$0xff]
    %v2560 = vld [vmem:[#allocation8 + $0x194] sm:$0xf]
    %v2561 = vld [vmem:[#allocation8 + $0x198] sm:$0xff]
    %v2562 = vld [vmem:[#allocation8 + $0x1a0] sm:$0xf]
    %v2563 = vld [vmem:[#allocation8 + $0x1a4] sm:$0xff]
    %v2564 = vld [vmem:[#allocation8 + $0x1ac] sm:$0xf]
    %v2565 = vld [vmem:[#allocation8 + $0x1b0] sm:$0xff]
    %v2566 = vld [vmem:[#allocation8 + $0x1b8] sm:$0xf]
    %v2567 = vld [vmem:[#allocation8 + $0x1bc] sm:$0xff]
    %v2568 = vld [vmem:[#allocation8 + $0x1c4] sm:$0xf]
    %v2569 = vld [vmem:[#allocation8 + $0x1c8] sm:$0xff]
    %v2570 = vld [vmem:[#allocation8 + $0x1d0] sm:$0xf]
    %v2571 = vld [vmem:[#allocation8 + $0x1d4] sm:$0xff]
    %v2572 = vld [vmem:[#allocation8 + $0x1dc] sm:$0xf]
    %v2573 = vld [vmem:[#allocation8 + $0x1e0] sm:$0xff]
    %v2574 = vld [vmem:[#allocation8 + $0x1e8] sm:$0xf]
    %v2575 = vld [vmem:[#allocation8 + $0x1ec] sm:$0xff]
    %v2576 = vld [vmem:[#allocation8 + $0x1f4] sm:$0xf]
    %v2577 = vld [vmem:[#allocation8 + $0x1f8] sm:$0xff]
    %v2578 = vld [vmem:[#allocation8 + $0x200] sm:$0xf]
    %v2579 = vld [vmem:[#allocation8 + $0x204] sm:$0xff]
    %v2580 = vld [vmem:[#allocation8 + $0x20c] sm:$0xf]
    %v2581 = vld [vmem:[#allocation8 + $0x210] sm:$0xff]
    %v2582 = vld [vmem:[#allocation8 + $0x218] sm:$0xf]
    %v2583 = vld [vmem:[#allocation8 + $0x21c] sm:$0xff]
    %v2584 = vld [vmem:[#allocation8 + $0x224] sm:$0xf]
    %v2585 = vld [vmem:[#allocation8 + $0x228] sm:$0xff]
    %v2586 = vld [vmem:[#allocation8 + $0x230] sm:$0xf]
    %v2587 = vld [vmem:[#allocation8 + $0x234] sm:$0xff]
    %v2588 = vld [vmem:[#allocation8 + $0x23c] sm:$0xf]
    %v2589 = vld [vmem:[#allocation8 + $0x240] sm:$0xff]
    %v2590 = vld [vmem:[#allocation8 + $0x248] sm:$0xf]
    %v2591 = vld [vmem:[#allocation8 + $0x24c] sm:$0xff]
    %v2592 = vld [vmem:[#allocation8 + $0x254] sm:$0xf]
    %v2593 = vld [vmem:[#allocation8 + $0x258] sm:$0xff]
    %v2594 = vld [vmem:[#allocation8 + $0x260] sm:$0xf]
    %v2595 = vld [vmem:[#allocation8 + $0x264] sm:$0xff]
    %v2596 = vld [vmem:[#allocation8 + $0x26c] sm:$0xf]
    %v2597 = vld [vmem:[#allocation8 + $0x270] sm:$0xff]
    %v2598 = vld [vmem:[#allocation8 + $0x278] sm:$0xf]
    %v2599 = vld [vmem:[#allocation8 + $0x27c] sm:$0xff]
    %v2600 = vld [vmem:[#allocation8 + $0x284] sm:$0xf]
    %v2601 = vld [vmem:[#allocation8 + $0x288] sm:$0xff]
    %v2602 = vld [vmem:[#allocation8 + $0x290] sm:$0xf]
    %v2603 = vld [vmem:[#allocation8 + $0x294] sm:$0xff]
    %v2604 = vld [vmem:[#allocation8 + $0x29c] sm:$0xf]
    %v2605 = vld [vmem:[#allocation8 + $0x2a0] sm:$0xff]
    %v2606 = vld [vmem:[#allocation8 + $0x2a8] sm:$0xf]
    %v2607 = vld [vmem:[#allocation8 + $0x2ac] sm:$0xff]
    %v2608 = vld [vmem:[#allocation8 + $0x2b4] sm:$0xf]
    %v2609 = vld [vmem:[#allocation8 + $0x2b8] sm:$0xff]
    %v2610 = vld [vmem:[#allocation8 + $0x2c0] sm:$0xf]
    %v2611 = vld [vmem:[#allocation8 + $0x2c4] sm:$0xff]
    %v2612 = vld [vmem:[#allocation8 + $0x2cc] sm:$0xf]
    %v2613 = vld [vmem:[#allocation8 + $0x2d0] sm:$0xff]
    %v2614 = vld [vmem:[#allocation8 + $0x2d8] sm:$0xf]
    %v2615 = vld [vmem:[#allocation8 + $0x2dc] sm:$0xff]
    %v2616 = vld [vmem:[#allocation8 + $0x2e4] sm:$0xf]
    %v2617 = vld [vmem:[#allocation8 + $0x2e8] sm:$0xff]
    %v2618 = vld [vmem:[#allocation8 + $0x2f0] sm:$0xf]
    %v2619 = vld [vmem:[#allocation8 + $0x2f4] sm:$0xff]
    %v2620 = vld [vmem:[#allocation8 + $0x2fc] sm:$0xf]
    %v2621 = vld [vmem:[%s5] sm:$0x7]
    %v2623 = vlaneseq
    %v2624 = vshrl.u32 %v2623, 7
    %v2625 = vsub.s32 0, %v2624
    %v2626 = vrot.slane %v2621, %v2625
    %v2627 = vlaneseq
    %v2628 = vshrl.u32 %v2627, 7
    %v2629 = vsub.s32 1, %v2628
    %v2630 = vrot.slane %v2621, %v2629
    %v2631 = vlaneseq
    %v2632 = vshrl.u32 %v2631, 7
    %v2633 = vsub.s32 2, %v2632
    %v2634 = vrot.slane %v2621, %v2633
    %v2766 = vunpack.c.l.b16 %v2493
    %v2767 = vunpack.c.h.b16 %v2493
    %v2768 = vunpack.c.l.b16 %v2494
    %v2769 = vunpack.c.l.b16 %v2495
    %v2770 = vunpack.c.h.b16 %v2495
    %v2771 = vunpack.c.l.b16 %v2496
    %v2772 = vunpack.c.l.b16 %v2497
    %v2773 = vunpack.c.h.b16 %v2497
    %v2774 = vunpack.c.l.b16 %v2498
    %v2775 = vunpack.c.l.b16 %v2499
    %v2776 = vunpack.c.h.b16 %v2499
    %v2777 = vunpack.c.l.b16 %v2500
    %v2778 = vunpack.c.l.b16 %v2501
    %v2779 = vunpack.c.h.b16 %v2501
    %v2780 = vunpack.c.l.b16 %v2502
    %v2781 = vunpack.c.l.b16 %v2503
    %v2782 = vunpack.c.h.b16 %v2503
    %v2783 = vunpack.c.l.b16 %v2504
    %v2784 = vunpack.c.l.b16 %v2505
    %v2785 = vunpack.c.h.b16 %v2505
    %v2786 = vunpack.c.l.b16 %v2506
    %v2787 = vunpack.c.l.b16 %v2507
    %v2788 = vunpack.c.h.b16 %v2507
    %v2789 = vunpack.c.l.b16 %v2508
    %v2790 = vunpack.c.l.b16 %v2509
    %v2791 = vunpack.c.h.b16 %v2509
    %v2792 = vunpack.c.l.b16 %v2510
    %v2793 = vunpack.c.l.b16 %v2511
    %v2794 = vunpack.c.h.b16 %v2511
    %v2795 = vunpack.c.l.b16 %v2512
    %v2796 = vunpack.c.l.b16 %v2513
    %v2797 = vunpack.c.h.b16 %v2513
    %v2798 = vunpack.c.l.b16 %v2514
    %v2799 = vunpack.c.l.b16 %v2515
    %v2800 = vunpack.c.h.b16 %v2515
    %v2801 = vunpack.c.l.b16 %v2516
    %v2802 = vunpack.c.l.b16 %v2517
    %v2803 = vunpack.c.h.b16 %v2517
    %v2804 = vunpack.c.l.b16 %v2518
    %v2805 = vunpack.c.l.b16 %v2519
    %v2806 = vunpack.c.h.b16 %v2519
    %v2807 = vunpack.c.l.b16 %v2520
    %v2808 = vunpack.c.l.b16 %v2521
    %v2809 = vunpack.c.h.b16 %v2521
    %v2810 = vunpack.c.l.b16 %v2522
    %v2811 = vunpack.c.l.b16 %v2523
    %v2812 = vunpack.c.h.b16 %v2523
    %v2813 = vunpack.c.l.b16 %v2524
    %v2814 = vunpack.c.l.b16 %v2525
    %v2815 = vunpack.c.h.b16 %v2525
    %v2816 = vunpack.c.l.b16 %v2526
    %v2817 = vunpack.c.l.b16 %v2527
    %v2818 = vunpack.c.h.b16 %v2527
    %v2819 = vunpack.c.l.b16 %v2528
    %v2820 = vunpack.c.l.b16 %v2529
    %v2821 = vunpack.c.h.b16 %v2529
    %v2822 = vunpack.c.l.b16 %v2530
    %v2823 = vunpack.c.l.b16 %v2531
    %v2824 = vunpack.c.h.b16 %v2531
    %v2825 = vunpack.c.l.b16 %v2532
    %v2826 = vunpack.c.l.b16 %v2533
    %v2827 = vunpack.c.h.b16 %v2533
    %v2828 = vunpack.c.l.b16 %v2534
    %v2829 = vunpack.c.l.b16 %v2535
    %v2830 = vunpack.c.h.b16 %v2535
    %v2831 = vunpack.c.l.b16 %v2536
    %v2832 = vunpack.c.l.b16 %v2537
    %v2833 = vunpack.c.h.b16 %v2537
    %v2834 = vunpack.c.l.b16 %v2538
    %v2835 = vunpack.c.l.b16 %v2539
    %v2836 = vunpack.c.h.b16 %v2539
    %v2837 = vunpack.c.l.b16 %v2540
    %v2838 = vunpack.c.l.b16 %v2541
    %v2839 = vunpack.c.h.b16 %v2541
    %v2840 = vunpack.c.l.b16 %v2542
    %v2841 = vunpack.c.l.b16 %v2543
    %v2842 = vunpack.c.h.b16 %v2543
    %v2843 = vunpack.c.l.b16 %v2544
    %v2844 = vunpack.c.l.b16 %v2545
    %v2845 = vunpack.c.h.b16 %v2545
    %v2846 = vunpack.c.l.b16 %v2546
    %v2847 = vunpack.c.l.b16 %v2547
    %v2848 = vunpack.c.h.b16 %v2547
    %v2849 = vunpack.c.l.b16 %v2548
    %v2850 = vunpack.c.l.b16 %v2549
    %v2851 = vunpack.c.h.b16 %v2549
    %v2852 = vunpack.c.l.b16 %v2550
    %v2853 = vunpack.c.l.b16 %v2551
    %v2854 = vunpack.c.h.b16 %v2551
    %v2855 = vunpack.c.l.b16 %v2552
    %v2856 = vunpack.c.l.b16 %v2553
    %v2857 = vunpack.c.h.b16 %v2553
    %v2858 = vunpack.c.l.b16 %v2554
    %v2859 = vunpack.c.l.b16 %v2555
    %v2860 = vunpack.c.h.b16 %v2555
    %v2861 = vunpack.c.l.b16 %v2556
    %v2862 = vunpack.c.l.b16 %v2557
    %v2863 = vunpack.c.h.b16 %v2557
    %v2864 = vunpack.c.l.b16 %v2558
    %v2865 = vunpack.c.l.b16 %v2559
    %v2866 = vunpack.c.h.b16 %v2559
    %v2867 = vunpack.c.l.b16 %v2560
    %v2868 = vunpack.c.l.b16 %v2561
    %v2869 = vunpack.c.h.b16 %v2561
    %v2870 = vunpack.c.l.b16 %v2562
    %v2871 = vunpack.c.l.b16 %v2563
    %v2872 = vunpack.c.h.b16 %v2563
    %v2873 = vunpack.c.l.b16 %v2564
    %v2874 = vunpack.c.l.b16 %v2565
    %v2875 = vunpack.c.h.b16 %v2565
    %v2876 = vunpack.c.l.b16 %v2566
    %v2877 = vunpack.c.l.b16 %v2567
    %v2878 = vunpack.c.h.b16 %v2567
    %v2879 = vunpack.c.l.b16 %v2568
    %v2880 = vunpack.c.l.b16 %v2569
    %v2881 = vunpack.c.h.b16 %v2569
    %v2882 = vunpack.c.l.b16 %v2570
    %v2883 = vunpack.c.l.b16 %v2571
    %v2884 = vunpack.c.h.b16 %v2571
    %v2885 = vunpack.c.l.b16 %v2572
    %v2886 = vunpack.c.l.b16 %v2573
    %v2887 = vunpack.c.h.b16 %v2573
    %v2888 = vunpack.c.l.b16 %v2574
    %v2889 = vunpack.c.l.b16 %v2575
    %v2890 = vunpack.c.h.b16 %v2575
    %v2891 = vunpack.c.l.b16 %v2576
    %v2892 = vunpack.c.l.b16 %v2577
    %v2893 = vunpack.c.h.b16 %v2577
    %v2894 = vunpack.c.l.b16 %v2578
    %v2895 = vunpack.c.l.b16 %v2579
    %v2896 = vunpack.c.h.b16 %v2579
    %v2897 = vunpack.c.l.b16 %v2580
    %v2898 = vunpack.c.l.b16 %v2581
    %v2899 = vunpack.c.h.b16 %v2581
    %v2900 = vunpack.c.l.b16 %v2582
    %v2901 = vunpack.c.l.b16 %v2583
    %v2902 = vunpack.c.h.b16 %v2583
    %v2903 = vunpack.c.l.b16 %v2584
    %v2904 = vunpack.c.l.b16 %v2585
    %v2905 = vunpack.c.h.b16 %v2585
    %v2906 = vunpack.c.l.b16 %v2586
    %v2907 = vunpack.c.l.b16 %v2587
    %v2908 = vunpack.c.h.b16 %v2587
    %v2909 = vunpack.c.l.b16 %v2588
    %v2910 = vunpack.c.l.b16 %v2589
    %v2911 = vunpack.c.h.b16 %v2589
    %v2912 = vunpack.c.l.b16 %v2590
    %v2913 = vunpack.c.l.b16 %v2591
    %v2914 = vunpack.c.h.b16 %v2591
    %v2915 = vunpack.c.l.b16 %v2592
    %v2916 = vunpack.c.l.b16 %v2593
    %v2917 = vunpack.c.h.b16 %v2593
    %v2918 = vunpack.c.l.b16 %v2594
    %v2919 = vunpack.c.l.b16 %v2595
    %v2920 = vunpack.c.h.b16 %v2595
    %v2921 = vunpack.c.l.b16 %v2596
    %v2922 = vunpack.c.l.b16 %v2597
    %v2923 = vunpack.c.h.b16 %v2597
    %v2924 = vunpack.c.l.b16 %v2598
    %v2925 = vunpack.c.l.b16 %v2599
    %v2926 = vunpack.c.h.b16 %v2599
    %v2927 = vunpack.c.l.b16 %v2600
    %v2928 = vunpack.c.l.b16 %v2601
    %v2929 = vunpack.c.h.b16 %v2601
    %v2930 = vunpack.c.l.b16 %v2602
    %v2931 = vunpack.c.l.b16 %v2603
    %v2932 = vunpack.c.h.b16 %v2603
    %v2933 = vunpack.c.l.b16 %v2604
    %v2934 = vunpack.c.l.b16 %v2605
    %v2935 = vunpack.c.h.b16 %v2605
    %v2936 = vunpack.c.l.b16 %v2606
    %v2937 = vunpack.c.l.b16 %v2607
    %v2938 = vunpack.c.h.b16 %v2607
    %v2939 = vunpack.c.l.b16 %v2608
    %v2940 = vunpack.c.l.b16 %v2609
    %v2941 = vunpack.c.h.b16 %v2609
    %v2942 = vunpack.c.l.b16 %v2610
    %v2943 = vunpack.c.l.b16 %v2611
    %v2944 = vunpack.c.h.b16 %v2611
    %v2945 = vunpack.c.l.b16 %v2612
    %v2946 = vunpack.c.l.b16 %v2613
    %v2947 = vunpack.c.h.b16 %v2613
    %v2948 = vunpack.c.l.b16 %v2614
    %v2949 = vunpack.c.l.b16 %v2615
    %v2950 = vunpack.c.h.b16 %v2615
    %v2951 = vunpack.c.l.b16 %v2616
    %v2952 = vunpack.c.l.b16 %v2617
    %v2953 = vunpack.c.h.b16 %v2617
    %v2954 = vunpack.c.l.b16 %v2618
    %v2955 = vunpack.c.l.b16 %v2619
    %v2956 = vunpack.c.h.b16 %v2619
    %v2957 = vunpack.c.l.b16 %v2620
    %v2958 = vpack.c.b16 %v2769, %v2766
    %v2959 = vpack.c.b16 %v2770, %v2767
    %v2960 = vpack.c.b16 %v2771, %v2768
    %v2961 = vpack.c.b16 %v2775, %v2772
    %v2962 = vpack.c.b16 %v2776, %v2773
    %v2963 = vpack.c.b16 %v2777, %v2774
    %v2964 = vpack.c.b16 %v2781, %v2778
    %v2965 = vpack.c.b16 %v2782, %v2779
    %v2966 = vpack.c.b16 %v2783, %v2780
    %v2967 = vpack.c.b16 %v2787, %v2784
    %v2968 = vpack.c.b16 %v2788, %v2785
    %v2969 = vpack.c.b16 %v2789, %v2786
    %v2970 = vpack.c.b16 %v2793, %v2790
    %v2971 = vpack.c.b16 %v2794, %v2791
    %v2972 = vpack.c.b16 %v2795, %v2792
    %v2973 = vpack.c.b16 %v2799, %v2796
    %v2974 = vpack.c.b16 %v2800, %v2797
    %v2975 = vpack.c.b16 %v2801, %v2798
    %v2976 = vpack.c.b16 %v2805, %v2802
    %v2977 = vpack.c.b16 %v2806, %v2803
    %v2978 = vpack.c.b16 %v2807, %v2804
    %v2979 = vpack.c.b16 %v2811, %v2808
    %v2980 = vpack.c.b16 %v2812, %v2809
    %v2981 = vpack.c.b16 %v2813, %v2810
    %v2982 = vpack.c.b16 %v2817, %v2814
    %v2983 = vpack.c.b16 %v2818, %v2815
    %v2984 = vpack.c.b16 %v2819, %v2816
    %v2985 = vpack.c.b16 %v2823, %v2820
    %v2986 = vpack.c.b16 %v2824, %v2821
    %v2987 = vpack.c.b16 %v2825, %v2822
    %v2988 = vpack.c.b16 %v2829, %v2826
    %v2989 = vpack.c.b16 %v2830, %v2827
    %v2990 = vpack.c.b16 %v2831, %v2828
    %v2991 = vpack.c.b16 %v2835, %v2832
    %v2992 = vpack.c.b16 %v2836, %v2833
    %v2993 = vpack.c.b16 %v2837, %v2834
    %v2994 = vpack.c.b16 %v2841, %v2838
    %v2995 = vpack.c.b16 %v2842, %v2839
    %v2996 = vpack.c.b16 %v2843, %v2840
    %v2997 = vpack.c.b16 %v2847, %v2844
    %v2998 = vpack.c.b16 %v2848, %v2845
    %v2999 = vpack.c.b16 %v2849, %v2846
    %v3000 = vpack.c.b16 %v2853, %v2850
    %v3001 = vpack.c.b16 %v2854, %v2851
    %v3002 = vpack.c.b16 %v2855, %v2852
    %v3003 = vpack.c.b16 %v2859, %v2856
    %v3004 = vpack.c.b16 %v2860, %v2857
    %v3005 = vpack.c.b16 %v2861, %v2858
    %v3006 = vpack.c.b16 %v2865, %v2862
    %v3007 = vpack.c.b16 %v2866, %v2863
    %v3008 = vpack.c.b16 %v2867, %v2864
    %v3009 = vpack.c.b16 %v2871, %v2868
    %v3010 = vpack.c.b16 %v2872, %v2869
    %v3011 = vpack.c.b16 %v2873, %v2870
    %v3012 = vpack.c.b16 %v2877, %v2874
    %v3013 = vpack.c.b16 %v2878, %v2875
    %v3014 = vpack.c.b16 %v2879, %v2876
    %v3015 = vpack.c.b16 %v2883, %v2880
    %v3016 = vpack.c.b16 %v2884, %v2881
    %v3017 = vpack.c.b16 %v2885, %v2882
    %v3018 = vpack.c.b16 %v2889, %v2886
    %v3019 = vpack.c.b16 %v2890, %v2887
    %v3020 = vpack.c.b16 %v2891, %v2888
    %v3021 = vpack.c.b16 %v2895, %v2892
    %v3022 = vpack.c.b16 %v2896, %v2893
    %v3023 = vpack.c.b16 %v2897, %v2894
    %v3024 = vpack.c.b16 %v2901, %v2898
    %v3025 = vpack.c.b16 %v2902, %v2899
    %v3026 = vpack.c.b16 %v2903, %v2900
    %v3027 = vpack.c.b16 %v2907, %v2904
    %v3028 = vpack.c.b16 %v2908, %v2905
    %v3029 = vpack.c.b16 %v2909, %v2906
    %v3030 = vpack.c.b16 %v2913, %v2910
    %v3031 = vpack.c.b16 %v2914, %v2911
    %v3032 = vpack.c.b16 %v2915, %v2912
    %v3033 = vpack.c.b16 %v2919, %v2916
    %v3034 = vpack.c.b16 %v2920, %v2917
    %v3035 = vpack.c.b16 %v2921, %v2918
    %v3036 = vpack.c.b16 %v2925, %v2922
    %v3037 = vpack.c.b16 %v2926, %v2923
    %v3038 = vpack.c.b16 %v2927, %v2924
    %v3039 = vpack.c.b16 %v2931, %v2928
    %v3040 = vpack.c.b16 %v2932, %v2929
    %v3041 = vpack.c.b16 %v2933, %v2930
    %v3042 = vpack.c.b16 %v2937, %v2934
    %v3043 = vpack.c.b16 %v2938, %v2935
    %v3044 = vpack.c.b16 %v2939, %v2936
    %v3045 = vpack.c.b16 %v2943, %v2940
    %v3046 = vpack.c.b16 %v2944, %v2941
    %v3047 = vpack.c.b16 %v2945, %v2942
    %v3048 = vpack.c.b16 %v2949, %v2946
    %v3049 = vpack.c.b16 %v2950, %v2947
    %v3050 = vpack.c.b16 %v2951, %v2948
    %v3051 = vpack.c.b16 %v2955, %v2952
    %v3052 = vpack.c.b16 %v2956, %v2953
    %v3053 = vpack.c.b16 %v2957, %v2954
    %3150 = vmatprep.subr.bf16.mxu0 %v2959
    %3151 = vmatpush1.bf16.msra.mxu0 %v2958
    %3152 = vmatprep.subr.bf16.mxu0 %v2962
    %3153 = vmatpush1.bf16.msra.mxu0 %v2961
    %3154 = vmatprep.subr.bf16.mxu0 %v2965
    %3155 = vmatpush1.bf16.msra.mxu0 %v2964
    %3156 = vmatprep.subr.bf16.mxu0 %v2968
    %3157 = vmatpush1.bf16.msra.mxu0 %v2967
    %3158 = vmatprep.subr.bf16.mxu0 %v2971
    %3159 = vmatpush1.bf16.msra.mxu0 %v2970
    %3160 = vmatprep.subr.bf16.mxu0 %v2974
    %3161 = vmatpush1.bf16.msra.mxu0 %v2973
    %3162 = vmatprep.subr.bf16.mxu0 %v2977
    %3163 = vmatpush1.bf16.msra.mxu0 %v2976
    %3164 = vmatprep.subr.bf16.mxu0 %v2980
    %3165 = vmatpush1.bf16.msra.mxu0 %v2979
    %3166 = vmatprep.subr.bf16.mxu0 %v2983
    %3167 = vmatpush1.bf16.msra.mxu0 %v2982
    %3168 = vmatprep.subr.bf16.mxu0 %v2986
    %3169 = vmatpush1.bf16.msra.mxu0 %v2985
    %3170 = vmatprep.subr.bf16.mxu0 %v2989
    %3171 = vmatpush1.bf16.msra.mxu0 %v2988
    %3172 = vmatprep.subr.bf16.mxu0 %v2992
    %3173 = vmatpush1.bf16.msra.mxu0 %v2991
    %3174 = vmatprep.subr.bf16.mxu0 %v2995
    %3175 = vmatpush1.bf16.msra.mxu0 %v2994
    %3176 = vmatprep.subr.bf16.mxu0 %v2998
    %3177 = vmatpush1.bf16.msra.mxu0 %v2997
    %3178 = vmatprep.subr.bf16.mxu0 %v3001
    %3179 = vmatpush1.bf16.msra.mxu0 %v3000
    %3180 = vmatprep.subr.bf16.mxu0 %v3004
    %3181 = vmatpush1.bf16.msra.mxu0 %v3003
    %3182 = vmatprep.mubr.bf16.mxu0 %v2430
    %3183 = vmatmul.mubr.bf16.gmra.mrb[0].mxu0 %v2429
    %v3184 = vpop.f32.mrb[0].mxu0
    %v3185 = vadd.f32 %v2626, %v3184
    %v3186 = vpop.f32.mrb[0].mxu0
    %v3187 = vadd.f32 %v2630, %v3186
    %v3188 = vpop.f32.mrb[0].mxu0
    %v3189 = vadd.f32 %v2626, %v3188
    %v3190 = vpop.f32.mrb[0].mxu0
    %v3191 = vadd.f32 %v2630, %v3190
    %3192 = vmatprep.mubr.bf16.mxu0 %v2434
    %3193 = vmatmul.mubr.bf16.gmra.mrb[0].mxu0 %v2433
    %v3194 = vpop.f32.mrb[0].mxu0
    %v3195 = vadd.f32 %v2626, %v3194
    %v3196 = vpop.f32.mrb[0].mxu0
    %v3197 = vadd.f32 %v2630, %v3196
    %v3198 = vpop.f32.mrb[0].mxu0
    %v3199 = vadd.f32 %v2626, %v3198
    %v3200 = vpop.f32.mrb[0].mxu0
    %v3201 = vadd.f32 %v2630, %v3200
    %3202 = vmatprep.mubr.bf16.mxu0 %v2438
    %3203 = vmatmul.mubr.bf16.gmra.mrb[0].mxu0 %v2437
    %v3204 = vpop.f32.mrb[0].mxu0
    %v3205 = vadd.f32 %v2626, %v3204
    %v3206 = vpop.f32.mrb[0].mxu0
    %v3207 = vadd.f32 %v2630, %v3206
    %v3208 = vpop.f32.mrb[0].mxu0
    %v3209 = vadd.f32 %v2626, %v3208
    %v3210 = vpop.f32.mrb[0].mxu0
    %v3211 = vadd.f32 %v2630, %v3210
    %3212 = vmatprep.mubr.bf16.mxu0 %v2442
    %3213 = vmatmul.mubr.bf16.gmra.mrb[0].mxu0 %v2441
    %v3214 = vpop.f32.mrb[0].mxu0
    %v3215 = vadd.f32 %v2626, %v3214
    %v3216 = vpop.f32.mrb[0].mxu0
    %v3217 = vadd.f32 %v2630, %v3216
    %v3218 = vpop.f32.mrb[0].mxu0
    %v3219 = vadd.f32 %v2626, %v3218
    %v3220 = vpop.f32.mrb[0].mxu0
    %v3221 = vadd.f32 %v2630, %v3220
    %3222 = vmatprep.mubr.bf16.mxu0 %v2446
    %3223 = vmatmul.mubr.bf16.gmra.mrb[0].mxu0 %v2445
    %v3224 = vpop.f32.mrb[0].mxu0
    %v3225 = vadd.f32 %v2626, %v3224
    %v3226 = vpop.f32.mrb[0].mxu0
    %v3227 = vadd.f32 %v2630, %v3226
    %v3228 = vpop.f32.mrb[0].mxu0
    %v3229 = vadd.f32 %v2626, %v3228
    %v3230 = vpop.f32.mrb[0].mxu0
    %v3231 = vadd.f32 %v2630, %v3230
    %3232 = vmatprep.mubr.bf16.mxu0 %v2450
    %3233 = vmatmul.mubr.bf16.gmra.mrb[0].mxu0 %v2449
    %v3234 = vpop.f32.mrb[0].mxu0
    %v3235 = vadd.f32 %v2626, %v3234
    %v3236 = vpop.f32.mrb[0].mxu0
    %v3237 = vadd.f32 %v2630, %v3236
    %v3238 = vpop.f32.mrb[0].mxu0
    %v3239 = vadd.f32 %v2626, %v3238
    %v3240 = vpop.f32.mrb[0].mxu0
    %v3241 = vadd.f32 %v2630, %v3240
    %3242 = vmatprep.mubr.bf16.mxu0 %v2454
    %3243 = vmatmul.mubr.bf16.gmra.mrb[0].mxu0 %v2453
    %v3244 = vpop.f32.mrb[0].mxu0
    %v3245 = vadd.f32 %v2626, %v3244
    %v3246 = vpop.f32.mrb[0].mxu0
    %v3247 = vadd.f32 %v2630, %v3246
    %v3248 = vpop.f32.mrb[0].mxu0
    %v3249 = vadd.f32 %v2626, %v3248
    %v3250 = vpop.f32.mrb[0].mxu0
    %v3251 = vadd.f32 %v2630, %v3250
    %3252 = vmatprep.mubr.bf16.mxu0 %v2458
    %3253 = vmatmul.mubr.bf16.gmra.mrb[0].mxu0 %v2457
    %v3254 = vpop.f32.mrb[0].mxu0
    %v3255 = vadd.f32 %v2626, %v3254
    %v3256 = vpop.f32.mrb[0].mxu0
    %v3257 = vadd.f32 %v2630, %v3256
    %v3258 = vpop.f32.mrb[0].mxu0
    %v3259 = vadd.f32 %v2626, %v3258
    %v3260 = vpop.f32.mrb[0].mxu0
    %v3261 = vadd.f32 %v2630, %v3260
    %3262 = vmatprep.mubr.bf16.mxu0 %v2462
    %3263 = vmatmul.mubr.bf16.gmra.mrb[0].mxu0 %v2461
    %v3264 = vpop.f32.mrb[0].mxu0
    %v3265 = vadd.f32 %v2626, %v3264
    %v3266 = vpop.f32.mrb[0].mxu0
    %v3267 = vadd.f32 %v2630, %v3266
    %v3268 = vpop.f32.mrb[0].mxu0
    %v3269 = vadd.f32 %v2626, %v3268
    %v3270 = vpop.f32.mrb[0].mxu0
    %v3271 = vadd.f32 %v2630, %v3270
    %3272 = vmatprep.mubr.bf16.mxu0 %v2466
    %3273 = vmatmul.mubr.bf16.gmra.mrb[0].mxu0 %v2465
    %v3274 = vpop.f32.mrb[0].mxu0
    %v3275 = vadd.f32 %v2626, %v3274
    %v3276 = vpop.f32.mrb[0].mxu0
    %v3277 = vadd.f32 %v2630, %v3276
    %v3278 = vpop.f32.mrb[0].mxu0
    %v3279 = vadd.f32 %v2626, %v3278
    %v3280 = vpop.f32.mrb[0].mxu0
    %v3281 = vadd.f32 %v2630, %v3280
    %3282 = vmatprep.mubr.bf16.mxu0 %v2470
    %3283 = vmatmul.mubr.bf16.gmra.mrb[0].mxu0 %v2469
    %v3284 = vpop.f32.mrb[0].mxu0
    %v3285 = vadd.f32 %v2626, %v3284
    %v3286 = vpop.f32.mrb[0].mxu0
    %v3287 = vadd.f32 %v2630, %v3286
    %v3288 = vpop.f32.mrb[0].mxu0
    %v3289 = vadd.f32 %v2626, %v3288
    %v3290 = vpop.f32.mrb[0].mxu0
    %v3291 = vadd.f32 %v2630, %v3290
    %3292 = vmatprep.mubr.bf16.mxu0 %v2474
    %3293 = vmatmul.mubr.bf16.gmra.mrb[0].mxu0 %v2473
    %v3294 = vpop.f32.mrb[0].mxu0
    %v3295 = vadd.f32 %v2626, %v3294
    %v3296 = vpop.f32.mrb[0].mxu0
    %v3297 = vadd.f32 %v2630, %v3296
    %v3298 = vpop.f32.mrb[0].mxu0
    %v3299 = vadd.f32 %v2626, %v3298
    %v3300 = vpop.f32.mrb[0].mxu0
    %v3301 = vadd.f32 %v2630, %v3300
    %3302 = vmatprep.mubr.bf16.mxu0 %v2478
    %3303 = vmatmul.mubr.bf16.gmra.mrb[0].mxu0 %v2477
    %v3304 = vpop.f32.mrb[0].mxu0
    %v3305 = vadd.f32 %v2626, %v3304
    %v3306 = vpop.f32.mrb[0].mxu0
    %v3307 = vadd.f32 %v2630, %v3306
    %v3308 = vpop.f32.mrb[0].mxu0
    %v3309 = vadd.f32 %v2626, %v3308
    %v3310 = vpop.f32.mrb[0].mxu0
    %v3311 = vadd.f32 %v2630, %v3310
    %3312 = vmatprep.mubr.bf16.mxu0 %v2482
    %3313 = vmatmul.mubr.bf16.gmra.mrb[0].mxu0 %v2481
    %v3314 = vpop.f32.mrb[0].mxu0
    %v3315 = vadd.f32 %v2626, %v3314
    %v3316 = vpop.f32.mrb[0].mxu0
    %v3317 = vadd.f32 %v2630, %v3316
    %v3318 = vpop.f32.mrb[0].mxu0
    %v3319 = vadd.f32 %v2626, %v3318
    %v3320 = vpop.f32.mrb[0].mxu0
    %v3321 = vadd.f32 %v2630, %v3320
    %3322 = vmatprep.mubr.bf16.mxu0 %v2486
    %3323 = vmatmul.mubr.bf16.gmra.mrb[0].mxu0 %v2485
    %v3324 = vpop.f32.mrb[0].mxu0
    %v3325 = vadd.f32 %v2626, %v3324
    %v3326 = vpop.f32.mrb[0].mxu0
    %v3327 = vadd.f32 %v2630, %v3326
    %v3328 = vpop.f32.mrb[0].mxu0
    %v3329 = vadd.f32 %v2626, %v3328
    %v3330 = vpop.f32.mrb[0].mxu0
    %v3331 = vadd.f32 %v2630, %v3330
    %3332 = vmatprep.mubr.bf16.mxu0 %v2490
    %3333 = vmatmul.mubr.bf16.gmra.mrb[0].mxu0 %v2489
    %v3334 = vpop.f32.mrb[0].mxu0
    %v3335 = vadd.f32 %v2626, %v3334
    %v3336 = vpop.f32.mrb[0].mxu0
    %v3337 = vadd.f32 %v2630, %v3336
    %v3338 = vpop.f32.mrb[0].mxu0
    %v3339 = vadd.f32 %v2626, %v3338
    %v3340 = vpop.f32.mrb[0].mxu0
    %v3341 = vadd.f32 %v2630, %v3340
    %3342 = vdwg.mxu0
    %3343 = vmatprep.subr.bf16.mxu0 %v3007
    %3344 = vmatpush1.bf16.msra.mxu0 %v3006
    %3345 = vmatprep.subr.bf16.mxu0 %v3010
    %3346 = vmatpush1.bf16.msra.mxu0 %v3009
    %3347 = vmatprep.subr.bf16.mxu0 %v3013
    %3348 = vmatpush1.bf16.msra.mxu0 %v3012
    %3349 = vmatprep.subr.bf16.mxu0 %v3016
    %3350 = vmatpush1.bf16.msra.mxu0 %v3015
    %3351 = vmatprep.subr.bf16.mxu0 %v3019
    %3352 = vmatpush1.bf16.msra.mxu0 %v3018
    %3353 = vmatprep.subr.bf16.mxu0 %v3022
    %3354 = vmatpush1.bf16.msra.mxu0 %v3021
    %3355 = vmatprep.subr.bf16.mxu0 %v3025
    %3356 = vmatpush1.bf16.msra.mxu0 %v3024
    %3357 = vmatprep.subr.bf16.mxu0 %v3028
    %3358 = vmatpush1.bf16.msra.mxu0 %v3027
    %3359 = vmatprep.subr.bf16.mxu0 %v3031
    %3360 = vmatpush1.bf16.msra.mxu0 %v3030
    %3361 = vmatprep.subr.bf16.mxu0 %v3034
    %3362 = vmatpush1.bf16.msra.mxu0 %v3033
    %3363 = vmatprep.subr.bf16.mxu0 %v3037
    %3364 = vmatpush1.bf16.msra.mxu0 %v3036
    %3365 = vmatprep.subr.bf16.mxu0 %v3040
    %3366 = vmatpush1.bf16.msra.mxu0 %v3039
    %3367 = vmatprep.subr.bf16.mxu0 %v3043
    %3368 = vmatpush1.bf16.msra.mxu0 %v3042
    %3369 = vmatprep.subr.bf16.mxu0 %v3046
    %3370 = vmatpush1.bf16.msra.mxu0 %v3045
    %3371 = vmatprep.subr.bf16.mxu0 %v3049
    %3372 = vmatpush1.bf16.msra.mxu0 %v3048
    %3373 = vmatprep.subr.bf16.mxu0 %v3052
    %3374 = vmatpush1.bf16.msra.mxu0 %v3051
    %3375 = vmatprep.mubr.bf16.mxu0 %v2432
    %3376 = vmatmul.mubr.bf16.gmra.mrb[0].mxu0 %v2431
    %v3377 = vpop.f32.mrb[0].mxu0
    %v3378 = vadd.f32 %v3185, %v3377
    %v3379 = vpop.f32.mrb[0].mxu0
    %v3380 = vadd.f32 %v3187, %v3379
    %v3381 = vpop.f32.mrb[0].mxu0
    %v3382 = vadd.f32 %v3189, %v3381
    %v3383 = vpop.f32.mrb[0].mxu0
    %v3384 = vadd.f32 %v3191, %v3383
    %3385 = vmatprep.mubr.bf16.mxu0 %v2436
    %3386 = vmatmul.mubr.bf16.gmra.mrb[0].mxu0 %v2435
    %v3387 = vpop.f32.mrb[0].mxu0
    %v3388 = vadd.f32 %v3195, %v3387
    %v3389 = vpop.f32.mrb[0].mxu0
    %v3390 = vadd.f32 %v3197, %v3389
    %v3391 = vpop.f32.mrb[0].mxu0
    %v3392 = vadd.f32 %v3199, %v3391
    %v3393 = vpop.f32.mrb[0].mxu0
    %v3394 = vadd.f32 %v3201, %v3393
    %3395 = vmatprep.mubr.bf16.mxu0 %v2440
    %3396 = vmatmul.mubr.bf16.gmra.mrb[0].mxu0 %v2439
    %v3397 = vpop.f32.mrb[0].mxu0
    %v3398 = vadd.f32 %v3205, %v3397
    %v3399 = vpop.f32.mrb[0].mxu0
    %v3400 = vadd.f32 %v3207, %v3399
    %v3401 = vpop.f32.mrb[0].mxu0
    %v3402 = vadd.f32 %v3209, %v3401
    %v3403 = vpop.f32.mrb[0].mxu0
    %v3404 = vadd.f32 %v3211, %v3403
    %3405 = vmatprep.mubr.bf16.mxu0 %v2444
    %3406 = vmatmul.mubr.bf16.gmra.mrb[0].mxu0 %v2443
    %v3407 = vpop.f32.mrb[0].mxu0
    %v3408 = vadd.f32 %v3215, %v3407
    %v3409 = vpop.f32.mrb[0].mxu0
    %v3410 = vadd.f32 %v3217, %v3409
    %v3411 = vpop.f32.mrb[0].mxu0
    %v3412 = vadd.f32 %v3219, %v3411
    %v3413 = vpop.f32.mrb[0].mxu0
    %v3414 = vadd.f32 %v3221, %v3413
    %3415 = vmatprep.mubr.bf16.mxu0 %v2448
    %3416 = vmatmul.mubr.bf16.gmra.mrb[0].mxu0 %v2447
    %v3417 = vpop.f32.mrb[0].mxu0
    %v3418 = vadd.f32 %v3225, %v3417
    %v3419 = vpop.f32.mrb[0].mxu0
    %v3420 = vadd.f32 %v3227, %v3419
    %v3421 = vpop.f32.mrb[0].mxu0
    %v3422 = vadd.f32 %v3229, %v3421
    %v3423 = vpop.f32.mrb[0].mxu0
    %v3424 = vadd.f32 %v3231, %v3423
    %3425 = vmatprep.mubr.bf16.mxu0 %v2452
    %3426 = vmatmul.mubr.bf16.gmra.mrb[0].mxu0 %v2451
    %v3427 = vpop.f32.mrb[0].mxu0
    %v3428 = vadd.f32 %v3235, %v3427
    %v3429 = vpop.f32.mrb[0].mxu0
    %v3430 = vadd.f32 %v3237, %v3429
    %v3431 = vpop.f32.mrb[0].mxu0
    %v3432 = vadd.f32 %v3239, %v3431
    %v3433 = vpop.f32.mrb[0].mxu0
    %v3434 = vadd.f32 %v3241, %v3433
    %3435 = vmatprep.mubr.bf16.mxu0 %v2456
    %3436 = vmatmul.mubr.bf16.gmra.mrb[0].mxu0 %v2455
    %v3437 = vpop.f32.mrb[0].mxu0
    %v3438 = vadd.f32 %v3245, %v3437
    %v3439 = vpop.f32.mrb[0].mxu0
    %v3440 = vadd.f32 %v3247, %v3439
    %v3441 = vpop.f32.mrb[0].mxu0
    %v3442 = vadd.f32 %v3249, %v3441
    %v3443 = vpop.f32.mrb[0].mxu0
    %v3444 = vadd.f32 %v3251, %v3443
    %3445 = vmatprep.mubr.bf16.mxu0 %v2460
    %3446 = vmatmul.mubr.bf16.gmra.mrb[0].mxu0 %v2459
    %v3447 = vpop.f32.mrb[0].mxu0
    %v3448 = vadd.f32 %v3255, %v3447
    %v3449 = vpop.f32.mrb[0].mxu0
    %v3450 = vadd.f32 %v3257, %v3449
    %v3451 = vpop.f32.mrb[0].mxu0
    %v3452 = vadd.f32 %v3259, %v3451
    %v3453 = vpop.f32.mrb[0].mxu0
    %v3454 = vadd.f32 %v3261, %v3453
    %3455 = vmatprep.mubr.bf16.mxu0 %v2464
    %3456 = vmatmul.mubr.bf16.gmra.mrb[0].mxu0 %v2463
    %v3457 = vpop.f32.mrb[0].mxu0
    %v3458 = vadd.f32 %v3265, %v3457
    %v3459 = vpop.f32.mrb[0].mxu0
    %v3460 = vadd.f32 %v3267, %v3459
    %v3461 = vpop.f32.mrb[0].mxu0
    %v3462 = vadd.f32 %v3269, %v3461
    %v3463 = vpop.f32.mrb[0].mxu0
    %v3464 = vadd.f32 %v3271, %v3463
    %3465 = vmatprep.mubr.bf16.mxu0 %v2468
    %3466 = vmatmul.mubr.bf16.gmra.mrb[0].mxu0 %v2467
    %v3467 = vpop.f32.mrb[0].mxu0
    %v3468 = vadd.f32 %v3275, %v3467
    %v3469 = vpop.f32.mrb[0].mxu0
    %v3470 = vadd.f32 %v3277, %v3469
    %v3471 = vpop.f32.mrb[0].mxu0
    %v3472 = vadd.f32 %v3279, %v3471
    %v3473 = vpop.f32.mrb[0].mxu0
    %v3474 = vadd.f32 %v3281, %v3473
    %3475 = vmatprep.mubr.bf16.mxu0 %v2472
    %3476 = vmatmul.mubr.bf16.gmra.mrb[0].mxu0 %v2471
    %v3477 = vpop.f32.mrb[0].mxu0
    %v3478 = vadd.f32 %v3285, %v3477
    %v3479 = vpop.f32.mrb[0].mxu0
    %v3480 = vadd.f32 %v3287, %v3479
    %v3481 = vpop.f32.mrb[0].mxu0
    %v3482 = vadd.f32 %v3289, %v3481
    %v3483 = vpop.f32.mrb[0].mxu0
    %v3484 = vadd.f32 %v3291, %v3483
    %3485 = vmatprep.mubr.bf16.mxu0 %v2476
    %3486 = vmatmul.mubr.bf16.gmra.mrb[0].mxu0 %v2475
    %v3487 = vpop.f32.mrb[0].mxu0
    %v3488 = vadd.f32 %v3295, %v3487
    %v3489 = vpop.f32.mrb[0].mxu0
    %v3490 = vadd.f32 %v3297, %v3489
    %v3491 = vpop.f32.mrb[0].mxu0
    %v3492 = vadd.f32 %v3299, %v3491
    %v3493 = vpop.f32.mrb[0].mxu0
    %v3494 = vadd.f32 %v3301, %v3493
    %3495 = vmatprep.mubr.bf16.mxu0 %v2480
    %3496 = vmatmul.mubr.bf16.gmra.mrb[0].mxu0 %v2479
    %v3497 = vpop.f32.mrb[0].mxu0
    %v3498 = vadd.f32 %v3305, %v3497
    %v3499 = vpop.f32.mrb[0].mxu0
    %v3500 = vadd.f32 %v3307, %v3499
    %v3501 = vpop.f32.mrb[0].mxu0
    %v3502 = vadd.f32 %v3309, %v3501
    %v3503 = vpop.f32.mrb[0].mxu0
    %v3504 = vadd.f32 %v3311, %v3503
    %3505 = vmatprep.mubr.bf16.mxu0 %v2484
    %3506 = vmatmul.mubr.bf16.gmra.mrb[0].mxu0 %v2483
    %v3507 = vpop.f32.mrb[0].mxu0
    %v3508 = vadd.f32 %v3315, %v3507
    %v3509 = vpop.f32.mrb[0].mxu0
    %v3510 = vadd.f32 %v3317, %v3509
    %v3511 = vpop.f32.mrb[0].mxu0
    %v3512 = vadd.f32 %v3319, %v3511
    %v3513 = vpop.f32.mrb[0].mxu0
    %v3514 = vadd.f32 %v3321, %v3513
    %3515 = vmatprep.mubr.bf16.mxu0 %v2488
    %3516 = vmatmul.mubr.bf16.gmra.mrb[0].mxu0 %v2487
    %v3517 = vpop.f32.mrb[0].mxu0
    %v3518 = vadd.f32 %v3325, %v3517
    %v3519 = vpop.f32.mrb[0].mxu0
    %v3520 = vadd.f32 %v3327, %v3519
    %v3521 = vpop.f32.mrb[0].mxu0
    %v3522 = vadd.f32 %v3329, %v3521
    %v3523 = vpop.f32.mrb[0].mxu0
    %v3524 = vadd.f32 %v3331, %v3523
    %3525 = vmatprep.mubr.bf16.mxu0 %v2492
    %3526 = vmatmul.mubr.bf16.gmra.mrb[0].mxu0 %v2491
    %v3527 = vpop.f32.mrb[0].mxu0
    %v3528 = vadd.f32 %v3335, %v3527
    %v3529 = vpop.f32.mrb[0].mxu0
    %v3530 = vadd.f32 %v3337, %v3529
    %v3531 = vpop.f32.mrb[0].mxu0
    %v3532 = vadd.f32 %v3339, %v3531
    %v3533 = vpop.f32.mrb[0].mxu0
    %v3534 = vadd.f32 %v3341, %v3533
    %3535 = vdwg.mxu0
    %3536 = vmatprep.subr.bf16.mxu0 0
    %3537 = vmatpush1.bf16.msra.mxu0 %v2960
    %3538 = vmatprep.subr.bf16.mxu0 0
    %3539 = vmatpush1.bf16.msra.mxu0 %v2963
    %3540 = vmatprep.subr.bf16.mxu0 0
    %3541 = vmatpush1.bf16.msra.mxu0 %v2966
    %3542 = vmatprep.subr.bf16.mxu0 0
    %3543 = vmatpush1.bf16.msra.mxu0 %v2969
    %3544 = vmatprep.subr.bf16.mxu0 0
    %3545 = vmatpush1.bf16.msra.mxu0 %v2972
    %3546 = vmatprep.subr.bf16.mxu0 0
    %3547 = vmatpush1.bf16.msra.mxu0 %v2975
    %3548 = vmatprep.subr.bf16.mxu0 0
    %3549 = vmatpush1.bf16.msra.mxu0 %v2978
    %3550 = vmatprep.subr.bf16.mxu0 0
    %3551 = vmatpush1.bf16.msra.mxu0 %v2981
    %3552 = vmatprep.subr.bf16.mxu0 0
    %3553 = vmatpush1.bf16.msra.mxu0 %v2984
    %3554 = vmatprep.subr.bf16.mxu0 0
    %3555 = vmatpush1.bf16.msra.mxu0 %v2987
    %3556 = vmatprep.subr.bf16.mxu0 0
    %3557 = vmatpush1.bf16.msra.mxu0 %v2990
    %3558 = vmatprep.subr.bf16.mxu0 0
    %3559 = vmatpush1.bf16.msra.mxu0 %v2993
    %3560 = vmatprep.subr.bf16.mxu0 0
    %3561 = vmatpush1.bf16.msra.mxu0 %v2996
    %3562 = vmatprep.subr.bf16.mxu0 0
    %3563 = vmatpush1.bf16.msra.mxu0 %v2999
    %3564 = vmatprep.subr.bf16.mxu0 0
    %3565 = vmatpush1.bf16.msra.mxu0 %v3002
    %3566 = vmatprep.subr.bf16.mxu0 0
    %3567 = vmatpush1.bf16.msra.mxu0 %v3005
    %3568 = vmatprep.mubr.bf16.mxu0 %v2430
    %3569 = vmatmul.mubr.bf16.gmra.mrb[0].mxu0 %v2429
    %v3570 = vpop.f32.mrb[0].mxu0
    %v3571 = vadd.f32 %v2634, %v3570
    %v3572 = vpop.f32.mrb[0].mxu0
    %v3573 = vpop.f32.mrb[0].mxu0
    %v3574 = vadd.f32 %v2634, %v3573
    %v3575 = vpop.f32.mrb[0].mxu0
    %3576 = vmatprep.mubr.bf16.mxu0 %v2434
    %3577 = vmatmul.mubr.bf16.gmra.mrb[0].mxu0 %v2433
    %v3578 = vpop.f32.mrb[0].mxu0
    %v3579 = vadd.f32 %v2634, %v3578
    %v3580 = vpop.f32.mrb[0].mxu0
    %v3581 = vpop.f32.mrb[0].mxu0
    %v3582 = vadd.f32 %v2634, %v3581
    %v3583 = vpop.f32.mrb[0].mxu0
    %3584 = vmatprep.mubr.bf16.mxu0 %v2438
    %3585 = vmatmul.mubr.bf16.gmra.mrb[0].mxu0 %v2437
    %v3586 = vpop.f32.mrb[0].mxu0
    %v3587 = vadd.f32 %v2634, %v3586
    %v3588 = vpop.f32.mrb[0].mxu0
    %v3589 = vpop.f32.mrb[0].mxu0
    %v3590 = vadd.f32 %v2634, %v3589
    %v3591 = vpop.f32.mrb[0].mxu0
    %3592 = vmatprep.mubr.bf16.mxu0 %v2442
    %3593 = vmatmul.mubr.bf16.gmra.mrb[0].mxu0 %v2441
    %v3594 = vpop.f32.mrb[0].mxu0
    %v3595 = vadd.f32 %v2634, %v3594
    %v3596 = vpop.f32.mrb[0].mxu0
    %v3597 = vpop.f32.mrb[0].mxu0
    %v3598 = vadd.f32 %v2634, %v3597
    %v3599 = vpop.f32.mrb[0].mxu0
    %3600 = vmatprep.mubr.bf16.mxu0 %v2446
    %3601 = vmatmul.mubr.bf16.gmra.mrb[0].mxu0 %v2445
    %v3602 = vpop.f32.mrb[0].mxu0
    %v3603 = vadd.f32 %v2634, %v3602
    %v3604 = vpop.f32.mrb[0].mxu0
    %v3605 = vpop.f32.mrb[0].mxu0
    %v3606 = vadd.f32 %v2634, %v3605
    %v3607 = vpop.f32.mrb[0].mxu0
    %3608 = vmatprep.mubr.bf16.mxu0 %v2450
    %3609 = vmatmul.mubr.bf16.gmra.mrb[0].mxu0 %v2449
    %v3610 = vpop.f32.mrb[0].mxu0
    %v3611 = vadd.f32 %v2634, %v3610
    %v3612 = vpop.f32.mrb[0].mxu0
    %v3613 = vpop.f32.mrb[0].mxu0
    %v3614 = vadd.f32 %v2634, %v3613
    %v3615 = vpop.f32.mrb[0].mxu0
    %3616 = vmatprep.mubr.bf16.mxu0 %v2454
    %3617 = vmatmul.mubr.bf16.gmra.mrb[0].mxu0 %v2453
    %v3618 = vpop.f32.mrb[0].mxu0
    %v3619 = vadd.f32 %v2634, %v3618
    %v3620 = vpop.f32.mrb[0].mxu0
    %v3621 = vpop.f32.mrb[0].mxu0
    %v3622 = vadd.f32 %v2634, %v3621
    %v3623 = vpop.f32.mrb[0].mxu0
    %3624 = vmatprep.mubr.bf16.mxu0 %v2458
    %3625 = vmatmul.mubr.bf16.gmra.mrb[0].mxu0 %v2457
    %v3626 = vpop.f32.mrb[0].mxu0
    %v3627 = vadd.f32 %v2634, %v3626
    %v3628 = vpop.f32.mrb[0].mxu0
    %v3629 = vpop.f32.mrb[0].mxu0
    %v3630 = vadd.f32 %v2634, %v3629
    %v3631 = vpop.f32.mrb[0].mxu0
    %3632 = vmatprep.mubr.bf16.mxu0 %v2462
    %3633 = vmatmul.mubr.bf16.gmra.mrb[0].mxu0 %v2461
    %v3634 = vpop.f32.mrb[0].mxu0
    %v3635 = vadd.f32 %v2634, %v3634
    %v3636 = vpop.f32.mrb[0].mxu0
    %v3637 = vpop.f32.mrb[0].mxu0
    %v3638 = vadd.f32 %v2634, %v3637
    %v3639 = vpop.f32.mrb[0].mxu0
    %3640 = vmatprep.mubr.bf16.mxu0 %v2466
    %3641 = vmatmul.mubr.bf16.gmra.mrb[0].mxu0 %v2465
    %v3642 = vpop.f32.mrb[0].mxu0
    %v3643 = vadd.f32 %v2634, %v3642
    %v3644 = vpop.f32.mrb[0].mxu0
    %v3645 = vpop.f32.mrb[0].mxu0
    %v3646 = vadd.f32 %v2634, %v3645
    %v3647 = vpop.f32.mrb[0].mxu0
    %3648 = vmatprep.mubr.bf16.mxu0 %v2470
    %3649 = vmatmul.mubr.bf16.gmra.mrb[0].mxu0 %v2469
    %v3650 = vpop.f32.mrb[0].mxu0
    %v3651 = vadd.f32 %v2634, %v3650
    %v3652 = vpop.f32.mrb[0].mxu0
    %v3653 = vpop.f32.mrb[0].mxu0
    %v3654 = vadd.f32 %v2634, %v3653
    %v3655 = vpop.f32.mrb[0].mxu0
    %3656 = vmatprep.mubr.bf16.mxu0 %v2474
    %3657 = vmatmul.mubr.bf16.gmra.mrb[0].mxu0 %v2473
    %v3658 = vpop.f32.mrb[0].mxu0
    %v3659 = vadd.f32 %v2634, %v3658
    %v3660 = vpop.f32.mrb[0].mxu0
    %v3661 = vpop.f32.mrb[0].mxu0
    %v3662 = vadd.f32 %v2634, %v3661
    %v3663 = vpop.f32.mrb[0].mxu0
    %3664 = vmatprep.mubr.bf16.mxu0 %v2478
    %3665 = vmatmul.mubr.bf16.gmra.mrb[0].mxu0 %v2477
    %v3666 = vpop.f32.mrb[0].mxu0
    %v3667 = vadd.f32 %v2634, %v3666
    %v3668 = vpop.f32.mrb[0].mxu0
    %v3669 = vpop.f32.mrb[0].mxu0
    %v3670 = vadd.f32 %v2634, %v3669
    %v3671 = vpop.f32.mrb[0].mxu0
    %3672 = vmatprep.mubr.bf16.mxu0 %v2482
    %3673 = vmatmul.mubr.bf16.gmra.mrb[0].mxu0 %v2481
    %v3674 = vpop.f32.mrb[0].mxu0
    %v3675 = vadd.f32 %v2634, %v3674
    %v3676 = vpop.f32.mrb[0].mxu0
    %v3677 = vpop.f32.mrb[0].mxu0
    %v3678 = vadd.f32 %v2634, %v3677
    %v3679 = vpop.f32.mrb[0].mxu0
    %3680 = vmatprep.mubr.bf16.mxu0 %v2486
    %3681 = vmatmul.mubr.bf16.gmra.mrb[0].mxu0 %v2485
    %v3682 = vpop.f32.mrb[0].mxu0
    %v3683 = vadd.f32 %v2634, %v3682
    %v3684 = vpop.f32.mrb[0].mxu0
    %v3685 = vpop.f32.mrb[0].mxu0
    %v3686 = vadd.f32 %v2634, %v3685
    %v3687 = vpop.f32.mrb[0].mxu0
    %3688 = vmatprep.mubr.bf16.mxu0 %v2490
    %3689 = vmatmul.mubr.bf16.gmra.mrb[0].mxu0 %v2489
    %v3690 = vpop.f32.mrb[0].mxu0
    %v3691 = vadd.f32 %v2634, %v3690
    %v3692 = vpop.f32.mrb[0].mxu0
    %v3693 = vpop.f32.mrb[0].mxu0
    %v3694 = vadd.f32 %v2634, %v3693
    %v3695 = vpop.f32.mrb[0].mxu0
    %3696 = vdwg.mxu0
    %3697 = vmatprep.subr.bf16.mxu0 0
    %3698 = vmatpush1.bf16.msra.mxu0 %v3008
    %3699 = vmatprep.subr.bf16.mxu0 0
    %3700 = vmatpush1.bf16.msra.mxu0 %v3011
    %3701 = vmatprep.subr.bf16.mxu0 0
    %3702 = vmatpush1.bf16.msra.mxu0 %v3014
    %3703 = vmatprep.subr.bf16.mxu0 0
    %3704 = vmatpush1.bf16.msra.mxu0 %v3017
    %3705 = vmatprep.subr.bf16.mxu0 0
    %3706 = vmatpush1.bf16.msra.mxu0 %v3020
    %3707 = vmatprep.subr.bf16.mxu0 0
    %3708 = vmatpush1.bf16.msra.mxu0 %v3023
    %3709 = vmatprep.subr.bf16.mxu0 0
    %3710 = vmatpush1.bf16.msra.mxu0 %v3026
    %3711 = vmatprep.subr.bf16.mxu0 0
    %3712 = vmatpush1.bf16.msra.mxu0 %v3029
    %3713 = vmatprep.subr.bf16.mxu0 0
    %3714 = vmatpush1.bf16.msra.mxu0 %v3032
    %3715 = vmatprep.subr.bf16.mxu0 0
    %3716 = vmatpush1.bf16.msra.mxu0 %v3035
    %3717 = vmatprep.subr.bf16.mxu0 0
    %3718 = vmatpush1.bf16.msra.mxu0 %v3038
    %3719 = vmatprep.subr.bf16.mxu0 0
    %3720 = vmatpush1.bf16.msra.mxu0 %v3041
    %3721 = vmatprep.subr.bf16.mxu0 0
    %3722 = vmatpush1.bf16.msra.mxu0 %v3044
    %3723 = vmatprep.subr.bf16.mxu0 0
    %3724 = vmatpush1.bf16.msra.mxu0 %v3047
    %3725 = vmatprep.subr.bf16.mxu0 0
    %3726 = vmatpush1.bf16.msra.mxu0 %v3050
    %3727 = vmatprep.subr.bf16.mxu0 0
    %3728 = vmatpush1.bf16.msra.mxu0 %v3053
    %3729 = vmatprep.mubr.bf16.mxu0 %v2432
    %3730 = vmatmul.mubr.bf16.gmra.mrb[0].mxu0 %v2431
    %v3731 = vpop.f32.mrb[0].mxu0
    %v3732 = vadd.f32 %v3571, %v3731
    %v3733 = vpop.f32.mrb[0].mxu0
    %v3734 = vpop.f32.mrb[0].mxu0
    %v3735 = vadd.f32 %v3574, %v3734
    %v3736 = vpop.f32.mrb[0].mxu0
    %3737 = vmatprep.mubr.bf16.mxu0 %v2436
    %3738 = vmatmul.mubr.bf16.gmra.mrb[0].mxu0 %v2435
    %v3739 = vpop.f32.mrb[0].mxu0
    %v3740 = vadd.f32 %v3579, %v3739
    %v3741 = vpop.f32.mrb[0].mxu0
    %v3742 = vpop.f32.mrb[0].mxu0
    %v3743 = vadd.f32 %v3582, %v3742
    %v3744 = vpop.f32.mrb[0].mxu0
    %3745 = vmatprep.mubr.bf16.mxu0 %v2440
    %3746 = vmatmul.mubr.bf16.gmra.mrb[0].mxu0 %v2439
    %v3747 = vpop.f32.mrb[0].mxu0
    %v3748 = vadd.f32 %v3587, %v3747
    %v3749 = vpop.f32.mrb[0].mxu0
    %v3750 = vpop.f32.mrb[0].mxu0
    %v3751 = vadd.f32 %v3590, %v3750
    %v3752 = vpop.f32.mrb[0].mxu0
    %3753 = vmatprep.mubr.bf16.mxu0 %v2444
    %3754 = vmatmul.mubr.bf16.gmra.mrb[0].mxu0 %v2443
    %v3755 = vpop.f32.mrb[0].mxu0
    %v3756 = vadd.f32 %v3595, %v3755
    %v3757 = vpop.f32.mrb[0].mxu0
    %v3758 = vpop.f32.mrb[0].mxu0
    %v3759 = vadd.f32 %v3598, %v3758
    %v3760 = vpop.f32.mrb[0].mxu0
    %3761 = vmatprep.mubr.bf16.mxu0 %v2448
    %3762 = vmatmul.mubr.bf16.gmra.mrb[0].mxu0 %v2447
    %v3763 = vpop.f32.mrb[0].mxu0
    %v3764 = vadd.f32 %v3603, %v3763
    %v3765 = vpop.f32.mrb[0].mxu0
    %v3766 = vpop.f32.mrb[0].mxu0
    %v3767 = vadd.f32 %v3606, %v3766
    %v3768 = vpop.f32.mrb[0].mxu0
    %3769 = vmatprep.mubr.bf16.mxu0 %v2452
    %3770 = vmatmul.mubr.bf16.gmra.mrb[0].mxu0 %v2451
    %v3771 = vpop.f32.mrb[0].mxu0
    %v3772 = vadd.f32 %v3611, %v3771
    %v3773 = vpop.f32.mrb[0].mxu0
    %v3774 = vpop.f32.mrb[0].mxu0
    %v3775 = vadd.f32 %v3614, %v3774
    %v3776 = vpop.f32.mrb[0].mxu0
    %3777 = vmatprep.mubr.bf16.mxu0 %v2456
    %3778 = vmatmul.mubr.bf16.gmra.mrb[0].mxu0 %v2455
    %v3779 = vpop.f32.mrb[0].mxu0
    %v3780 = vadd.f32 %v3619, %v3779
    %v3781 = vpop.f32.mrb[0].mxu0
    %v3782 = vpop.f32.mrb[0].mxu0
    %v3783 = vadd.f32 %v3622, %v3782
    %v3784 = vpop.f32.mrb[0].mxu0
    %3785 = vmatprep.mubr.bf16.mxu0 %v2460
    %3786 = vmatmul.mubr.bf16.gmra.mrb[0].mxu0 %v2459
    %v3787 = vpop.f32.mrb[0].mxu0
    %v3788 = vadd.f32 %v3627, %v3787
    %v3789 = vpop.f32.mrb[0].mxu0
    %v3790 = vpop.f32.mrb[0].mxu0
    %v3791 = vadd.f32 %v3630, %v3790
    %v3792 = vpop.f32.mrb[0].mxu0
    %3793 = vmatprep.mubr.bf16.mxu0 %v2464
    %3794 = vmatmul.mubr.bf16.gmra.mrb[0].mxu0 %v2463
    %v3795 = vpop.f32.mrb[0].mxu0
    %v3796 = vadd.f32 %v3635, %v3795
    %v3797 = vpop.f32.mrb[0].mxu0
    %v3798 = vpop.f32.mrb[0].mxu0
    %v3799 = vadd.f32 %v3638, %v3798
    %v3800 = vpop.f32.mrb[0].mxu0
    %3801 = vmatprep.mubr.bf16.mxu0 %v2468
    %3802 = vmatmul.mubr.bf16.gmra.mrb[0].mxu0 %v2467
    %v3803 = vpop.f32.mrb[0].mxu0
    %v3804 = vadd.f32 %v3643, %v3803
    %v3805 = vpop.f32.mrb[0].mxu0
    %v3806 = vpop.f32.mrb[0].mxu0
    %v3807 = vadd.f32 %v3646, %v3806
    %v3808 = vpop.f32.mrb[0].mxu0
    %3809 = vmatprep.mubr.bf16.mxu0 %v2472
    %3810 = vmatmul.mubr.bf16.gmra.mrb[0].mxu0 %v2471
    %v3811 = vpop.f32.mrb[0].mxu0
    %v3812 = vadd.f32 %v3651, %v3811
    %v3813 = vpop.f32.mrb[0].mxu0
    %v3814 = vpop.f32.mrb[0].mxu0
    %v3815 = vadd.f32 %v3654, %v3814
    %v3816 = vpop.f32.mrb[0].mxu0
    %3817 = vmatprep.mubr.bf16.mxu0 %v2476
    %3818 = vmatmul.mubr.bf16.gmra.mrb[0].mxu0 %v2475
    %v3819 = vpop.f32.mrb[0].mxu0
    %v3820 = vadd.f32 %v3659, %v3819
    %v3821 = vpop.f32.mrb[0].mxu0
    %v3822 = vpop.f32.mrb[0].mxu0
    %v3823 = vadd.f32 %v3662, %v3822
    %v3824 = vpop.f32.mrb[0].mxu0
    %3825 = vmatprep.mubr.bf16.mxu0 %v2480
    %3826 = vmatmul.mubr.bf16.gmra.mrb[0].mxu0 %v2479
    %v3827 = vpop.f32.mrb[0].mxu0
    %v3828 = vadd.f32 %v3667, %v3827
    %v3829 = vpop.f32.mrb[0].mxu0
    %v3830 = vpop.f32.mrb[0].mxu0
    %v3831 = vadd.f32 %v3670, %v3830
    %v3832 = vpop.f32.mrb[0].mxu0
    %3833 = vmatprep.mubr.bf16.mxu0 %v2484
    %3834 = vmatmul.mubr.bf16.gmra.mrb[0].mxu0 %v2483
    %v3835 = vpop.f32.mrb[0].mxu0
    %v3836 = vadd.f32 %v3675, %v3835
    %v3837 = vpop.f32.mrb[0].mxu0
    %v3838 = vpop.f32.mrb[0].mxu0
    %v3839 = vadd.f32 %v3678, %v3838
    %v3840 = vpop.f32.mrb[0].mxu0
    %3841 = vmatprep.mubr.bf16.mxu0 %v2488
    %3842 = vmatmul.mubr.bf16.gmra.mrb[0].mxu0 %v2487
    %v3843 = vpop.f32.mrb[0].mxu0
    %v3844 = vadd.f32 %v3683, %v3843
    %v3845 = vpop.f32.mrb[0].mxu0
    %v3846 = vpop.f32.mrb[0].mxu0
    %v3847 = vadd.f32 %v3686, %v3846
    %v3848 = vpop.f32.mrb[0].mxu0
    %3849 = vmatprep.mubr.bf16.mxu0 %v2492
    %3850 = vmatmul.mubr.bf16.gmra.mrb[0].mxu0 %v2491
    %v3851 = vpop.f32.mrb[0].mxu0
    %v3852 = vadd.f32 %v3691, %v3851
    %v3853 = vpop.f32.mrb[0].mxu0
    %v3854 = vpop.f32.mrb[0].mxu0
    %v3855 = vadd.f32 %v3694, %v3854
    %v3856 = vpop.f32.mrb[0].mxu0
    %3857 = vdwg.mxu0
    %v3858 = vmul.f32 %v3378, 0.5
    %v3859 = vmul.f32 %v3380, 0.5
    %v3860 = vmul.f32 %v3732, 0.5
    %v3861 = vmul.f32 %v3382, 0.5
    %v3862 = vmul.f32 %v3384, 0.5
    %v3863 = vmul.f32 %v3735, 0.5
    %v3864 = vmul.f32 %v3388, 0.5
    %v3865 = vmul.f32 %v3390, 0.5
    %v3866 = vmul.f32 %v3740, 0.5
    %v3867 = vmul.f32 %v3392, 0.5
    %v3868 = vmul.f32 %v3394, 0.5
    %v3869 = vmul.f32 %v3743, 0.5
    %v3870 = vmul.f32 %v3398, 0.5
    %v3871 = vmul.f32 %v3400, 0.5
    %v3872 = vmul.f32 %v3748, 0.5
    %v3873 = vmul.f32 %v3402, 0.5
    %v3874 = vmul.f32 %v3404, 0.5
    %v3875 = vmul.f32 %v3751, 0.5
    %v3876 = vmul.f32 %v3408, 0.5
    %v3877 = vmul.f32 %v3410, 0.5
    %v3878 = vmul.f32 %v3756, 0.5
    %v3879 = vmul.f32 %v3412, 0.5
    %v3880 = vmul.f32 %v3414, 0.5
    %v3881 = vmul.f32 %v3759, 0.5
    %v3882 = vmul.f32 %v3418, 0.5
    %v3883 = vmul.f32 %v3420, 0.5
    %v3884 = vmul.f32 %v3764, 0.5
    %v3885 = vmul.f32 %v3422, 0.5
    %v3886 = vmul.f32 %v3424, 0.5
    %v3887 = vmul.f32 %v3767, 0.5
    %v3888 = vmul.f32 %v3428, 0.5
    %v3889 = vmul.f32 %v3430, 0.5
    %v3890 = vmul.f32 %v3772, 0.5
    %v3891 = vmul.f32 %v3432, 0.5
    %v3892 = vmul.f32 %v3434, 0.5
    %v3893 = vmul.f32 %v3775, 0.5
    %v3894 = vmul.f32 %v3438, 0.5
    %v3895 = vmul.f32 %v3440, 0.5
    %v3896 = vmul.f32 %v3780, 0.5
    %v3897 = vmul.f32 %v3442, 0.5
    %v3898 = vmul.f32 %v3444, 0.5
    %v3899 = vmul.f32 %v3783, 0.5
    %v3900 = vmul.f32 %v3448, 0.5
    %v3901 = vmul.f32 %v3450, 0.5
    %v3902 = vmul.f32 %v3788, 0.5
    %v3903 = vmul.f32 %v3452, 0.5
    %v3904 = vmul.f32 %v3454, 0.5
    %v3905 = vmul.f32 %v3791, 0.5
    %v3906 = vmul.f32 %v3458, 0.5
    %v3907 = vmul.f32 %v3460, 0.5
    %v3908 = vmul.f32 %v3796, 0.5
    %v3909 = vmul.f32 %v3462, 0.5
    %v3910 = vmul.f32 %v3464, 0.5
    %v3911 = vmul.f32 %v3799, 0.5
    %v3912 = vmul.f32 %v3468, 0.5
    %v3913 = vmul.f32 %v3470, 0.5
    %v3914 = vmul.f32 %v3804, 0.5
    %v3915 = vmul.f32 %v3472, 0.5
    %v3916 = vmul.f32 %v3474, 0.5
    %v3917 = vmul.f32 %v3807, 0.5
    %v3918 = vmul.f32 %v3478, 0.5
    %v3919 = vmul.f32 %v3480, 0.5
    %v3920 = vmul.f32 %v3812, 0.5
    %v3921 = vmul.f32 %v3482, 0.5
    %v3922 = vmul.f32 %v3484, 0.5
    %v3923 = vmul.f32 %v3815, 0.5
    %v3924 = vmul.f32 %v3488, 0.5
    %v3925 = vmul.f32 %v3490, 0.5
    %v3926 = vmul.f32 %v3820, 0.5
    %v3927 = vmul.f32 %v3492, 0.5
    %v3928 = vmul.f32 %v3494, 0.5
    %v3929 = vmul.f32 %v3823, 0.5
    %v3930 = vmul.f32 %v3498, 0.5
    %v3931 = vmul.f32 %v3500, 0.5
    %v3932 = vmul.f32 %v3828, 0.5
    %v3933 = vmul.f32 %v3502, 0.5
    %v3934 = vmul.f32 %v3504, 0.5
    %v3935 = vmul.f32 %v3831, 0.5
    %v3936 = vmul.f32 %v3508, 0.5
    %v3937 = vmul.f32 %v3510, 0.5
    %v3938 = vmul.f32 %v3836, 0.5
    %v3939 = vmul.f32 %v3512, 0.5
    %v3940 = vmul.f32 %v3514, 0.5
    %v3941 = vmul.f32 %v3839, 0.5
    %v3942 = vmul.f32 %v3518, 0.5
    %v3943 = vmul.f32 %v3520, 0.5
    %v3944 = vmul.f32 %v3844, 0.5
    %v3945 = vmul.f32 %v3522, 0.5
    %v3946 = vmul.f32 %v3524, 0.5
    %v3947 = vmul.f32 %v3847, 0.5
    %v3948 = vmul.f32 %v3528, 0.5
    %v3949 = vmul.f32 %v3530, 0.5
    %v3950 = vmul.f32 %v3852, 0.5
    %v3951 = vmul.f32 %v3532, 0.5
    %v3952 = vmul.f32 %v3534, 0.5
    %v3953 = vmul.f32 %v3855, 0.5
    %v3954 = vmul.f32 %v3378, 0.70710677
    %v3955 = vmul.f32 %v3380, 0.70710677
    %v3956 = vmul.f32 %v3732, 0.70710677
    %v3957 = vmul.f32 %v3382, 0.70710677
    %v3958 = vmul.f32 %v3384, 0.70710677
    %v3959 = vmul.f32 %v3735, 0.70710677
    %v3960 = vmul.f32 %v3388, 0.70710677
    %v3961 = vmul.f32 %v3390, 0.70710677
    %v3962 = vmul.f32 %v3740, 0.70710677
    %v3963 = vmul.f32 %v3392, 0.70710677
    %v3964 = vmul.f32 %v3394, 0.70710677
    %v3965 = vmul.f32 %v3743, 0.70710677
    %v3966 = vmul.f32 %v3398, 0.70710677
    %v3967 = vmul.f32 %v3400, 0.70710677
    %v3968 = vmul.f32 %v3748, 0.70710677
    %v3969 = vmul.f32 %v3402, 0.70710677
    %v3970 = vmul.f32 %v3404, 0.70710677
    %v3971 = vmul.f32 %v3751, 0.70710677
    %v3972 = vmul.f32 %v3408, 0.70710677
    %v3973 = vmul.f32 %v3410, 0.70710677
    %v3974 = vmul.f32 %v3756, 0.70710677
    %v3975 = vmul.f32 %v3412, 0.70710677
    %v3976 = vmul.f32 %v3414, 0.70710677
    %v3977 = vmul.f32 %v3759, 0.70710677
    %v3978 = vmul.f32 %v3418, 0.70710677
    %v3979 = vmul.f32 %v3420, 0.70710677
    %v3980 = vmul.f32 %v3764, 0.70710677
    %v3981 = vmul.f32 %v3422, 0.70710677
    %v3982 = vmul.f32 %v3424, 0.70710677
    %v3983 = vmul.f32 %v3767, 0.70710677
    %v3984 = vmul.f32 %v3428, 0.70710677
    %v3985 = vmul.f32 %v3430, 0.70710677
    %v3986 = vmul.f32 %v3772, 0.70710677
    %v3987 = vmul.f32 %v3432, 0.70710677
    %v3988 = vmul.f32 %v3434, 0.70710677
    %v3989 = vmul.f32 %v3775, 0.70710677
    %v3990 = vmul.f32 %v3438, 0.70710677
    %v3991 = vmul.f32 %v3440, 0.70710677
    %v3992 = vmul.f32 %v3780, 0.70710677
    %v3993 = vmul.f32 %v3442, 0.70710677
    %v3994 = vmul.f32 %v3444, 0.70710677
    %v3995 = vmul.f32 %v3783, 0.70710677
    %v3996 = vmul.f32 %v3448, 0.70710677
    %v3997 = vmul.f32 %v3450, 0.70710677
    %v3998 = vmul.f32 %v3788, 0.70710677
    %v3999 = vmul.f32 %v3452, 0.70710677
    %v4000 = vmul.f32 %v3454, 0.70710677
    %v4001 = vmul.f32 %v3791, 0.70710677
    %v4002 = vmul.f32 %v3458, 0.70710677
    %v4003 = vmul.f32 %v3460, 0.70710677
    %v4004 = vmul.f32 %v3796, 0.70710677
    %v4005 = vmul.f32 %v3462, 0.70710677
    %v4006 = vmul.f32 %v3464, 0.70710677
    %v4007 = vmul.f32 %v3799, 0.70710677
    %v4008 = vmul.f32 %v3468, 0.70710677
    %v4009 = vmul.f32 %v3470, 0.70710677
    %v4010 = vmul.f32 %v3804, 0.70710677
    %v4011 = vmul.f32 %v3472, 0.70710677
    %v4012 = vmul.f32 %v3474, 0.70710677
    %v4013 = vmul.f32 %v3807, 0.70710677
    %v4014 = vmul.f32 %v3478, 0.70710677
    %v4015 = vmul.f32 %v3480, 0.70710677
    %v4016 = vmul.f32 %v3812, 0.70710677
    %v4017 = vmul.f32 %v3482, 0.70710677
    %v4018 = vmul.f32 %v3484, 0.70710677
    %v4019 = vmul.f32 %v3815, 0.70710677
    %v4020 = vmul.f32 %v3488, 0.70710677
    %v4021 = vmul.f32 %v3490, 0.70710677
    %v4022 = vmul.f32 %v3820, 0.70710677
    %v4023 = vmul.f32 %v3492, 0.70710677
    %v4024 = vmul.f32 %v3494, 0.70710677
    %v4025 = vmul.f32 %v3823, 0.70710677
    %v4026 = vmul.f32 %v3498, 0.70710677
    %v4027 = vmul.f32 %v3500, 0.70710677
    %v4028 = vmul.f32 %v3828, 0.70710677
    %v4029 = vmul.f32 %v3502, 0.70710677
    %v4030 = vmul.f32 %v3504, 0.70710677
    %v4031 = vmul.f32 %v3831, 0.70710677
    %v4032 = vmul.f32 %v3508, 0.70710677
    %v4033 = vmul.f32 %v3510, 0.70710677
    %v4034 = vmul.f32 %v3836, 0.70710677
    %v4035 = vmul.f32 %v3512, 0.70710677
    %v4036 = vmul.f32 %v3514, 0.70710677
    %v4037 = vmul.f32 %v3839, 0.70710677
    %v4038 = vmul.f32 %v3518, 0.70710677
    %v4039 = vmul.f32 %v3520, 0.70710677
    %v4040 = vmul.f32 %v3844, 0.70710677
    %v4041 = vmul.f32 %v3522, 0.70710677
    %v4042 = vmul.f32 %v3524, 0.70710677
    %v4043 = vmul.f32 %v3847, 0.70710677
    %v4044 = vmul.f32 %v3528, 0.70710677
    %v4045 = vmul.f32 %v3530, 0.70710677
    %v4046 = vmul.f32 %v3852, 0.70710677
    %v4047 = vmul.f32 %v3532, 0.70710677
    %v4048 = vmul.f32 %v3534, 0.70710677
    %v4049 = vmul.f32 %v3855, 0.70710677
    %v4050 = verf.f32.pop %v3954
    %v4051 = verf.f32.pop %v3955
    %v4052 = verf.f32.pop %v3956
    %v4053 = verf.f32.pop %v3957
    %v4054 = verf.f32.pop %v3958
    %v4055 = verf.f32.pop %v3959
    %v4056 = verf.f32.pop %v3960
    %v4057 = verf.f32.pop %v3961
    %v4058 = verf.f32.pop %v3962
    %v4059 = verf.f32.pop %v3963
    %v4060 = verf.f32.pop %v3964
    %v4061 = verf.f32.pop %v3965
    %v4062 = verf.f32.pop %v3966
    %v4063 = verf.f32.pop %v3967
    %v4064 = verf.f32.pop %v3968
    %v4065 = verf.f32.pop %v3969
    %v4066 = verf.f32.pop %v3970
    %v4067 = verf.f32.pop %v3971
    %v4068 = verf.f32.pop %v3972
    %v4069 = verf.f32.pop %v3973
    %v4070 = verf.f32.pop %v3974
    %v4071 = verf.f32.pop %v3975
    %v4072 = verf.f32.pop %v3976
    %v4073 = verf.f32.pop %v3977
    %v4074 = verf.f32.pop %v3978
    %v4075 = verf.f32.pop %v3979
    %v4076 = verf.f32.pop %v3980
    %v4077 = verf.f32.pop %v3981
    %v4078 = verf.f32.pop %v3982
    %v4079 = verf.f32.pop %v3983
    %v4080 = verf.f32.pop %v3984
    %v4081 = verf.f32.pop %v3985
    %v4082 = verf.f32.pop %v3986
    %v4083 = verf.f32.pop %v3987
    %v4084 = verf.f32.pop %v3988
    %v4085 = verf.f32.pop %v3989
    %v4086 = verf.f32.pop %v3990
    %v4087 = verf.f32.pop %v3991
    %v4088 = verf.f32.pop %v3992
    %v4089 = verf.f32.pop %v3993
    %v4090 = verf.f32.pop %v3994
    %v4091 = verf.f32.pop %v3995
    %v4092 = verf.f32.pop %v3996
    %v4093 = verf.f32.pop %v3997
    %v4094 = verf.f32.pop %v3998
    %v4095 = verf.f32.pop %v3999
    %v4096 = verf.f32.pop %v4000
    %v4097 = verf.f32.pop %v4001
    %v4098 = verf.f32.pop %v4002
    %v4099 = verf.f32.pop %v4003
    %v4100 = verf.f32.pop %v4004
    %v4101 = verf.f32.pop %v4005
    %v4102 = verf.f32.pop %v4006
    %v4103 = verf.f32.pop %v4007
    %v4104 = verf.f32.pop %v4008
    %v4105 = verf.f32.pop %v4009
    %v4106 = verf.f32.pop %v4010
    %v4107 = verf.f32.pop %v4011
    %v4108 = verf.f32.pop %v4012
    %v4109 = verf.f32.pop %v4013
    %v4110 = verf.f32.pop %v4014
    %v4111 = verf.f32.pop %v4015
    %v4112 = verf.f32.pop %v4016
    %v4113 = verf.f32.pop %v4017
    %v4114 = verf.f32.pop %v4018
    %v4115 = verf.f32.pop %v4019
    %v4116 = verf.f32.pop %v4020
    %v4117 = verf.f32.pop %v4021
    %v4118 = verf.f32.pop %v4022
    %v4119 = verf.f32.pop %v4023
    %v4120 = verf.f32.pop %v4024
    %v4121 = verf.f32.pop %v4025
    %v4122 = verf.f32.pop %v4026
    %v4123 = verf.f32.pop %v4027
    %v4124 = verf.f32.pop %v4028
    %v4125 = verf.f32.pop %v4029
    %v4126 = verf.f32.pop %v4030
    %v4127 = verf.f32.pop %v4031
    %v4128 = verf.f32.pop %v4032
    %v4129 = verf.f32.pop %v4033
    %v4130 = verf.f32.pop %v4034
    %v4131 = verf.f32.pop %v4035
    %v4132 = verf.f32.pop %v4036
    %v4133 = verf.f32.pop %v4037
    %v4134 = verf.f32.pop %v4038
    %v4135 = verf.f32.pop %v4039
    %v4136 = verf.f32.pop %v4040
    %v4137 = verf.f32.pop %v4041
    %v4138 = verf.f32.pop %v4042
    %v4139 = verf.f32.pop %v4043
    %v4140 = verf.f32.pop %v4044
    %v4141 = verf.f32.pop %v4045
    %v4142 = verf.f32.pop %v4046
    %v4143 = verf.f32.pop %v4047
    %v4144 = verf.f32.pop %v4048
    %v4145 = verf.f32.pop %v4049
    %v4146 = vadd.f32 %v4050, 1.0
    %v4147 = vadd.f32 %v4051, 1.0
    %v4148 = vadd.f32 %v4052, 1.0
    %v4149 = vadd.f32 %v4053, 1.0
    %v4150 = vadd.f32 %v4054, 1.0
    %v4151 = vadd.f32 %v4055, 1.0
    %v4152 = vadd.f32 %v4056, 1.0
    %v4153 = vadd.f32 %v4057, 1.0
    %v4154 = vadd.f32 %v4058, 1.0
    %v4155 = vadd.f32 %v4059, 1.0
    %v4156 = vadd.f32 %v4060, 1.0
    %v4157 = vadd.f32 %v4061, 1.0
    %v4158 = vadd.f32 %v4062, 1.0
    %v4159 = vadd.f32 %v4063, 1.0
    %v4160 = vadd.f32 %v4064, 1.0
    %v4161 = vadd.f32 %v4065, 1.0
    %v4162 = vadd.f32 %v4066, 1.0
    %v4163 = vadd.f32 %v4067, 1.0
    %v4164 = vadd.f32 %v4068, 1.0
    %v4165 = vadd.f32 %v4069, 1.0
    %v4166 = vadd.f32 %v4070, 1.0
    %v4167 = vadd.f32 %v4071, 1.0
    %v4168 = vadd.f32 %v4072, 1.0
    %v4169 = vadd.f32 %v4073, 1.0
    %v4170 = vadd.f32 %v4074, 1.0
    %v4171 = vadd.f32 %v4075, 1.0
    %v4172 = vadd.f32 %v4076, 1.0
    %v4173 = vadd.f32 %v4077, 1.0
    %v4174 = vadd.f32 %v4078, 1.0
    %v4175 = vadd.f32 %v4079, 1.0
    %v4176 = vadd.f32 %v4080, 1.0
    %v4177 = vadd.f32 %v4081, 1.0
    %v4178 = vadd.f32 %v4082, 1.0
    %v4179 = vadd.f32 %v4083, 1.0
    %v4180 = vadd.f32 %v4084, 1.0
    %v4181 = vadd.f32 %v4085, 1.0
    %v4182 = vadd.f32 %v4086, 1.0
    %v4183 = vadd.f32 %v4087, 1.0
    %v4184 = vadd.f32 %v4088, 1.0
    %v4185 = vadd.f32 %v4089, 1.0
    %v4186 = vadd.f32 %v4090, 1.0
    %v4187 = vadd.f32 %v4091, 1.0
    %v4188 = vadd.f32 %v4092, 1.0
    %v4189 = vadd.f32 %v4093, 1.0
    %v4190 = vadd.f32 %v4094, 1.0
    %v4191 = vadd.f32 %v4095, 1.0
    %v4192 = vadd.f32 %v4096, 1.0
    %v4193 = vadd.f32 %v4097, 1.0
    %v4194 = vadd.f32 %v4098, 1.0
    %v4195 = vadd.f32 %v4099, 1.0
    %v4196 = vadd.f32 %v4100, 1.0
    %v4197 = vadd.f32 %v4101, 1.0
    %v4198 = vadd.f32 %v4102, 1.0
    %v4199 = vadd.f32 %v4103, 1.0
    %v4200 = vadd.f32 %v4104, 1.0
    %v4201 = vadd.f32 %v4105, 1.0
    %v4202 = vadd.f32 %v4106, 1.0
    %v4203 = vadd.f32 %v4107, 1.0
    %v4204 = vadd.f32 %v4108, 1.0
    %v4205 = vadd.f32 %v4109, 1.0
    %v4206 = vadd.f32 %v4110, 1.0
    %v4207 = vadd.f32 %v4111, 1.0
    %v4208 = vadd.f32 %v4112, 1.0
    %v4209 = vadd.f32 %v4113, 1.0
    %v4210 = vadd.f32 %v4114, 1.0
    %v4211 = vadd.f32 %v4115, 1.0
    %v4212 = vadd.f32 %v4116, 1.0
    %v4213 = vadd.f32 %v4117, 1.0
    %v4214 = vadd.f32 %v4118, 1.0
    %v4215 = vadd.f32 %v4119, 1.0
    %v4216 = vadd.f32 %v4120, 1.0
    %v4217 = vadd.f32 %v4121, 1.0
    %v4218 = vadd.f32 %v4122, 1.0
    %v4219 = vadd.f32 %v4123, 1.0
    %v4220 = vadd.f32 %v4124, 1.0
    %v4221 = vadd.f32 %v4125, 1.0
    %v4222 = vadd.f32 %v4126, 1.0
    %v4223 = vadd.f32 %v4127, 1.0
    %v4224 = vadd.f32 %v4128, 1.0
    %v4225 = vadd.f32 %v4129, 1.0
    %v4226 = vadd.f32 %v4130, 1.0
    %v4227 = vadd.f32 %v4131, 1.0
    %v4228 = vadd.f32 %v4132, 1.0
    %v4229 = vadd.f32 %v4133, 1.0
    %v4230 = vadd.f32 %v4134, 1.0
    %v4231 = vadd.f32 %v4135, 1.0
    %v4232 = vadd.f32 %v4136, 1.0
    %v4233 = vadd.f32 %v4137, 1.0
    %v4234 = vadd.f32 %v4138, 1.0
    %v4235 = vadd.f32 %v4139, 1.0
    %v4236 = vadd.f32 %v4140, 1.0
    %v4237 = vadd.f32 %v4141, 1.0
    %v4238 = vadd.f32 %v4142, 1.0
    %v4239 = vadd.f32 %v4143, 1.0
    %v4240 = vadd.f32 %v4144, 1.0
    %v4241 = vadd.f32 %v4145, 1.0
    %v4242 = vmul.f32 %v3858, %v4146
    %v4243 = vmul.f32 %v3859, %v4147
    %v4244 = vmul.f32 %v3860, %v4148
    %v4245 = vmul.f32 %v3861, %v4149
    %v4246 = vmul.f32 %v3862, %v4150
    %v4247 = vmul.f32 %v3863, %v4151
    %v4248 = vmul.f32 %v3864, %v4152
    %v4249 = vmul.f32 %v3865, %v4153
    %v4250 = vmul.f32 %v3866, %v4154
    %v4251 = vmul.f32 %v3867, %v4155
    %v4252 = vmul.f32 %v3868, %v4156
    %v4253 = vmul.f32 %v3869, %v4157
    %v4254 = vmul.f32 %v3870, %v4158
    %v4255 = vmul.f32 %v3871, %v4159
    %v4256 = vmul.f32 %v3872, %v4160
    %v4257 = vmul.f32 %v3873, %v4161
    %v4258 = vmul.f32 %v3874, %v4162
    %v4259 = vmul.f32 %v3875, %v4163
    %v4260 = vmul.f32 %v3876, %v4164
    %v4261 = vmul.f32 %v3877, %v4165
    %v4262 = vmul.f32 %v3878, %v4166
    %v4263 = vmul.f32 %v3879, %v4167
    %v4264 = vmul.f32 %v3880, %v4168
    %v4265 = vmul.f32 %v3881, %v4169
    %v4266 = vmul.f32 %v3882, %v4170
    %v4267 = vmul.f32 %v3883, %v4171
    %v4268 = vmul.f32 %v3884, %v4172
    %v4269 = vmul.f32 %v3885, %v4173
    %v4270 = vmul.f32 %v3886, %v4174
    %v4271 = vmul.f32 %v3887, %v4175
    %v4272 = vmul.f32 %v3888, %v4176
    %v4273 = vmul.f32 %v3889, %v4177
    %v4274 = vmul.f32 %v3890, %v4178
    %v4275 = vmul.f32 %v3891, %v4179
    %v4276 = vmul.f32 %v3892, %v4180
    %v4277 = vmul.f32 %v3893, %v4181
    %v4278 = vmul.f32 %v3894, %v4182
    %v4279 = vmul.f32 %v3895, %v4183
    %v4280 = vmul.f32 %v3896, %v4184
    %v4281 = vmul.f32 %v3897, %v4185
    %v4282 = vmul.f32 %v3898, %v4186
    %v4283 = vmul.f32 %v3899, %v4187
    %v4284 = vmul.f32 %v3900, %v4188
    %v4285 = vmul.f32 %v3901, %v4189
    %v4286 = vmul.f32 %v3902, %v4190
    %v4287 = vmul.f32 %v3903, %v4191
    %v4288 = vmul.f32 %v3904, %v4192
    %v4289 = vmul.f32 %v3905, %v4193
    %v4290 = vmul.f32 %v3906, %v4194
    %v4291 = vmul.f32 %v3907, %v4195
    %v4292 = vmul.f32 %v3908, %v4196
    %v4293 = vmul.f32 %v3909, %v4197
    %v4294 = vmul.f32 %v3910, %v4198
    %v4295 = vmul.f32 %v3911, %v4199
    %v4296 = vmul.f32 %v3912, %v4200
    %v4297 = vmul.f32 %v3913, %v4201
    %v4298 = vmul.f32 %v3914, %v4202
    %v4299 = vmul.f32 %v3915, %v4203
    %v4300 = vmul.f32 %v3916, %v4204
    %v4301 = vmul.f32 %v3917, %v4205
    %v4302 = vmul.f32 %v3918, %v4206
    %v4303 = vmul.f32 %v3919, %v4207
    %v4304 = vmul.f32 %v3920, %v4208
    %v4305 = vmul.f32 %v3921, %v4209
    %v4306 = vmul.f32 %v3922, %v4210
    %v4307 = vmul.f32 %v3923, %v4211
    %v4308 = vmul.f32 %v3924, %v4212
    %v4309 = vmul.f32 %v3925, %v4213
    %v4310 = vmul.f32 %v3926, %v4214
    %v4311 = vmul.f32 %v3927, %v4215
    %v4312 = vmul.f32 %v3928, %v4216
    %v4313 = vmul.f32 %v3929, %v4217
    %v4314 = vmul.f32 %v3930, %v4218
    %v4315 = vmul.f32 %v3931, %v4219
    %v4316 = vmul.f32 %v3932, %v4220
    %v4317 = vmul.f32 %v3933, %v4221
    %v4318 = vmul.f32 %v3934, %v4222
    %v4319 = vmul.f32 %v3935, %v4223
    %v4320 = vmul.f32 %v3936, %v4224
    %v4321 = vmul.f32 %v3937, %v4225
    %v4322 = vmul.f32 %v3938, %v4226
    %v4323 = vmul.f32 %v3939, %v4227
    %v4324 = vmul.f32 %v3940, %v4228
    %v4325 = vmul.f32 %v3941, %v4229
    %v4326 = vmul.f32 %v3942, %v4230
    %v4327 = vmul.f32 %v3943, %v4231
    %v4328 = vmul.f32 %v3944, %v4232
    %v4329 = vmul.f32 %v3945, %v4233
    %v4330 = vmul.f32 %v3946, %v4234
    %v4331 = vmul.f32 %v3947, %v4235
    %v4332 = vmul.f32 %v3948, %v4236
    %v4333 = vmul.f32 %v3949, %v4237
    %v4334 = vmul.f32 %v3950, %v4238
    %v4335 = vmul.f32 %v3951, %v4239
    %v4336 = vmul.f32 %v3952, %v4240
    %v4337 = vmul.f32 %v3953, %v4241
    %v4338 = vpack.c.bf16 %v4245, %v4242
    %v4339 = vpack.c.bf16 %v4246, %v4243
    %v4340 = vpack.c.bf16 %v4247, %v4244
    %v4341 = vpack.c.bf16 %v4251, %v4248
    %v4342 = vpack.c.bf16 %v4252, %v4249
    %v4343 = vpack.c.bf16 %v4253, %v4250
    %v4344 = vpack.c.bf16 %v4257, %v4254
    %v4345 = vpack.c.bf16 %v4258, %v4255
    %v4346 = vpack.c.bf16 %v4259, %v4256
    %v4347 = vpack.c.bf16 %v4263, %v4260
    %v4348 = vpack.c.bf16 %v4264, %v4261
    %v4349 = vpack.c.bf16 %v4265, %v4262
    %v4350 = vpack.c.bf16 %v4269, %v4266
    %v4351 = vpack.c.bf16 %v4270, %v4267
    %v4352 = vpack.c.bf16 %v4271, %v4268
    %v4353 = vpack.c.bf16 %v4275, %v4272
    %v4354 = vpack.c.bf16 %v4276, %v4273
    %v4355 = vpack.c.bf16 %v4277, %v4274
    %v4356 = vpack.c.bf16 %v4281, %v4278
    %v4357 = vpack.c.bf16 %v4282, %v4279
    %v4358 = vpack.c.bf16 %v4283, %v4280
    %v4359 = vpack.c.bf16 %v4287, %v4284
    %v4360 = vpack.c.bf16 %v4288, %v4285
    %v4361 = vpack.c.bf16 %v4289, %v4286
    %v4362 = vpack.c.bf16 %v4293, %v4290
    %v4363 = vpack.c.bf16 %v4294, %v4291
    %v4364 = vpack.c.bf16 %v4295, %v4292
    %v4365 = vpack.c.bf16 %v4299, %v4296
    %v4366 = vpack.c.bf16 %v4300, %v4297
    %v4367 = vpack.c.bf16 %v4301, %v4298
    %v4368 = vpack.c.bf16 %v4305, %v4302
    %v4369 = vpack.c.bf16 %v4306, %v4303
    %v4370 = vpack.c.bf16 %v4307, %v4304
    %v4371 = vpack.c.bf16 %v4311, %v4308
    %v4372 = vpack.c.bf16 %v4312, %v4309
    %v4373 = vpack.c.bf16 %v4313, %v4310
    %v4374 = vpack.c.bf16 %v4317, %v4314
    %v4375 = vpack.c.bf16 %v4318, %v4315
    %v4376 = vpack.c.bf16 %v4319, %v4316
    %v4377 = vpack.c.bf16 %v4323, %v4320
    %v4378 = vpack.c.bf16 %v4324, %v4321
    %v4379 = vpack.c.bf16 %v4325, %v4322
    %v4380 = vpack.c.bf16 %v4329, %v4326
    %v4381 = vpack.c.bf16 %v4330, %v4327
    %v4382 = vpack.c.bf16 %v4331, %v4328
    %v4383 = vpack.c.bf16 %v4335, %v4332
    %v4384 = vpack.c.bf16 %v4336, %v4333
    %v4385 = vpack.c.bf16 %v4337, %v4334
    %v4386 = vld [vmem:[#allocation10] sm:$0xff]
    %v4387 = vld [vmem:[#allocation10 + $0x8] sm:$0xf]
    %v4388 = vld [vmem:[#allocation10 + $0xc] sm:$0xff]
    %v4389 = vld [vmem:[#allocation10 + $0x14] sm:$0xf]
    %v4390 = vld [vmem:[#allocation10 + $0x18] sm:$0xff]
    %v4391 = vld [vmem:[#allocation10 + $0x20] sm:$0xf]
    %v4392 = vld [vmem:[#allocation10 + $0x24] sm:$0xff]
    %v4393 = vld [vmem:[#allocation10 + $0x2c] sm:$0xf]
    %v4394 = vld [vmem:[#allocation10 + $0x30] sm:$0xff]
    %v4395 = vld [vmem:[#allocation10 + $0x38] sm:$0xf]
    %v4396 = vld [vmem:[#allocation10 + $0x3c] sm:$0xff]
    %v4397 = vld [vmem:[#allocation10 + $0x44] sm:$0xf]
    %v4398 = vld [vmem:[#allocation10 + $0x48] sm:$0xff]
    %v4399 = vld [vmem:[#allocation10 + $0x50] sm:$0xf]
    %v4400 = vld [vmem:[#allocation10 + $0x54] sm:$0xff]
    %v4401 = vld [vmem:[#allocation10 + $0x5c] sm:$0xf]
    %v4402 = vld [vmem:[#allocation10 + $0x60] sm:$0xff]
    %v4403 = vld [vmem:[#allocation10 + $0x68] sm:$0xf]
    %v4404 = vld [vmem:[#allocation10 + $0x6c] sm:$0xff]
    %v4405 = vld [vmem:[#allocation10 + $0x74] sm:$0xf]
    %v4406 = vld [vmem:[#allocation10 + $0x78] sm:$0xff]
    %v4407 = vld [vmem:[#allocation10 + $0x80] sm:$0xf]
    %v4408 = vld [vmem:[#allocation10 + $0x84] sm:$0xff]
    %v4409 = vld [vmem:[#allocation10 + $0x8c] sm:$0xf]
    %v4410 = vld [vmem:[#allocation10 + $0x90] sm:$0xff]
    %v4411 = vld [vmem:[#allocation10 + $0x98] sm:$0xf]
    %v4412 = vld [vmem:[#allocation10 + $0x9c] sm:$0xff]
    %v4413 = vld [vmem:[#allocation10 + $0xa4] sm:$0xf]
    %v4414 = vld [vmem:[#allocation10 + $0xa8] sm:$0xff]
    %v4415 = vld [vmem:[#allocation10 + $0xb0] sm:$0xf]
    %v4416 = vld [vmem:[#allocation10 + $0xb4] sm:$0xff]
    %v4417 = vld [vmem:[#allocation10 + $0xbc] sm:$0xf]
    %v4418 = vld [vmem:[#allocation10 + $0xc0] sm:$0xff]
    %v4419 = vld [vmem:[#allocation10 + $0xc8] sm:$0xf]
    %v4420 = vld [vmem:[#allocation10 + $0xcc] sm:$0xff]
    %v4421 = vld [vmem:[#allocation10 + $0xd4] sm:$0xf]
    %v4422 = vld [vmem:[#allocation10 + $0xd8] sm:$0xff]
    %v4423 = vld [vmem:[#allocation10 + $0xe0] sm:$0xf]
    %v4424 = vld [vmem:[#allocation10 + $0xe4] sm:$0xff]
    %v4425 = vld [vmem:[#allocation10 + $0xec] sm:$0xf]
    %v4426 = vld [vmem:[#allocation10 + $0xf0] sm:$0xff]
    %v4427 = vld [vmem:[#allocation10 + $0xf8] sm:$0xf]
    %v4428 = vld [vmem:[#allocation10 + $0xfc] sm:$0xff]
    %v4429 = vld [vmem:[#allocation10 + $0x104] sm:$0xf]
    %v4430 = vld [vmem:[#allocation10 + $0x108] sm:$0xff]
    %v4431 = vld [vmem:[#allocation10 + $0x110] sm:$0xf]
    %v4432 = vld [vmem:[#allocation10 + $0x114] sm:$0xff]
    %v4433 = vld [vmem:[#allocation10 + $0x11c] sm:$0xf]
    %v4434 = vld [vmem:[#allocation10 + $0x120] sm:$0xff]
    %v4435 = vld [vmem:[#allocation10 + $0x128] sm:$0xf]
    %v4436 = vld [vmem:[#allocation10 + $0x12c] sm:$0xff]
    %v4437 = vld [vmem:[#allocation10 + $0x134] sm:$0xf]
    %v4438 = vld [vmem:[#allocation10 + $0x138] sm:$0xff]
    %v4439 = vld [vmem:[#allocation10 + $0x140] sm:$0xf]
    %v4440 = vld [vmem:[#allocation10 + $0x144] sm:$0xff]
    %v4441 = vld [vmem:[#allocation10 + $0x14c] sm:$0xf]
    %v4442 = vld [vmem:[#allocation10 + $0x150] sm:$0xff]
    %v4443 = vld [vmem:[#allocation10 + $0x158] sm:$0xf]
    %v4444 = vld [vmem:[#allocation10 + $0x15c] sm:$0xff]
    %v4445 = vld [vmem:[#allocation10 + $0x164] sm:$0xf]
    %v4446 = vld [vmem:[#allocation10 + $0x168] sm:$0xff]
    %v4447 = vld [vmem:[#allocation10 + $0x170] sm:$0xf]
    %v4448 = vld [vmem:[#allocation10 + $0x174] sm:$0xff]
    %v4449 = vld [vmem:[#allocation10 + $0x17c] sm:$0xf]
    %v4450 = vld [vmem:[#allocation10 + $0x180] sm:$0xff]
    %v4451 = vld [vmem:[#allocation10 + $0x188] sm:$0xf]
    %v4452 = vld [vmem:[#allocation10 + $0x18c] sm:$0xff]
    %v4453 = vld [vmem:[#allocation10 + $0x194] sm:$0xf]
    %v4454 = vld [vmem:[#allocation10 + $0x198] sm:$0xff]
    %v4455 = vld [vmem:[#allocation10 + $0x1a0] sm:$0xf]
    %v4456 = vld [vmem:[#allocation10 + $0x1a4] sm:$0xff]
    %v4457 = vld [vmem:[#allocation10 + $0x1ac] sm:$0xf]
    %v4458 = vld [vmem:[#allocation10 + $0x1b0] sm:$0xff]
    %v4459 = vld [vmem:[#allocation10 + $0x1b8] sm:$0xf]
    %v4460 = vld [vmem:[#allocation10 + $0x1bc] sm:$0xff]
    %v4461 = vld [vmem:[#allocation10 + $0x1c4] sm:$0xf]
    %v4462 = vld [vmem:[#allocation10 + $0x1c8] sm:$0xff]
    %v4463 = vld [vmem:[#allocation10 + $0x1d0] sm:$0xf]
    %v4464 = vld [vmem:[#allocation10 + $0x1d4] sm:$0xff]
    %v4465 = vld [vmem:[#allocation10 + $0x1dc] sm:$0xf]
    %v4466 = vld [vmem:[#allocation10 + $0x1e0] sm:$0xff]
    %v4467 = vld [vmem:[#allocation10 + $0x1e8] sm:$0xf]
    %v4468 = vld [vmem:[#allocation10 + $0x1ec] sm:$0xff]
    %v4469 = vld [vmem:[#allocation10 + $0x1f4] sm:$0xf]
    %v4470 = vld [vmem:[#allocation10 + $0x1f8] sm:$0xff]
    %v4471 = vld [vmem:[#allocation10 + $0x200] sm:$0xf]
    %v4472 = vld [vmem:[#allocation10 + $0x204] sm:$0xff]
    %v4473 = vld [vmem:[#allocation10 + $0x20c] sm:$0xf]
    %v4474 = vld [vmem:[#allocation10 + $0x210] sm:$0xff]
    %v4475 = vld [vmem:[#allocation10 + $0x218] sm:$0xf]
    %v4476 = vld [vmem:[#allocation10 + $0x21c] sm:$0xff]
    %v4477 = vld [vmem:[#allocation10 + $0x224] sm:$0xf]
    %v4478 = vld [vmem:[#allocation10 + $0x228] sm:$0xff]
    %v4479 = vld [vmem:[#allocation10 + $0x230] sm:$0xf]
    %v4480 = vld [vmem:[#allocation10 + $0x234] sm:$0xff]
    %v4481 = vld [vmem:[#allocation10 + $0x23c] sm:$0xf]
    %v4482 = vld [vmem:[%s7] sm:$0x7]
    %v4484 = vlaneseq
    %v4485 = vshrl.u32 %v4484, 7
    %v4486 = vsub.s32 0, %v4485
    %v4487 = vrot.slane %v4482, %v4486
    %v4488 = vlaneseq
    %v4489 = vshrl.u32 %v4488, 7
    %v4490 = vsub.s32 1, %v4489
    %v4491 = vrot.slane %v4482, %v4490
    %v4492 = vlaneseq
    %v4493 = vshrl.u32 %v4492, 7
    %v4494 = vsub.s32 2, %v4493
    %v4495 = vrot.slane %v4482, %v4494
    %v4595 = vunpack.c.l.b16 %v4386
    %v4596 = vunpack.c.h.b16 %v4386
    %v4597 = vunpack.c.l.b16 %v4387
    %v4598 = vunpack.c.l.b16 %v4388
    %v4599 = vunpack.c.h.b16 %v4388
    %v4600 = vunpack.c.l.b16 %v4389
    %v4601 = vunpack.c.l.b16 %v4390
    %v4602 = vunpack.c.h.b16 %v4390
    %v4603 = vunpack.c.l.b16 %v4391
    %v4604 = vunpack.c.l.b16 %v4392
    %v4605 = vunpack.c.h.b16 %v4392
    %v4606 = vunpack.c.l.b16 %v4393
    %v4607 = vunpack.c.l.b16 %v4394
    %v4608 = vunpack.c.h.b16 %v4394
    %v4609 = vunpack.c.l.b16 %v4395
    %v4610 = vunpack.c.l.b16 %v4396
    %v4611 = vunpack.c.h.b16 %v4396
    %v4612 = vunpack.c.l.b16 %v4397
    %v4613 = vunpack.c.l.b16 %v4398
    %v4614 = vunpack.c.h.b16 %v4398
    %v4615 = vunpack.c.l.b16 %v4399
    %v4616 = vunpack.c.l.b16 %v4400
    %v4617 = vunpack.c.h.b16 %v4400
    %v4618 = vunpack.c.l.b16 %v4401
    %v4619 = vunpack.c.l.b16 %v4402
    %v4620 = vunpack.c.h.b16 %v4402
    %v4621 = vunpack.c.l.b16 %v4403
    %v4622 = vunpack.c.l.b16 %v4404
    %v4623 = vunpack.c.h.b16 %v4404
    %v4624 = vunpack.c.l.b16 %v4405
    %v4625 = vunpack.c.l.b16 %v4406
    %v4626 = vunpack.c.h.b16 %v4406
    %v4627 = vunpack.c.l.b16 %v4407
    %v4628 = vunpack.c.l.b16 %v4408
    %v4629 = vunpack.c.h.b16 %v4408
    %v4630 = vunpack.c.l.b16 %v4409
    %v4631 = vunpack.c.l.b16 %v4410
    %v4632 = vunpack.c.h.b16 %v4410
    %v4633 = vunpack.c.l.b16 %v4411
    %v4634 = vunpack.c.l.b16 %v4412
    %v4635 = vunpack.c.h.b16 %v4412
    %v4636 = vunpack.c.l.b16 %v4413
    %v4637 = vunpack.c.l.b16 %v4414
    %v4638 = vunpack.c.h.b16 %v4414
    %v4639 = vunpack.c.l.b16 %v4415
    %v4640 = vunpack.c.l.b16 %v4416
    %v4641 = vunpack.c.h.b16 %v4416
    %v4642 = vunpack.c.l.b16 %v4417
    %v4643 = vunpack.c.l.b16 %v4418
    %v4644 = vunpack.c.h.b16 %v4418
    %v4645 = vunpack.c.l.b16 %v4419
    %v4646 = vunpack.c.l.b16 %v4420
    %v4647 = vunpack.c.h.b16 %v4420
    %v4648 = vunpack.c.l.b16 %v4421
    %v4649 = vunpack.c.l.b16 %v4422
    %v4650 = vunpack.c.h.b16 %v4422
    %v4651 = vunpack.c.l.b16 %v4423
    %v4652 = vunpack.c.l.b16 %v4424
    %v4653 = vunpack.c.h.b16 %v4424
    %v4654 = vunpack.c.l.b16 %v4425
    %v4655 = vunpack.c.l.b16 %v4426
    %v4656 = vunpack.c.h.b16 %v4426
    %v4657 = vunpack.c.l.b16 %v4427
    %v4658 = vunpack.c.l.b16 %v4428
    %v4659 = vunpack.c.h.b16 %v4428
    %v4660 = vunpack.c.l.b16 %v4429
    %v4661 = vunpack.c.l.b16 %v4430
    %v4662 = vunpack.c.h.b16 %v4430
    %v4663 = vunpack.c.l.b16 %v4431
    %v4664 = vunpack.c.l.b16 %v4432
    %v4665 = vunpack.c.h.b16 %v4432
    %v4666 = vunpack.c.l.b16 %v4433
    %v4667 = vunpack.c.l.b16 %v4434
    %v4668 = vunpack.c.h.b16 %v4434
    %v4669 = vunpack.c.l.b16 %v4435
    %v4670 = vunpack.c.l.b16 %v4436
    %v4671 = vunpack.c.h.b16 %v4436
    %v4672 = vunpack.c.l.b16 %v4437
    %v4673 = vunpack.c.l.b16 %v4438
    %v4674 = vunpack.c.h.b16 %v4438
    %v4675 = vunpack.c.l.b16 %v4439
    %v4676 = vunpack.c.l.b16 %v4440
    %v4677 = vunpack.c.h.b16 %v4440
    %v4678 = vunpack.c.l.b16 %v4441
    %v4679 = vunpack.c.l.b16 %v4442
    %v4680 = vunpack.c.h.b16 %v4442
    %v4681 = vunpack.c.l.b16 %v4443
    %v4682 = vunpack.c.l.b16 %v4444
    %v4683 = vunpack.c.h.b16 %v4444
    %v4684 = vunpack.c.l.b16 %v4445
    %v4685 = vunpack.c.l.b16 %v4446
    %v4686 = vunpack.c.h.b16 %v4446
    %v4687 = vunpack.c.l.b16 %v4447
    %v4688 = vunpack.c.l.b16 %v4448
    %v4689 = vunpack.c.h.b16 %v4448
    %v4690 = vunpack.c.l.b16 %v4449
    %v4691 = vunpack.c.l.b16 %v4450
    %v4692 = vunpack.c.h.b16 %v4450
    %v4693 = vunpack.c.l.b16 %v4451
    %v4694 = vunpack.c.l.b16 %v4452
    %v4695 = vunpack.c.h.b16 %v4452
    %v4696 = vunpack.c.l.b16 %v4453
    %v4697 = vunpack.c.l.b16 %v4454
    %v4698 = vunpack.c.h.b16 %v4454
    %v4699 = vunpack.c.l.b16 %v4455
    %v4700 = vunpack.c.l.b16 %v4456
    %v4701 = vunpack.c.h.b16 %v4456
    %v4702 = vunpack.c.l.b16 %v4457
    %v4703 = vunpack.c.l.b16 %v4458
    %v4704 = vunpack.c.h.b16 %v4458
    %v4705 = vunpack.c.l.b16 %v4459
    %v4706 = vunpack.c.l.b16 %v4460
    %v4707 = vunpack.c.h.b16 %v4460
    %v4708 = vunpack.c.l.b16 %v4461
    %v4709 = vunpack.c.l.b16 %v4462
    %v4710 = vunpack.c.h.b16 %v4462
    %v4711 = vunpack.c.l.b16 %v4463
    %v4712 = vunpack.c.l.b16 %v4464
    %v4713 = vunpack.c.h.b16 %v4464
    %v4714 = vunpack.c.l.b16 %v4465
    %v4715 = vunpack.c.l.b16 %v4466
    %v4716 = vunpack.c.h.b16 %v4466
    %v4717 = vunpack.c.l.b16 %v4467
    %v4718 = vunpack.c.l.b16 %v4468
    %v4719 = vunpack.c.h.b16 %v4468
    %v4720 = vunpack.c.l.b16 %v4469
    %v4721 = vunpack.c.l.b16 %v4470
    %v4722 = vunpack.c.h.b16 %v4470
    %v4723 = vunpack.c.l.b16 %v4471
    %v4724 = vunpack.c.l.b16 %v4472
    %v4725 = vunpack.c.h.b16 %v4472
    %v4726 = vunpack.c.l.b16 %v4473
    %v4727 = vunpack.c.l.b16 %v4474
    %v4728 = vunpack.c.h.b16 %v4474
    %v4729 = vunpack.c.l.b16 %v4475
    %v4730 = vunpack.c.l.b16 %v4476
    %v4731 = vunpack.c.h.b16 %v4476
    %v4732 = vunpack.c.l.b16 %v4477
    %v4733 = vunpack.c.l.b16 %v4478
    %v4734 = vunpack.c.h.b16 %v4478
    %v4735 = vunpack.c.l.b16 %v4479
    %v4736 = vunpack.c.l.b16 %v4480
    %v4737 = vunpack.c.h.b16 %v4480
    %v4738 = vunpack.c.l.b16 %v4481
    %v4739 = vpack.c.b16 %v4598, %v4595
    %v4740 = vpack.c.b16 %v4599, %v4596
    %v4741 = vpack.c.b16 %v4600, %v4597
    %v4742 = vpack.c.b16 %v4604, %v4601
    %v4743 = vpack.c.b16 %v4605, %v4602
    %v4744 = vpack.c.b16 %v4606, %v4603
    %v4745 = vpack.c.b16 %v4610, %v4607
    %v4746 = vpack.c.b16 %v4611, %v4608
    %v4747 = vpack.c.b16 %v4612, %v4609
    %v4748 = vpack.c.b16 %v4616, %v4613
    %v4749 = vpack.c.b16 %v4617, %v4614
    %v4750 = vpack.c.b16 %v4618, %v4615
    %v4751 = vpack.c.b16 %v4622, %v4619
    %v4752 = vpack.c.b16 %v4623, %v4620
    %v4753 = vpack.c.b16 %v4624, %v4621
    %v4754 = vpack.c.b16 %v4628, %v4625
    %v4755 = vpack.c.b16 %v4629, %v4626
    %v4756 = vpack.c.b16 %v4630, %v4627
    %v4757 = vpack.c.b16 %v4634, %v4631
    %v4758 = vpack.c.b16 %v4635, %v4632
    %v4759 = vpack.c.b16 %v4636, %v4633
    %v4760 = vpack.c.b16 %v4640, %v4637
    %v4761 = vpack.c.b16 %v4641, %v4638
    %v4762 = vpack.c.b16 %v4642, %v4639
    %v4763 = vpack.c.b16 %v4646, %v4643
    %v4764 = vpack.c.b16 %v4647, %v4644
    %v4765 = vpack.c.b16 %v4648, %v4645
    %v4766 = vpack.c.b16 %v4652, %v4649
    %v4767 = vpack.c.b16 %v4653, %v4650
    %v4768 = vpack.c.b16 %v4654, %v4651
    %v4769 = vpack.c.b16 %v4658, %v4655
    %v4770 = vpack.c.b16 %v4659, %v4656
    %v4771 = vpack.c.b16 %v4660, %v4657
    %v4772 = vpack.c.b16 %v4664, %v4661
    %v4773 = vpack.c.b16 %v4665, %v4662
    %v4774 = vpack.c.b16 %v4666, %v4663
    %v4775 = vpack.c.b16 %v4670, %v4667
    %v4776 = vpack.c.b16 %v4671, %v4668
    %v4777 = vpack.c.b16 %v4672, %v4669
    %v4778 = vpack.c.b16 %v4676, %v4673
    %v4779 = vpack.c.b16 %v4677, %v4674
    %v4780 = vpack.c.b16 %v4678, %v4675
    %v4781 = vpack.c.b16 %v4682, %v4679
    %v4782 = vpack.c.b16 %v4683, %v4680
    %v4783 = vpack.c.b16 %v4684, %v4681
    %v4784 = vpack.c.b16 %v4688, %v4685
    %v4785 = vpack.c.b16 %v4689, %v4686
    %v4786 = vpack.c.b16 %v4690, %v4687
    %v4787 = vpack.c.b16 %v4694, %v4691
    %v4788 = vpack.c.b16 %v4695, %v4692
    %v4789 = vpack.c.b16 %v4696, %v4693
    %v4790 = vpack.c.b16 %v4700, %v4697
    %v4791 = vpack.c.b16 %v4701, %v4698
    %v4792 = vpack.c.b16 %v4702, %v4699
    %v4793 = vpack.c.b16 %v4706, %v4703
    %v4794 = vpack.c.b16 %v4707, %v4704
    %v4795 = vpack.c.b16 %v4708, %v4705
    %v4796 = vpack.c.b16 %v4712, %v4709
    %v4797 = vpack.c.b16 %v4713, %v4710
    %v4798 = vpack.c.b16 %v4714, %v4711
    %v4799 = vpack.c.b16 %v4718, %v4715
    %v4800 = vpack.c.b16 %v4719, %v4716
    %v4801 = vpack.c.b16 %v4720, %v4717
    %v4802 = vpack.c.b16 %v4724, %v4721
    %v4803 = vpack.c.b16 %v4725, %v4722
    %v4804 = vpack.c.b16 %v4726, %v4723
    %v4805 = vpack.c.b16 %v4730, %v4727
    %v4806 = vpack.c.b16 %v4731, %v4728
    %v4807 = vpack.c.b16 %v4732, %v4729
    %v4808 = vpack.c.b16 %v4736, %v4733
    %v4809 = vpack.c.b16 %v4737, %v4734
    %v4810 = vpack.c.b16 %v4738, %v4735
    %4883 = vmatprep.subr.bf16.mxu0 %v4740
    %4884 = vmatpush1.bf16.msra.mxu0 %v4739
    %4885 = vmatprep.subr.bf16.mxu0 %v4743
    %4886 = vmatpush1.bf16.msra.mxu0 %v4742
    %4887 = vmatprep.subr.bf16.mxu0 %v4746
    %4888 = vmatpush1.bf16.msra.mxu0 %v4745
    %4889 = vmatprep.subr.bf16.mxu0 %v4749
    %4890 = vmatpush1.bf16.msra.mxu0 %v4748
    %4891 = vmatprep.subr.bf16.mxu0 %v4752
    %4892 = vmatpush1.bf16.msra.mxu0 %v4751
    %4893 = vmatprep.subr.bf16.mxu0 %v4755
    %4894 = vmatpush1.bf16.msra.mxu0 %v4754
    %4895 = vmatprep.subr.bf16.mxu0 %v4758
    %4896 = vmatpush1.bf16.msra.mxu0 %v4757
    %4897 = vmatprep.subr.bf16.mxu0 %v4761
    %4898 = vmatpush1.bf16.msra.mxu0 %v4760
    %4899 = vmatprep.subr.bf16.mxu0 %v4764
    %4900 = vmatpush1.bf16.msra.mxu0 %v4763
    %4901 = vmatprep.subr.bf16.mxu0 %v4767
    %4902 = vmatpush1.bf16.msra.mxu0 %v4766
    %4903 = vmatprep.subr.bf16.mxu0 %v4770
    %4904 = vmatpush1.bf16.msra.mxu0 %v4769
    %4905 = vmatprep.subr.bf16.mxu0 %v4773
    %4906 = vmatpush1.bf16.msra.mxu0 %v4772
    %4907 = vmatprep.subr.bf16.mxu0 %v4776
    %4908 = vmatpush1.bf16.msra.mxu0 %v4775
    %4909 = vmatprep.subr.bf16.mxu0 %v4779
    %4910 = vmatpush1.bf16.msra.mxu0 %v4778
    %4911 = vmatprep.subr.bf16.mxu0 %v4782
    %4912 = vmatpush1.bf16.msra.mxu0 %v4781
    %4913 = vmatprep.subr.bf16.mxu0 %v4785
    %4914 = vmatpush1.bf16.msra.mxu0 %v4784
    %4915 = vmatprep.mubr.bf16.mxu0 %v4339
    %4916 = vmatmul.mubr.bf16.gmra.mrb[0].mxu0 %v4338
    %v4917 = vpop.f32.mrb[0].mxu0
    %v4918 = vadd.f32 %v4487, %v4917
    %v4919 = vpop.f32.mrb[0].mxu0
    %v4920 = vadd.f32 %v4491, %v4919
    %v4921 = vpop.f32.mrb[0].mxu0
    %v4922 = vadd.f32 %v4487, %v4921
    %v4923 = vpop.f32.mrb[0].mxu0
    %v4924 = vadd.f32 %v4491, %v4923
    %4925 = vmatprep.mubr.bf16.mxu0 %v4342
    %4926 = vmatmul.mubr.bf16.gmra.mrb[0].mxu0 %v4341
    %v4927 = vpop.f32.mrb[0].mxu0
    %v4928 = vadd.f32 %v4487, %v4927
    %v4929 = vpop.f32.mrb[0].mxu0
    %v4930 = vadd.f32 %v4491, %v4929
    %v4931 = vpop.f32.mrb[0].mxu0
    %v4932 = vadd.f32 %v4487, %v4931
    %v4933 = vpop.f32.mrb[0].mxu0
    %v4934 = vadd.f32 %v4491, %v4933
    %4935 = vmatprep.mubr.bf16.mxu0 %v4345
    %4936 = vmatmul.mubr.bf16.gmra.mrb[0].mxu0 %v4344
    %v4937 = vpop.f32.mrb[0].mxu0
    %v4938 = vadd.f32 %v4487, %v4937
    %v4939 = vpop.f32.mrb[0].mxu0
    %v4940 = vadd.f32 %v4491, %v4939
    %v4941 = vpop.f32.mrb[0].mxu0
    %v4942 = vadd.f32 %v4487, %v4941
    %v4943 = vpop.f32.mrb[0].mxu0
    %v4944 = vadd.f32 %v4491, %v4943
    %4945 = vmatprep.mubr.bf16.mxu0 %v4348
    %4946 = vmatmul.mubr.bf16.gmra.mrb[0].mxu0 %v4347
    %v4947 = vpop.f32.mrb[0].mxu0
    %v4948 = vadd.f32 %v4487, %v4947
    %v4949 = vpop.f32.mrb[0].mxu0
    %v4950 = vadd.f32 %v4491, %v4949
    %v4951 = vpop.f32.mrb[0].mxu0
    %v4952 = vadd.f32 %v4487, %v4951
    %v4953 = vpop.f32.mrb[0].mxu0
    %v4954 = vadd.f32 %v4491, %v4953
    %4955 = vmatprep.mubr.bf16.mxu0 %v4351
    %4956 = vmatmul.mubr.bf16.gmra.mrb[0].mxu0 %v4350
    %v4957 = vpop.f32.mrb[0].mxu0
    %v4958 = vadd.f32 %v4487, %v4957
    %v4959 = vpop.f32.mrb[0].mxu0
    %v4960 = vadd.f32 %v4491, %v4959
    %v4961 = vpop.f32.mrb[0].mxu0
    %v4962 = vadd.f32 %v4487, %v4961
    %v4963 = vpop.f32.mrb[0].mxu0
    %v4964 = vadd.f32 %v4491, %v4963
    %4965 = vmatprep.mubr.bf16.mxu0 %v4354
    %4966 = vmatmul.mubr.bf16.gmra.mrb[0].mxu0 %v4353
    %v4967 = vpop.f32.mrb[0].mxu0
    %v4968 = vadd.f32 %v4487, %v4967
    %v4969 = vpop.f32.mrb[0].mxu0
    %v4970 = vadd.f32 %v4491, %v4969
    %v4971 = vpop.f32.mrb[0].mxu0
    %v4972 = vadd.f32 %v4487, %v4971
    %v4973 = vpop.f32.mrb[0].mxu0
    %v4974 = vadd.f32 %v4491, %v4973
    %4975 = vmatprep.mubr.bf16.mxu0 %v4357
    %4976 = vmatmul.mubr.bf16.gmra.mrb[0].mxu0 %v4356
    %v4977 = vpop.f32.mrb[0].mxu0
    %v4978 = vadd.f32 %v4487, %v4977
    %v4979 = vpop.f32.mrb[0].mxu0
    %v4980 = vadd.f32 %v4491, %v4979
    %v4981 = vpop.f32.mrb[0].mxu0
    %v4982 = vadd.f32 %v4487, %v4981
    %v4983 = vpop.f32.mrb[0].mxu0
    %v4984 = vadd.f32 %v4491, %v4983
    %4985 = vmatprep.mubr.bf16.mxu0 %v4360
    %4986 = vmatmul.mubr.bf16.gmra.mrb[0].mxu0 %v4359
    %v4987 = vpop.f32.mrb[0].mxu0
    %v4988 = vadd.f32 %v4487, %v4987
    %v4989 = vpop.f32.mrb[0].mxu0
    %v4990 = vadd.f32 %v4491, %v4989
    %v4991 = vpop.f32.mrb[0].mxu0
    %v4992 = vadd.f32 %v4487, %v4991
    %v4993 = vpop.f32.mrb[0].mxu0
    %v4994 = vadd.f32 %v4491, %v4993
    %4995 = vmatprep.mubr.bf16.mxu0 %v4363
    %4996 = vmatmul.mubr.bf16.gmra.mrb[0].mxu0 %v4362
    %v4997 = vpop.f32.mrb[0].mxu0
    %v4998 = vadd.f32 %v4487, %v4997
    %v4999 = vpop.f32.mrb[0].mxu0
    %v5000 = vadd.f32 %v4491, %v4999
    %v5001 = vpop.f32.mrb[0].mxu0
    %v5002 = vadd.f32 %v4487, %v5001
    %v5003 = vpop.f32.mrb[0].mxu0
    %v5004 = vadd.f32 %v4491, %v5003
    %5005 = vmatprep.mubr.bf16.mxu0 %v4366
    %5006 = vmatmul.mubr.bf16.gmra.mrb[0].mxu0 %v4365
    %v5007 = vpop.f32.mrb[0].mxu0
    %v5008 = vadd.f32 %v4487, %v5007
    %v5009 = vpop.f32.mrb[0].mxu0
    %v5010 = vadd.f32 %v4491, %v5009
    %v5011 = vpop.f32.mrb[0].mxu0
    %v5012 = vadd.f32 %v4487, %v5011
    %v5013 = vpop.f32.mrb[0].mxu0
    %v5014 = vadd.f32 %v4491, %v5013
    %5015 = vmatprep.mubr.bf16.mxu0 %v4369
    %5016 = vmatmul.mubr.bf16.gmra.mrb[0].mxu0 %v4368
    %v5017 = vpop.f32.mrb[0].mxu0
    %v5018 = vadd.f32 %v4487, %v5017
    %v5019 = vpop.f32.mrb[0].mxu0
    %v5020 = vadd.f32 %v4491, %v5019
    %v5021 = vpop.f32.mrb[0].mxu0
    %v5022 = vadd.f32 %v4487, %v5021
    %v5023 = vpop.f32.mrb[0].mxu0
    %v5024 = vadd.f32 %v4491, %v5023
    %5025 = vmatprep.mubr.bf16.mxu0 %v4372
    %5026 = vmatmul.mubr.bf16.gmra.mrb[0].mxu0 %v4371
    %v5027 = vpop.f32.mrb[0].mxu0
    %v5028 = vadd.f32 %v4487, %v5027
    %v5029 = vpop.f32.mrb[0].mxu0
    %v5030 = vadd.f32 %v4491, %v5029
    %v5031 = vpop.f32.mrb[0].mxu0
    %v5032 = vadd.f32 %v4487, %v5031
    %v5033 = vpop.f32.mrb[0].mxu0
    %v5034 = vadd.f32 %v4491, %v5033
    %5035 = vmatprep.mubr.bf16.mxu0 %v4375
    %5036 = vmatmul.mubr.bf16.gmra.mrb[0].mxu0 %v4374
    %v5037 = vpop.f32.mrb[0].mxu0
    %v5038 = vadd.f32 %v4487, %v5037
    %v5039 = vpop.f32.mrb[0].mxu0
    %v5040 = vadd.f32 %v4491, %v5039
    %v5041 = vpop.f32.mrb[0].mxu0
    %v5042 = vadd.f32 %v4487, %v5041
    %v5043 = vpop.f32.mrb[0].mxu0
    %v5044 = vadd.f32 %v4491, %v5043
    %5045 = vmatprep.mubr.bf16.mxu0 %v4378
    %5046 = vmatmul.mubr.bf16.gmra.mrb[0].mxu0 %v4377
    %v5047 = vpop.f32.mrb[0].mxu0
    %v5048 = vadd.f32 %v4487, %v5047
    %v5049 = vpop.f32.mrb[0].mxu0
    %v5050 = vadd.f32 %v4491, %v5049
    %v5051 = vpop.f32.mrb[0].mxu0
    %v5052 = vadd.f32 %v4487, %v5051
    %v5053 = vpop.f32.mrb[0].mxu0
    %v5054 = vadd.f32 %v4491, %v5053
    %5055 = vmatprep.mubr.bf16.mxu0 %v4381
    %5056 = vmatmul.mubr.bf16.gmra.mrb[0].mxu0 %v4380
    %v5057 = vpop.f32.mrb[0].mxu0
    %v5058 = vadd.f32 %v4487, %v5057
    %v5059 = vpop.f32.mrb[0].mxu0
    %v5060 = vadd.f32 %v4491, %v5059
    %v5061 = vpop.f32.mrb[0].mxu0
    %v5062 = vadd.f32 %v4487, %v5061
    %v5063 = vpop.f32.mrb[0].mxu0
    %v5064 = vadd.f32 %v4491, %v5063
    %5065 = vmatprep.mubr.bf16.mxu0 %v4384
    %5066 = vmatmul.mubr.bf16.gmra.mrb[0].mxu0 %v4383
    %v5067 = vpop.f32.mrb[0].mxu0
    %v5068 = vadd.f32 %v4487, %v5067
    %v5069 = vpop.f32.mrb[0].mxu0
    %v5070 = vadd.f32 %v4491, %v5069
    %v5071 = vpop.f32.mrb[0].mxu0
    %v5072 = vadd.f32 %v4487, %v5071
    %v5073 = vpop.f32.mrb[0].mxu0
    %v5074 = vadd.f32 %v4491, %v5073
    %5075 = vdwg.mxu0
    %5076 = vmatprep.subr.bf16.mxu0 %v4788
    %5077 = vmatpush1.bf16.msra.mxu0 %v4787
    %5078 = vmatprep.subr.bf16.mxu0 %v4791
    %5079 = vmatpush1.bf16.msra.mxu0 %v4790
    %5080 = vmatprep.subr.bf16.mxu0 %v4794
    %5081 = vmatpush1.bf16.msra.mxu0 %v4793
    %5082 = vmatprep.subr.bf16.mxu0 %v4797
    %5083 = vmatpush1.bf16.msra.mxu0 %v4796
    %5084 = vmatprep.subr.bf16.mxu0 %v4800
    %5085 = vmatpush1.bf16.msra.mxu0 %v4799
    %5086 = vmatprep.subr.bf16.mxu0 %v4803
    %5087 = vmatpush1.bf16.msra.mxu0 %v4802
    %5088 = vmatprep.subr.bf16.mxu0 %v4806
    %5089 = vmatpush1.bf16.msra.mxu0 %v4805
    %5090 = vmatprep.subr.bf16.mxu0 %v4809
    %5091 = vmatpush1.bf16.msra.mxu0 %v4808
    %5092 = vmatprep.subr.bf16.mxu0 0
    %5093 = vmatpush1.bf16.msra.mxu0 0
    %5094 = vmatprep.subr.bf16.mxu0 0
    %5095 = vmatpush1.bf16.msra.mxu0 0
    %5096 = vmatprep.subr.bf16.mxu0 0
    %5097 = vmatpush1.bf16.msra.mxu0 0
    %5098 = vmatprep.subr.bf16.mxu0 0
    %5099 = vmatpush1.bf16.msra.mxu0 0
    %5100 = vmatprep.subr.bf16.mxu0 0
    %5101 = vmatpush1.bf16.msra.mxu0 0
    %5102 = vmatprep.subr.bf16.mxu0 0
    %5103 = vmatpush1.bf16.msra.mxu0 0
    %5104 = vmatprep.subr.bf16.mxu0 0
    %5105 = vmatpush1.bf16.msra.mxu0 0
    %5106 = vmatprep.subr.bf16.mxu0 0
    %5107 = vmatpush1.bf16.msra.mxu0 0
    %5108 = vmatprep.mubr.bf16.mxu0 0
    %5109 = vmatmul.mubr.bf16.gmra.mrb[0].mxu0 %v4340
    %v5110 = vpop.f32.mrb[0].mxu0
    %v5111 = vadd.f32 %v4918, %v5110
    %v5112 = vpop.f32.mrb[0].mxu0
    %v5113 = vadd.f32 %v4920, %v5112
    %v5114 = vpop.f32.mrb[0].mxu0
    %v5115 = vadd.f32 %v4922, %v5114
    %v5116 = vpop.f32.mrb[0].mxu0
    %v5117 = vadd.f32 %v4924, %v5116
    %5118 = vmatprep.mubr.bf16.mxu0 0
    %5119 = vmatmul.mubr.bf16.gmra.mrb[0].mxu0 %v4343
    %v5120 = vpop.f32.mrb[0].mxu0
    %v5121 = vadd.f32 %v4928, %v5120
    %v5122 = vpop.f32.mrb[0].mxu0
    %v5123 = vadd.f32 %v4930, %v5122
    %v5124 = vpop.f32.mrb[0].mxu0
    %v5125 = vadd.f32 %v4932, %v5124
    %v5126 = vpop.f32.mrb[0].mxu0
    %v5127 = vadd.f32 %v4934, %v5126
    %5128 = vmatprep.mubr.bf16.mxu0 0
    %5129 = vmatmul.mubr.bf16.gmra.mrb[0].mxu0 %v4346
    %v5130 = vpop.f32.mrb[0].mxu0
    %v5131 = vadd.f32 %v4938, %v5130
    %v5132 = vpop.f32.mrb[0].mxu0
    %v5133 = vadd.f32 %v4940, %v5132
    %v5134 = vpop.f32.mrb[0].mxu0
    %v5135 = vadd.f32 %v4942, %v5134
    %v5136 = vpop.f32.mrb[0].mxu0
    %v5137 = vadd.f32 %v4944, %v5136
    %5138 = vmatprep.mubr.bf16.mxu0 0
    %5139 = vmatmul.mubr.bf16.gmra.mrb[0].mxu0 %v4349
    %v5140 = vpop.f32.mrb[0].mxu0
    %v5141 = vadd.f32 %v4948, %v5140
    %v5142 = vpop.f32.mrb[0].mxu0
    %v5143 = vadd.f32 %v4950, %v5142
    %v5144 = vpop.f32.mrb[0].mxu0
    %v5145 = vadd.f32 %v4952, %v5144
    %v5146 = vpop.f32.mrb[0].mxu0
    %v5147 = vadd.f32 %v4954, %v5146
    %5148 = vmatprep.mubr.bf16.mxu0 0
    %5149 = vmatmul.mubr.bf16.gmra.mrb[0].mxu0 %v4352
    %v5150 = vpop.f32.mrb[0].mxu0
    %v5151 = vadd.f32 %v4958, %v5150
    %v5152 = vpop.f32.mrb[0].mxu0
    %v5153 = vadd.f32 %v4960, %v5152
    %v5154 = vpop.f32.mrb[0].mxu0
    %v5155 = vadd.f32 %v4962, %v5154
    %v5156 = vpop.f32.mrb[0].mxu0
    %v5157 = vadd.f32 %v4964, %v5156
    %5158 = vmatprep.mubr.bf16.mxu0 0
    %5159 = vmatmul.mubr.bf16.gmra.mrb[0].mxu0 %v4355
    %v5160 = vpop.f32.mrb[0].mxu0
    %v5161 = vadd.f32 %v4968, %v5160
    %v5162 = vpop.f32.mrb[0].mxu0
    %v5163 = vadd.f32 %v4970, %v5162
    %v5164 = vpop.f32.mrb[0].mxu0
    %v5165 = vadd.f32 %v4972, %v5164
    %v5166 = vpop.f32.mrb[0].mxu0
    %v5167 = vadd.f32 %v4974, %v5166
    %5168 = vmatprep.mubr.bf16.mxu0 0
    %5169 = vmatmul.mubr.bf16.gmra.mrb[0].mxu0 %v4358
    %v5170 = vpop.f32.mrb[0].mxu0
    %v5171 = vadd.f32 %v4978, %v5170
    %v5172 = vpop.f32.mrb[0].mxu0
    %v5173 = vadd.f32 %v4980, %v5172
    %v5174 = vpop.f32.mrb[0].mxu0
    %v5175 = vadd.f32 %v4982, %v5174
    %v5176 = vpop.f32.mrb[0].mxu0
    %v5177 = vadd.f32 %v4984, %v5176
    %5178 = vmatprep.mubr.bf16.mxu0 0
    %5179 = vmatmul.mubr.bf16.gmra.mrb[0].mxu0 %v4361
    %v5180 = vpop.f32.mrb[0].mxu0
    %v5181 = vadd.f32 %v4988, %v5180
    %v5182 = vpop.f32.mrb[0].mxu0
    %v5183 = vadd.f32 %v4990, %v5182
    %v5184 = vpop.f32.mrb[0].mxu0
    %v5185 = vadd.f32 %v4992, %v5184
    %v5186 = vpop.f32.mrb[0].mxu0
    %v5187 = vadd.f32 %v4994, %v5186
    %5188 = vmatprep.mubr.bf16.mxu0 0
    %5189 = vmatmul.mubr.bf16.gmra.mrb[0].mxu0 %v4364
    %v5190 = vpop.f32.mrb[0].mxu0
    %v5191 = vadd.f32 %v4998, %v5190
    %v5192 = vpop.f32.mrb[0].mxu0
    %v5193 = vadd.f32 %v5000, %v5192
    %v5194 = vpop.f32.mrb[0].mxu0
    %v5195 = vadd.f32 %v5002, %v5194
    %v5196 = vpop.f32.mrb[0].mxu0
    %v5197 = vadd.f32 %v5004, %v5196
    %5198 = vmatprep.mubr.bf16.mxu0 0
    %5199 = vmatmul.mubr.bf16.gmra.mrb[0].mxu0 %v4367
    %v5200 = vpop.f32.mrb[0].mxu0
    %v5201 = vadd.f32 %v5008, %v5200
    %v5202 = vpop.f32.mrb[0].mxu0
    %v5203 = vadd.f32 %v5010, %v5202
    %v5204 = vpop.f32.mrb[0].mxu0
    %v5205 = vadd.f32 %v5012, %v5204
    %v5206 = vpop.f32.mrb[0].mxu0
    %v5207 = vadd.f32 %v5014, %v5206
    %5208 = vmatprep.mubr.bf16.mxu0 0
    %5209 = vmatmul.mubr.bf16.gmra.mrb[0].mxu0 %v4370
    %v5210 = vpop.f32.mrb[0].mxu0
    %v5211 = vadd.f32 %v5018, %v5210
    %v5212 = vpop.f32.mrb[0].mxu0
    %v5213 = vadd.f32 %v5020, %v5212
    %v5214 = vpop.f32.mrb[0].mxu0
    %v5215 = vadd.f32 %v5022, %v5214
    %v5216 = vpop.f32.mrb[0].mxu0
    %v5217 = vadd.f32 %v5024, %v5216
    %5218 = vmatprep.mubr.bf16.mxu0 0
    %5219 = vmatmul.mubr.bf16.gmra.mrb[0].mxu0 %v4373
    %v5220 = vpop.f32.mrb[0].mxu0
    %v5221 = vadd.f32 %v5028, %v5220
    %v5222 = vpop.f32.mrb[0].mxu0
    %v5223 = vadd.f32 %v5030, %v5222
    %v5224 = vpop.f32.mrb[0].mxu0
    %v5225 = vadd.f32 %v5032, %v5224
    %v5226 = vpop.f32.mrb[0].mxu0
    %v5227 = vadd.f32 %v5034, %v5226
    %5228 = vmatprep.mubr.bf16.mxu0 0
    %5229 = vmatmul.mubr.bf16.gmra.mrb[0].mxu0 %v4376
    %v5230 = vpop.f32.mrb[0].mxu0
    %v5231 = vadd.f32 %v5038, %v5230
    %v5232 = vpop.f32.mrb[0].mxu0
    %v5233 = vadd.f32 %v5040, %v5232
    %v5234 = vpop.f32.mrb[0].mxu0
    %v5235 = vadd.f32 %v5042, %v5234
    %v5236 = vpop.f32.mrb[0].mxu0
    %v5237 = vadd.f32 %v5044, %v5236
    %5238 = vmatprep.mubr.bf16.mxu0 0
    %5239 = vmatmul.mubr.bf16.gmra.mrb[0].mxu0 %v4379
    %v5240 = vpop.f32.mrb[0].mxu0
    %v5241 = vadd.f32 %v5048, %v5240
    %v5242 = vpop.f32.mrb[0].mxu0
    %v5243 = vadd.f32 %v5050, %v5242
    %v5244 = vpop.f32.mrb[0].mxu0
    %v5245 = vadd.f32 %v5052, %v5244
    %v5246 = vpop.f32.mrb[0].mxu0
    %v5247 = vadd.f32 %v5054, %v5246
    %5248 = vmatprep.mubr.bf16.mxu0 0
    %5249 = vmatmul.mubr.bf16.gmra.mrb[0].mxu0 %v4382
    %v5250 = vpop.f32.mrb[0].mxu0
    %v5251 = vadd.f32 %v5058, %v5250
    %v5252 = vpop.f32.mrb[0].mxu0
    %v5253 = vadd.f32 %v5060, %v5252
    %v5254 = vpop.f32.mrb[0].mxu0
    %v5255 = vadd.f32 %v5062, %v5254
    %v5256 = vpop.f32.mrb[0].mxu0
    %v5257 = vadd.f32 %v5064, %v5256
    %5258 = vmatprep.mubr.bf16.mxu0 0
    %5259 = vmatmul.mubr.bf16.gmra.mrb[0].mxu0 %v4385
    %v5260 = vpop.f32.mrb[0].mxu0
    %v5261 = vadd.f32 %v5068, %v5260
    %v5262 = vpop.f32.mrb[0].mxu0
    %v5263 = vadd.f32 %v5070, %v5262
    %v5264 = vpop.f32.mrb[0].mxu0
    %v5265 = vadd.f32 %v5072, %v5264
    %v5266 = vpop.f32.mrb[0].mxu0
    %v5267 = vadd.f32 %v5074, %v5266
    %5268 = vdwg.mxu0
    %5269 = vmatprep.subr.bf16.mxu0 0
    %5270 = vmatpush1.bf16.msra.mxu0 %v4741
    %5271 = vmatprep.subr.bf16.mxu0 0
    %5272 = vmatpush1.bf16.msra.mxu0 %v4744
    %5273 = vmatprep.subr.bf16.mxu0 0
    %5274 = vmatpush1.bf16.msra.mxu0 %v4747
    %5275 = vmatprep.subr.bf16.mxu0 0
    %5276 = vmatpush1.bf16.msra.mxu0 %v4750
    %5277 = vmatprep.subr.bf16.mxu0 0
    %5278 = vmatpush1.bf16.msra.mxu0 %v4753
    %5279 = vmatprep.subr.bf16.mxu0 0
    %5280 = vmatpush1.bf16.msra.mxu0 %v4756
    %5281 = vmatprep.subr.bf16.mxu0 0
    %5282 = vmatpush1.bf16.msra.mxu0 %v4759
    %5283 = vmatprep.subr.bf16.mxu0 0
    %5284 = vmatpush1.bf16.msra.mxu0 %v4762
    %5285 = vmatprep.subr.bf16.mxu0 0
    %5286 = vmatpush1.bf16.msra.mxu0 %v4765
    %5287 = vmatprep.subr.bf16.mxu0 0
    %5288 = vmatpush1.bf16.msra.mxu0 %v4768
    %5289 = vmatprep.subr.bf16.mxu0 0
    %5290 = vmatpush1.bf16.msra.mxu0 %v4771
    %5291 = vmatprep.subr.bf16.mxu0 0
    %5292 = vmatpush1.bf16.msra.mxu0 %v4774
    %5293 = vmatprep.subr.bf16.mxu0 0
    %5294 = vmatpush1.bf16.msra.mxu0 %v4777
    %5295 = vmatprep.subr.bf16.mxu0 0
    %5296 = vmatpush1.bf16.msra.mxu0 %v4780
    %5297 = vmatprep.subr.bf16.mxu0 0
    %5298 = vmatpush1.bf16.msra.mxu0 %v4783
    %5299 = vmatprep.subr.bf16.mxu0 0
    %5300 = vmatpush1.bf16.msra.mxu0 %v4786
    %5301 = vmatprep.mubr.bf16.mxu0 %v4339
    %5302 = vmatmul.mubr.bf16.gmra.mrb[0].mxu0 %v4338
    %v5303 = vpop.f32.mrb[0].mxu0
    %v5304 = vadd.f32 %v4495, %v5303
    %v5305 = vpop.f32.mrb[0].mxu0
    %v5306 = vpop.f32.mrb[0].mxu0
    %v5307 = vadd.f32 %v4495, %v5306
    %v5308 = vpop.f32.mrb[0].mxu0
    %5309 = vmatprep.mubr.bf16.mxu0 %v4342
    %5310 = vmatmul.mubr.bf16.gmra.mrb[0].mxu0 %v4341
    %v5311 = vpop.f32.mrb[0].mxu0
    %v5312 = vadd.f32 %v4495, %v5311
    %v5313 = vpop.f32.mrb[0].mxu0
    %v5314 = vpop.f32.mrb[0].mxu0
    %v5315 = vadd.f32 %v4495, %v5314
    %v5316 = vpop.f32.mrb[0].mxu0
    %5317 = vmatprep.mubr.bf16.mxu0 %v4345
    %5318 = vmatmul.mubr.bf16.gmra.mrb[0].mxu0 %v4344
    %v5319 = vpop.f32.mrb[0].mxu0
    %v5320 = vadd.f32 %v4495, %v5319
    %v5321 = vpop.f32.mrb[0].mxu0
    %v5322 = vpop.f32.mrb[0].mxu0
    %v5323 = vadd.f32 %v4495, %v5322
    %v5324 = vpop.f32.mrb[0].mxu0
    %5325 = vmatprep.mubr.bf16.mxu0 %v4348
    %5326 = vmatmul.mubr.bf16.gmra.mrb[0].mxu0 %v4347
    %v5327 = vpop.f32.mrb[0].mxu0
    %v5328 = vadd.f32 %v4495, %v5327
    %v5329 = vpop.f32.mrb[0].mxu0
    %v5330 = vpop.f32.mrb[0].mxu0
    %v5331 = vadd.f32 %v4495, %v5330
    %v5332 = vpop.f32.mrb[0].mxu0
    %5333 = vmatprep.mubr.bf16.mxu0 %v4351
    %5334 = vmatmul.mubr.bf16.gmra.mrb[0].mxu0 %v4350
    %v5335 = vpop.f32.mrb[0].mxu0
    %v5336 = vadd.f32 %v4495, %v5335
    %v5337 = vpop.f32.mrb[0].mxu0
    %v5338 = vpop.f32.mrb[0].mxu0
    %v5339 = vadd.f32 %v4495, %v5338
    %v5340 = vpop.f32.mrb[0].mxu0
    %5341 = vmatprep.mubr.bf16.mxu0 %v4354
    %5342 = vmatmul.mubr.bf16.gmra.mrb[0].mxu0 %v4353
    %v5343 = vpop.f32.mrb[0].mxu0
    %v5344 = vadd.f32 %v4495, %v5343
    %v5345 = vpop.f32.mrb[0].mxu0
    %v5346 = vpop.f32.mrb[0].mxu0
    %v5347 = vadd.f32 %v4495, %v5346
    %v5348 = vpop.f32.mrb[0].mxu0
    %5349 = vmatprep.mubr.bf16.mxu0 %v4357
    %5350 = vmatmul.mubr.bf16.gmra.mrb[0].mxu0 %v4356
    %v5351 = vpop.f32.mrb[0].mxu0
    %v5352 = vadd.f32 %v4495, %v5351
    %v5353 = vpop.f32.mrb[0].mxu0
    %v5354 = vpop.f32.mrb[0].mxu0
    %v5355 = vadd.f32 %v4495, %v5354
    %v5356 = vpop.f32.mrb[0].mxu0
    %5357 = vmatprep.mubr.bf16.mxu0 %v4360
    %5358 = vmatmul.mubr.bf16.gmra.mrb[0].mxu0 %v4359
    %v5359 = vpop.f32.mrb[0].mxu0
    %v5360 = vadd.f32 %v4495, %v5359
    %v5361 = vpop.f32.mrb[0].mxu0
    %v5362 = vpop.f32.mrb[0].mxu0
    %v5363 = vadd.f32 %v4495, %v5362
    %v5364 = vpop.f32.mrb[0].mxu0
    %5365 = vmatprep.mubr.bf16.mxu0 %v4363
    %5366 = vmatmul.mubr.bf16.gmra.mrb[0].mxu0 %v4362
    %v5367 = vpop.f32.mrb[0].mxu0
    %v5368 = vadd.f32 %v4495, %v5367
    %v5369 = vpop.f32.mrb[0].mxu0
    %v5370 = vpop.f32.mrb[0].mxu0
    %v5371 = vadd.f32 %v4495, %v5370
    %v5372 = vpop.f32.mrb[0].mxu0
    %5373 = vmatprep.mubr.bf16.mxu0 %v4366
    %5374 = vmatmul.mubr.bf16.gmra.mrb[0].mxu0 %v4365
    %v5375 = vpop.f32.mrb[0].mxu0
    %v5376 = vadd.f32 %v4495, %v5375
    %v5377 = vpop.f32.mrb[0].mxu0
    %v5378 = vpop.f32.mrb[0].mxu0
    %v5379 = vadd.f32 %v4495, %v5378
    %v5380 = vpop.f32.mrb[0].mxu0
    %5381 = vmatprep.mubr.bf16.mxu0 %v4369
    %5382 = vmatmul.mubr.bf16.gmra.mrb[0].mxu0 %v4368
    %v5383 = vpop.f32.mrb[0].mxu0
    %v5384 = vadd.f32 %v4495, %v5383
    %v5385 = vpop.f32.mrb[0].mxu0
    %v5386 = vpop.f32.mrb[0].mxu0
    %v5387 = vadd.f32 %v4495, %v5386
    %v5388 = vpop.f32.mrb[0].mxu0
    %5389 = vmatprep.mubr.bf16.mxu0 %v4372
    %5390 = vmatmul.mubr.bf16.gmra.mrb[0].mxu0 %v4371
    %v5391 = vpop.f32.mrb[0].mxu0
    %v5392 = vadd.f32 %v4495, %v5391
    %v5393 = vpop.f32.mrb[0].mxu0
    %v5394 = vpop.f32.mrb[0].mxu0
    %v5395 = vadd.f32 %v4495, %v5394
    %v5396 = vpop.f32.mrb[0].mxu0
    %5397 = vmatprep.mubr.bf16.mxu0 %v4375
    %5398 = vmatmul.mubr.bf16.gmra.mrb[0].mxu0 %v4374
    %v5399 = vpop.f32.mrb[0].mxu0
    %v5400 = vadd.f32 %v4495, %v5399
    %v5401 = vpop.f32.mrb[0].mxu0
    %v5402 = vpop.f32.mrb[0].mxu0
    %v5403 = vadd.f32 %v4495, %v5402
    %v5404 = vpop.f32.mrb[0].mxu0
    %5405 = vmatprep.mubr.bf16.mxu0 %v4378
    %5406 = vmatmul.mubr.bf16.gmra.mrb[0].mxu0 %v4377
    %v5407 = vpop.f32.mrb[0].mxu0
    %v5408 = vadd.f32 %v4495, %v5407
    %v5409 = vpop.f32.mrb[0].mxu0
    %v5410 = vpop.f32.mrb[0].mxu0
    %v5411 = vadd.f32 %v4495, %v5410
    %v5412 = vpop.f32.mrb[0].mxu0
    %5413 = vmatprep.mubr.bf16.mxu0 %v4381
    %5414 = vmatmul.mubr.bf16.gmra.mrb[0].mxu0 %v4380
    %v5415 = vpop.f32.mrb[0].mxu0
    %v5416 = vadd.f32 %v4495, %v5415
    %v5417 = vpop.f32.mrb[0].mxu0
    %v5418 = vpop.f32.mrb[0].mxu0
    %v5419 = vadd.f32 %v4495, %v5418
    %v5420 = vpop.f32.mrb[0].mxu0
    %5421 = vmatprep.mubr.bf16.mxu0 %v4384
    %5422 = vmatmul.mubr.bf16.gmra.mrb[0].mxu0 %v4383
    %v5423 = vpop.f32.mrb[0].mxu0
    %v5424 = vadd.f32 %v4495, %v5423
    %v5425 = vpop.f32.mrb[0].mxu0
    %v5426 = vpop.f32.mrb[0].mxu0
    %v5427 = vadd.f32 %v4495, %v5426
    %v5428 = vpop.f32.mrb[0].mxu0
    %5429 = vdwg.mxu0
    %5430 = vmatprep.subr.bf16.mxu0 0
    %5431 = vmatpush1.bf16.msra.mxu0 %v4789
    %5432 = vmatprep.subr.bf16.mxu0 0
    %5433 = vmatpush1.bf16.msra.mxu0 %v4792
    %5434 = vmatprep.subr.bf16.mxu0 0
    %5435 = vmatpush1.bf16.msra.mxu0 %v4795
    %5436 = vmatprep.subr.bf16.mxu0 0
    %5437 = vmatpush1.bf16.msra.mxu0 %v4798
    %5438 = vmatprep.subr.bf16.mxu0 0
    %5439 = vmatpush1.bf16.msra.mxu0 %v4801
    %5440 = vmatprep.subr.bf16.mxu0 0
    %5441 = vmatpush1.bf16.msra.mxu0 %v4804
    %5442 = vmatprep.subr.bf16.mxu0 0
    %5443 = vmatpush1.bf16.msra.mxu0 %v4807
    %5444 = vmatprep.subr.bf16.mxu0 0
    %5445 = vmatpush1.bf16.msra.mxu0 %v4810
    %5446 = vmatprep.subr.bf16.mxu0 0
    %5447 = vmatpush1.bf16.msra.mxu0 0
    %5448 = vmatprep.subr.bf16.mxu0 0
    %5449 = vmatpush1.bf16.msra.mxu0 0
    %5450 = vmatprep.subr.bf16.mxu0 0
    %5451 = vmatpush1.bf16.msra.mxu0 0
    %5452 = vmatprep.subr.bf16.mxu0 0
    %5453 = vmatpush1.bf16.msra.mxu0 0
    %5454 = vmatprep.subr.bf16.mxu0 0
    %5455 = vmatpush1.bf16.msra.mxu0 0
    %5456 = vmatprep.subr.bf16.mxu0 0
    %5457 = vmatpush1.bf16.msra.mxu0 0
    %5458 = vmatprep.subr.bf16.mxu0 0
    %5459 = vmatpush1.bf16.msra.mxu0 0
    %5460 = vmatprep.subr.bf16.mxu0 0
    %5461 = vmatpush1.bf16.msra.mxu0 0
    %5462 = vmatprep.mubr.bf16.mxu0 0
    %5463 = vmatmul.mubr.bf16.gmra.mrb[0].mxu0 %v4340
    %v5464 = vpop.f32.mrb[0].mxu0
    %v5465 = vadd.f32 %v5304, %v5464
    %v5466 = vpop.f32.mrb[0].mxu0
    %v5467 = vpop.f32.mrb[0].mxu0
    %v5468 = vadd.f32 %v5307, %v5467
    %v5469 = vpop.f32.mrb[0].mxu0
    %5470 = vmatprep.mubr.bf16.mxu0 0
    %5471 = vmatmul.mubr.bf16.gmra.mrb[0].mxu0 %v4343
    %v5472 = vpop.f32.mrb[0].mxu0
    %v5473 = vadd.f32 %v5312, %v5472
    %v5474 = vpop.f32.mrb[0].mxu0
    %v5475 = vpop.f32.mrb[0].mxu0
    %v5476 = vadd.f32 %v5315, %v5475
    %v5477 = vpop.f32.mrb[0].mxu0
    %5478 = vmatprep.mubr.bf16.mxu0 0
    %5479 = vmatmul.mubr.bf16.gmra.mrb[0].mxu0 %v4346
    %v5480 = vpop.f32.mrb[0].mxu0
    %v5481 = vadd.f32 %v5320, %v5480
    %v5482 = vpop.f32.mrb[0].mxu0
    %v5483 = vpop.f32.mrb[0].mxu0
    %v5484 = vadd.f32 %v5323, %v5483
    %v5485 = vpop.f32.mrb[0].mxu0
    %5486 = vmatprep.mubr.bf16.mxu0 0
    %5487 = vmatmul.mubr.bf16.gmra.mrb[0].mxu0 %v4349
    %v5488 = vpop.f32.mrb[0].mxu0
    %v5489 = vadd.f32 %v5328, %v5488
    %v5490 = vpop.f32.mrb[0].mxu0
    %v5491 = vpop.f32.mrb[0].mxu0
    %v5492 = vadd.f32 %v5331, %v5491
    %v5493 = vpop.f32.mrb[0].mxu0
    %5494 = vmatprep.mubr.bf16.mxu0 0
    %5495 = vmatmul.mubr.bf16.gmra.mrb[0].mxu0 %v4352
    %v5496 = vpop.f32.mrb[0].mxu0
    %v5497 = vadd.f32 %v5336, %v5496
    %v5498 = vpop.f32.mrb[0].mxu0
    %v5499 = vpop.f32.mrb[0].mxu0
    %v5500 = vadd.f32 %v5339, %v5499
    %v5501 = vpop.f32.mrb[0].mxu0
    %5502 = vmatprep.mubr.bf16.mxu0 0
    %5503 = vmatmul.mubr.bf16.gmra.mrb[0].mxu0 %v4355
    %v5504 = vpop.f32.mrb[0].mxu0
    %v5505 = vadd.f32 %v5344, %v5504
    %v5506 = vpop.f32.mrb[0].mxu0
    %v5507 = vpop.f32.mrb[0].mxu0
    %v5508 = vadd.f32 %v5347, %v5507
    %v5509 = vpop.f32.mrb[0].mxu0
    %5510 = vmatprep.mubr.bf16.mxu0 0
    %5511 = vmatmul.mubr.bf16.gmra.mrb[0].mxu0 %v4358
    %v5512 = vpop.f32.mrb[0].mxu0
    %v5513 = vadd.f32 %v5352, %v5512
    %v5514 = vpop.f32.mrb[0].mxu0
    %v5515 = vpop.f32.mrb[0].mxu0
    %v5516 = vadd.f32 %v5355, %v5515
    %v5517 = vpop.f32.mrb[0].mxu0
    %5518 = vmatprep.mubr.bf16.mxu0 0
    %5519 = vmatmul.mubr.bf16.gmra.mrb[0].mxu0 %v4361
    %v5520 = vpop.f32.mrb[0].mxu0
    %v5521 = vadd.f32 %v5360, %v5520
    %v5522 = vpop.f32.mrb[0].mxu0
    %v5523 = vpop.f32.mrb[0].mxu0
    %v5524 = vadd.f32 %v5363, %v5523
    %v5525 = vpop.f32.mrb[0].mxu0
    %5526 = vmatprep.mubr.bf16.mxu0 0
    %5527 = vmatmul.mubr.bf16.gmra.mrb[0].mxu0 %v4364
    %v5528 = vpop.f32.mrb[0].mxu0
    %v5529 = vadd.f32 %v5368, %v5528
    %v5530 = vpop.f32.mrb[0].mxu0
    %v5531 = vpop.f32.mrb[0].mxu0
    %v5532 = vadd.f32 %v5371, %v5531
    %v5533 = vpop.f32.mrb[0].mxu0
    %5534 = vmatprep.mubr.bf16.mxu0 0
    %5535 = vmatmul.mubr.bf16.gmra.mrb[0].mxu0 %v4367
    %v5536 = vpop.f32.mrb[0].mxu0
    %v5537 = vadd.f32 %v5376, %v5536
    %v5538 = vpop.f32.mrb[0].mxu0
    %v5539 = vpop.f32.mrb[0].mxu0
    %v5540 = vadd.f32 %v5379, %v5539
    %v5541 = vpop.f32.mrb[0].mxu0
    %5542 = vmatprep.mubr.bf16.mxu0 0
    %5543 = vmatmul.mubr.bf16.gmra.mrb[0].mxu0 %v4370
    %v5544 = vpop.f32.mrb[0].mxu0
    %v5545 = vadd.f32 %v5384, %v5544
    %v5546 = vpop.f32.mrb[0].mxu0
    %v5547 = vpop.f32.mrb[0].mxu0
    %v5548 = vadd.f32 %v5387, %v5547
    %v5549 = vpop.f32.mrb[0].mxu0
    %5550 = vmatprep.mubr.bf16.mxu0 0
    %5551 = vmatmul.mubr.bf16.gmra.mrb[0].mxu0 %v4373
    %v5552 = vpop.f32.mrb[0].mxu0
    %v5553 = vadd.f32 %v5392, %v5552
    %v5554 = vpop.f32.mrb[0].mxu0
    %v5555 = vpop.f32.mrb[0].mxu0
    %v5556 = vadd.f32 %v5395, %v5555
    %v5557 = vpop.f32.mrb[0].mxu0
    %5558 = vmatprep.mubr.bf16.mxu0 0
    %5559 = vmatmul.mubr.bf16.gmra.mrb[0].mxu0 %v4376
    %v5560 = vpop.f32.mrb[0].mxu0
    %v5561 = vadd.f32 %v5400, %v5560
    %v5562 = vpop.f32.mrb[0].mxu0
    %v5563 = vpop.f32.mrb[0].mxu0
    %v5564 = vadd.f32 %v5403, %v5563
    %v5565 = vpop.f32.mrb[0].mxu0
    %5566 = vmatprep.mubr.bf16.mxu0 0
    %5567 = vmatmul.mubr.bf16.gmra.mrb[0].mxu0 %v4379
    %v5568 = vpop.f32.mrb[0].mxu0
    %v5569 = vadd.f32 %v5408, %v5568
    %v5570 = vpop.f32.mrb[0].mxu0
    %v5571 = vpop.f32.mrb[0].mxu0
    %v5572 = vadd.f32 %v5411, %v5571
    %v5573 = vpop.f32.mrb[0].mxu0
    %5574 = vmatprep.mubr.bf16.mxu0 0
    %5575 = vmatmul.mubr.bf16.gmra.mrb[0].mxu0 %v4382
    %v5576 = vpop.f32.mrb[0].mxu0
    %v5577 = vadd.f32 %v5416, %v5576
    %v5578 = vpop.f32.mrb[0].mxu0
    %v5579 = vpop.f32.mrb[0].mxu0
    %v5580 = vadd.f32 %v5419, %v5579
    %v5581 = vpop.f32.mrb[0].mxu0
    %5582 = vmatprep.mubr.bf16.mxu0 0
    %5583 = vmatmul.mubr.bf16.gmra.mrb[0].mxu0 %v4385
    %v5584 = vpop.f32.mrb[0].mxu0
    %v5585 = vadd.f32 %v5424, %v5584
    %v5586 = vpop.f32.mrb[0].mxu0
    %v5587 = vpop.f32.mrb[0].mxu0
    %v5588 = vadd.f32 %v5427, %v5587
    %v5589 = vpop.f32.mrb[0].mxu0
    %5590 = vdwg.mxu0
    %v5591 = vld [vmem:[#allocation5] sm:$0xff]
    %v5592 = vld [vmem:[#allocation5 + $0x8] sm:$0xf]
    %v5593 = vld [vmem:[#allocation5 + $0xc] sm:$0xff]
    %v5594 = vld [vmem:[#allocation5 + $0x14] sm:$0xf]
    %v5595 = vld [vmem:[#allocation5 + $0x18] sm:$0xff]
    %v5596 = vld [vmem:[#allocation5 + $0x20] sm:$0xf]
    %v5597 = vld [vmem:[#allocation5 + $0x24] sm:$0xff]
    %v5598 = vld [vmem:[#allocation5 + $0x2c] sm:$0xf]
    %v5599 = vld [vmem:[#allocation5 + $0x30] sm:$0xff]
    %v5600 = vld [vmem:[#allocation5 + $0x38] sm:$0xf]
    %v5601 = vld [vmem:[#allocation5 + $0x3c] sm:$0xff]
    %v5602 = vld [vmem:[#allocation5 + $0x44] sm:$0xf]
    %v5603 = vld [vmem:[#allocation5 + $0x48] sm:$0xff]
    %v5604 = vld [vmem:[#allocation5 + $0x50] sm:$0xf]
    %v5605 = vld [vmem:[#allocation5 + $0x54] sm:$0xff]
    %v5606 = vld [vmem:[#allocation5 + $0x5c] sm:$0xf]
    %v5607 = vld [vmem:[#allocation5 + $0x60] sm:$0xff]
    %v5608 = vld [vmem:[#allocation5 + $0x68] sm:$0xf]
    %v5609 = vld [vmem:[#allocation5 + $0x6c] sm:$0xff]
    %v5610 = vld [vmem:[#allocation5 + $0x74] sm:$0xf]
    %v5611 = vld [vmem:[#allocation5 + $0x78] sm:$0xff]
    %v5612 = vld [vmem:[#allocation5 + $0x80] sm:$0xf]
    %v5613 = vld [vmem:[#allocation5 + $0x84] sm:$0xff]
    %v5614 = vld [vmem:[#allocation5 + $0x8c] sm:$0xf]
    %v5615 = vld [vmem:[#allocation5 + $0x90] sm:$0xff]
    %v5616 = vld [vmem:[#allocation5 + $0x98] sm:$0xf]
    %v5617 = vld [vmem:[#allocation5 + $0x9c] sm:$0xff]
    %v5618 = vld [vmem:[#allocation5 + $0xa4] sm:$0xf]
    %v5619 = vld [vmem:[#allocation5 + $0xa8] sm:$0xff]
    %v5620 = vld [vmem:[#allocation5 + $0xb0] sm:$0xf]
    %v5621 = vld [vmem:[#allocation5 + $0xb4] sm:$0xff]
    %v5622 = vld [vmem:[#allocation5 + $0xbc] sm:$0xf]
    %v5623 = vld [vmem:[#allocation5 + $0xc0] sm:$0xff]
    %v5624 = vld [vmem:[#allocation5 + $0xc8] sm:$0xf]
    %v5625 = vld [vmem:[#allocation5 + $0xcc] sm:$0xff]
    %v5626 = vld [vmem:[#allocation5 + $0xd4] sm:$0xf]
    %v5627 = vld [vmem:[#allocation5 + $0xd8] sm:$0xff]
    %v5628 = vld [vmem:[#allocation5 + $0xe0] sm:$0xf]
    %v5629 = vld [vmem:[#allocation5 + $0xe4] sm:$0xff]
    %v5630 = vld [vmem:[#allocation5 + $0xec] sm:$0xf]
    %v5631 = vld [vmem:[#allocation5 + $0xf0] sm:$0xff]
    %v5632 = vld [vmem:[#allocation5 + $0xf8] sm:$0xf]
    %v5633 = vld [vmem:[#allocation5 + $0xfc] sm:$0xff]
    %v5634 = vld [vmem:[#allocation5 + $0x104] sm:$0xf]
    %v5635 = vld [vmem:[#allocation5 + $0x108] sm:$0xff]
    %v5636 = vld [vmem:[#allocation5 + $0x110] sm:$0xf]
    %v5637 = vld [vmem:[#allocation5 + $0x114] sm:$0xff]
    %v5638 = vld [vmem:[#allocation5 + $0x11c] sm:$0xf]
    %v5639 = vld [vmem:[#allocation5 + $0x120] sm:$0xff]
    %v5640 = vld [vmem:[#allocation5 + $0x128] sm:$0xf]
    %v5641 = vld [vmem:[#allocation5 + $0x12c] sm:$0xff]
    %v5642 = vld [vmem:[#allocation5 + $0x134] sm:$0xf]
    %v5643 = vld [vmem:[#allocation5 + $0x138] sm:$0xff]
    %v5644 = vld [vmem:[#allocation5 + $0x140] sm:$0xf]
    %v5645 = vld [vmem:[#allocation5 + $0x144] sm:$0xff]
    %v5646 = vld [vmem:[#allocation5 + $0x14c] sm:$0xf]
    %v5647 = vld [vmem:[#allocation5 + $0x150] sm:$0xff]
    %v5648 = vld [vmem:[#allocation5 + $0x158] sm:$0xf]
    %v5649 = vld [vmem:[#allocation5 + $0x15c] sm:$0xff]
    %v5650 = vld [vmem:[#allocation5 + $0x164] sm:$0xf]
    %v5651 = vld [vmem:[#allocation5 + $0x168] sm:$0xff]
    %v5652 = vld [vmem:[#allocation5 + $0x170] sm:$0xf]
    %v5653 = vld [vmem:[#allocation5 + $0x174] sm:$0xff]
    %v5654 = vld [vmem:[#allocation5 + $0x17c] sm:$0xf]
    %v5655 = vunpack.c.l.bf16 %v5591
    %v5656 = vunpack.c.h.bf16 %v5591
    %v5657 = vunpack.c.l.bf16 %v5592
    %v5658 = vunpack.c.l.bf16 %v5593
    %v5659 = vunpack.c.h.bf16 %v5593
    %v5660 = vunpack.c.l.bf16 %v5594
    %v5661 = vunpack.c.l.bf16 %v5595
    %v5662 = vunpack.c.h.bf16 %v5595
    %v5663 = vunpack.c.l.bf16 %v5596
    %v5664 = vunpack.c.l.bf16 %v5597
    %v5665 = vunpack.c.h.bf16 %v5597
    %v5666 = vunpack.c.l.bf16 %v5598
    %v5667 = vunpack.c.l.bf16 %v5599
    %v5668 = vunpack.c.h.bf16 %v5599
    %v5669 = vunpack.c.l.bf16 %v5600
    %v5670 = vunpack.c.l.bf16 %v5601
    %v5671 = vunpack.c.h.bf16 %v5601
    %v5672 = vunpack.c.l.bf16 %v5602
    %v5673 = vunpack.c.l.bf16 %v5603
    %v5674 = vunpack.c.h.bf16 %v5603
    %v5675 = vunpack.c.l.bf16 %v5604
    %v5676 = vunpack.c.l.bf16 %v5605
    %v5677 = vunpack.c.h.bf16 %v5605
    %v5678 = vunpack.c.l.bf16 %v5606
    %v5679 = vunpack.c.l.bf16 %v5607
    %v5680 = vunpack.c.h.bf16 %v5607
    %v5681 = vunpack.c.l.bf16 %v5608
    %v5682 = vunpack.c.l.bf16 %v5609
    %v5683 = vunpack.c.h.bf16 %v5609
    %v5684 = vunpack.c.l.bf16 %v5610
    %v5685 = vunpack.c.l.bf16 %v5611
    %v5686 = vunpack.c.h.bf16 %v5611
    %v5687 = vunpack.c.l.bf16 %v5612
    %v5688 = vunpack.c.l.bf16 %v5613
    %v5689 = vunpack.c.h.bf16 %v5613
    %v5690 = vunpack.c.l.bf16 %v5614
    %v5691 = vunpack.c.l.bf16 %v5615
    %v5692 = vunpack.c.h.bf16 %v5615
    %v5693 = vunpack.c.l.bf16 %v5616
    %v5694 = vunpack.c.l.bf16 %v5617
    %v5695 = vunpack.c.h.bf16 %v5617
    %v5696 = vunpack.c.l.bf16 %v5618
    %v5697 = vunpack.c.l.bf16 %v5619
    %v5698 = vunpack.c.h.bf16 %v5619
    %v5699 = vunpack.c.l.bf16 %v5620
    %v5700 = vunpack.c.l.bf16 %v5621
    %v5701 = vunpack.c.h.bf16 %v5621
    %v5702 = vunpack.c.l.bf16 %v5622
    %v5703 = vunpack.c.l.bf16 %v5623
    %v5704 = vunpack.c.h.bf16 %v5623
    %v5705 = vunpack.c.l.bf16 %v5624
    %v5706 = vunpack.c.l.bf16 %v5625
    %v5707 = vunpack.c.h.bf16 %v5625
    %v5708 = vunpack.c.l.bf16 %v5626
    %v5709 = vunpack.c.l.bf16 %v5627
    %v5710 = vunpack.c.h.bf16 %v5627
    %v5711 = vunpack.c.l.bf16 %v5628
    %v5712 = vunpack.c.l.bf16 %v5629
    %v5713 = vunpack.c.h.bf16 %v5629
    %v5714 = vunpack.c.l.bf16 %v5630
    %v5715 = vunpack.c.l.bf16 %v5631
    %v5716 = vunpack.c.h.bf16 %v5631
    %v5717 = vunpack.c.l.bf16 %v5632
    %v5718 = vunpack.c.l.bf16 %v5633
    %v5719 = vunpack.c.h.bf16 %v5633
    %v5720 = vunpack.c.l.bf16 %v5634
    %v5721 = vunpack.c.l.bf16 %v5635
    %v5722 = vunpack.c.h.bf16 %v5635
    %v5723 = vunpack.c.l.bf16 %v5636
    %v5724 = vunpack.c.l.bf16 %v5637
    %v5725 = vunpack.c.h.bf16 %v5637
    %v5726 = vunpack.c.l.bf16 %v5638
    %v5727 = vunpack.c.l.bf16 %v5639
    %v5728 = vunpack.c.h.bf16 %v5639
    %v5729 = vunpack.c.l.bf16 %v5640
    %v5730 = vunpack.c.l.bf16 %v5641
    %v5731 = vunpack.c.h.bf16 %v5641
    %v5732 = vunpack.c.l.bf16 %v5642
    %v5733 = vunpack.c.l.bf16 %v5643
    %v5734 = vunpack.c.h.bf16 %v5643
    %v5735 = vunpack.c.l.bf16 %v5644
    %v5736 = vunpack.c.l.bf16 %v5645
    %v5737 = vunpack.c.h.bf16 %v5645
    %v5738 = vunpack.c.l.bf16 %v5646
    %v5739 = vunpack.c.l.bf16 %v5647
    %v5740 = vunpack.c.h.bf16 %v5647
    %v5741 = vunpack.c.l.bf16 %v5648
    %v5742 = vunpack.c.l.bf16 %v5649
    %v5743 = vunpack.c.h.bf16 %v5649
    %v5744 = vunpack.c.l.bf16 %v5650
    %v5745 = vunpack.c.l.bf16 %v5651
    %v5746 = vunpack.c.h.bf16 %v5651
    %v5747 = vunpack.c.l.bf16 %v5652
    %v5748 = vunpack.c.l.bf16 %v5653
    %v5749 = vunpack.c.h.bf16 %v5653
    %v5750 = vunpack.c.l.bf16 %v5654
    %v5751 = vmul.f32 %v5111, %v5655
    %v5752 = vmul.f32 %v5113, %v5656
    %v5753 = vmul.f32 %v5465, %v5657
    %v5754 = vmul.f32 %v5115, %v5658
    %v5755 = vmul.f32 %v5117, %v5659
    %v5756 = vmul.f32 %v5468, %v5660
    %v5757 = vmul.f32 %v5121, %v5661
    %v5758 = vmul.f32 %v5123, %v5662
    %v5759 = vmul.f32 %v5473, %v5663
    %v5760 = vmul.f32 %v5125, %v5664
    %v5761 = vmul.f32 %v5127, %v5665
    %v5762 = vmul.f32 %v5476, %v5666
    %v5763 = vmul.f32 %v5131, %v5667
    %v5764 = vmul.f32 %v5133, %v5668
    %v5765 = vmul.f32 %v5481, %v5669
    %v5766 = vmul.f32 %v5135, %v5670
    %v5767 = vmul.f32 %v5137, %v5671
    %v5768 = vmul.f32 %v5484, %v5672
    %v5769 = vmul.f32 %v5141, %v5673
    %v5770 = vmul.f32 %v5143, %v5674
    %v5771 = vmul.f32 %v5489, %v5675
    %v5772 = vmul.f32 %v5145, %v5676
    %v5773 = vmul.f32 %v5147, %v5677
    %v5774 = vmul.f32 %v5492, %v5678
    %v5775 = vmul.f32 %v5151, %v5679
    %v5776 = vmul.f32 %v5153, %v5680
    %v5777 = vmul.f32 %v5497, %v5681
    %v5778 = vmul.f32 %v5155, %v5682
    %v5779 = vmul.f32 %v5157, %v5683
    %v5780 = vmul.f32 %v5500, %v5684
    %v5781 = vmul.f32 %v5161, %v5685
    %v5782 = vmul.f32 %v5163, %v5686
    %v5783 = vmul.f32 %v5505, %v5687
    %v5784 = vmul.f32 %v5165, %v5688
    %v5785 = vmul.f32 %v5167, %v5689
    %v5786 = vmul.f32 %v5508, %v5690
    %v5787 = vmul.f32 %v5171, %v5691
    %v5788 = vmul.f32 %v5173, %v5692
    %v5789 = vmul.f32 %v5513, %v5693
    %v5790 = vmul.f32 %v5175, %v5694
    %v5791 = vmul.f32 %v5177, %v5695
    %v5792 = vmul.f32 %v5516, %v5696
    %v5793 = vmul.f32 %v5181, %v5697
    %v5794 = vmul.f32 %v5183, %v5698
    %v5795 = vmul.f32 %v5521, %v5699
    %v5796 = vmul.f32 %v5185, %v5700
    %v5797 = vmul.f32 %v5187, %v5701
    %v5798 = vmul.f32 %v5524, %v5702
    %v5799 = vmul.f32 %v5191, %v5703
    %v5800 = vmul.f32 %v5193, %v5704
    %v5801 = vmul.f32 %v5529, %v5705
    %v5802 = vmul.f32 %v5195, %v5706
    %v5803 = vmul.f32 %v5197, %v5707
    %v5804 = vmul.f32 %v5532, %v5708
    %v5805 = vmul.f32 %v5201, %v5709
    %v5806 = vmul.f32 %v5203, %v5710
    %v5807 = vmul.f32 %v5537, %v5711
    %v5808 = vmul.f32 %v5205, %v5712
    %v5809 = vmul.f32 %v5207, %v5713
    %v5810 = vmul.f32 %v5540, %v5714
    %v5811 = vmul.f32 %v5211, %v5715
    %v5812 = vmul.f32 %v5213, %v5716
    %v5813 = vmul.f32 %v5545, %v5717
    %v5814 = vmul.f32 %v5215, %v5718
    %v5815 = vmul.f32 %v5217, %v5719
    %v5816 = vmul.f32 %v5548, %v5720
    %v5817 = vmul.f32 %v5221, %v5721
    %v5818 = vmul.f32 %v5223, %v5722
    %v5819 = vmul.f32 %v5553, %v5723
    %v5820 = vmul.f32 %v5225, %v5724
    %v5821 = vmul.f32 %v5227, %v5725
    %v5822 = vmul.f32 %v5556, %v5726
    %v5823 = vmul.f32 %v5231, %v5727
    %v5824 = vmul.f32 %v5233, %v5728
    %v5825 = vmul.f32 %v5561, %v5729
    %v5826 = vmul.f32 %v5235, %v5730
    %v5827 = vmul.f32 %v5237, %v5731
    %v5828 = vmul.f32 %v5564, %v5732
    %v5829 = vmul.f32 %v5241, %v5733
    %v5830 = vmul.f32 %v5243, %v5734
    %v5831 = vmul.f32 %v5569, %v5735
    %v5832 = vmul.f32 %v5245, %v5736
    %v5833 = vmul.f32 %v5247, %v5737
    %v5834 = vmul.f32 %v5572, %v5738
    %v5835 = vmul.f32 %v5251, %v5739
    %v5836 = vmul.f32 %v5253, %v5740
    %v5837 = vmul.f32 %v5577, %v5741
    %v5838 = vmul.f32 %v5255, %v5742
    %v5839 = vmul.f32 %v5257, %v5743
    %v5840 = vmul.f32 %v5580, %v5744
    %v5841 = vmul.f32 %v5261, %v5745
    %v5842 = vmul.f32 %v5263, %v5746
    %v5843 = vmul.f32 %v5585, %v5747
    %v5844 = vmul.f32 %v5265, %v5748
    %v5845 = vmul.f32 %v5267, %v5749
    %v5846 = vmul.f32 %v5588, %v5750
    %5847 = vst [vmem:[#allocation11] sm:$0xff] %v5751
    %5848 = vst [vmem:[#allocation11 + $0x8] sm:$0xff] %v5752
    %5849 = vst [vmem:[#allocation11 + $0x10] sm:$0xff] %v5753
    %5850 = vst [vmem:[#allocation11 + $0x18] sm:$0xff] %v5754
    %5851 = vst [vmem:[#allocation11 + $0x20] sm:$0xff] %v5755
    %5852 = vst [vmem:[#allocation11 + $0x28] sm:$0xff] %v5756
    %5853 = vst [vmem:[#allocation11 + $0x30] sm:$0xff] %v5757
    %5854 = vst [vmem:[#allocation11 + $0x38] sm:$0xff] %v5758
    %5855 = vst [vmem:[#allocation11 + $0x40] sm:$0xff] %v5759
    %5856 = vst [vmem:[#allocation11 + $0x48] sm:$0xff] %v5760
    %5857 = vst [vmem:[#allocation11 + $0x50] sm:$0xff] %v5761
    %5858 = vst [vmem:[#allocation11 + $0x58] sm:$0xff] %v5762
    %5859 = vst [vmem:[#allocation11 + $0x60] sm:$0xff] %v5763
    %5860 = vst [vmem:[#allocation11 + $0x68] sm:$0xff] %v5764
    %5861 = vst [vmem:[#allocation11 + $0x70] sm:$0xff] %v5765
    %5862 = vst [vmem:[#allocation11 + $0x78] sm:$0xff] %v5766
    %5863 = vst [vmem:[#allocation11 + $0x80] sm:$0xff] %v5767
    %5864 = vst [vmem:[#allocation11 + $0x88] sm:$0xff] %v5768
    %5865 = vst [vmem:[#allocation11 + $0x90] sm:$0xff] %v5769
    %5866 = vst [vmem:[#allocation11 + $0x98] sm:$0xff] %v5770
    %5867 = vst [vmem:[#allocation11 + $0xa0] sm:$0xff] %v5771
    %5868 = vst [vmem:[#allocation11 + $0xa8] sm:$0xff] %v5772
    %5869 = vst [vmem:[#allocation11 + $0xb0] sm:$0xff] %v5773
    %5870 = vst [vmem:[#allocation11 + $0xb8] sm:$0xff] %v5774
    %5871 = vst [vmem:[#allocation11 + $0xc0] sm:$0xff] %v5775
    %5872 = vst [vmem:[#allocation11 + $0xc8] sm:$0xff] %v5776
    %5873 = vst [vmem:[#allocation11 + $0xd0] sm:$0xff] %v5777
    %5874 = vst [vmem:[#allocation11 + $0xd8] sm:$0xff] %v5778
    %5875 = vst [vmem:[#allocation11 + $0xe0] sm:$0xff] %v5779
    %5876 = vst [vmem:[#allocation11 + $0xe8] sm:$0xff] %v5780
    %5877 = vst [vmem:[#allocation11 + $0xf0] sm:$0xff] %v5781
    %5878 = vst [vmem:[#allocation11 + $0xf8] sm:$0xff] %v5782
    %5879 = vst [vmem:[#allocation11 + $0x100] sm:$0xff] %v5783
    %5880 = vst [vmem:[#allocation11 + $0x108] sm:$0xff] %v5784
    %5881 = vst [vmem:[#allocation11 + $0x110] sm:$0xff] %v5785
    %5882 = vst [vmem:[#allocation11 + $0x118] sm:$0xff] %v5786
    %5883 = vst [vmem:[#allocation11 + $0x120] sm:$0xff] %v5787
    %5884 = vst [vmem:[#allocation11 + $0x128] sm:$0xff] %v5788
    %5885 = vst [vmem:[#allocation11 + $0x130] sm:$0xff] %v5789
    %5886 = vst [vmem:[#allocation11 + $0x138] sm:$0xff] %v5790
    %5887 = vst [vmem:[#allocation11 + $0x140] sm:$0xff] %v5791
    %5888 = vst [vmem:[#allocation11 + $0x148] sm:$0xff] %v5792
    %5889 = vst [vmem:[#allocation11 + $0x150] sm:$0xff] %v5793
    %5890 = vst [vmem:[#allocation11 + $0x158] sm:$0xff] %v5794
    %5891 = vst [vmem:[#allocation11 + $0x160] sm:$0xff] %v5795
    %5892 = vst [vmem:[#allocation11 + $0x168] sm:$0xff] %v5796
    %5893 = vst [vmem:[#allocation11 + $0x170] sm:$0xff] %v5797
    %5894 = vst [vmem:[#allocation11 + $0x178] sm:$0xff] %v5798
    %5895 = vst [vmem:[#allocation11 + $0x180] sm:$0xff] %v5799
    %5896 = vst [vmem:[#allocation11 + $0x188] sm:$0xff] %v5800
    %5897 = vst [vmem:[#allocation11 + $0x190] sm:$0xff] %v5801
    %5898 = vst [vmem:[#allocation11 + $0x198] sm:$0xff] %v5802
    %5899 = vst [vmem:[#allocation11 + $0x1a0] sm:$0xff] %v5803
    %5900 = vst [vmem:[#allocation11 + $0x1a8] sm:$0xff] %v5804
    %5901 = vst [vmem:[#allocation11 + $0x1b0] sm:$0xff] %v5805
    %5902 = vst [vmem:[#allocation11 + $0x1b8] sm:$0xff] %v5806
    %5903 = vst [vmem:[#allocation11 + $0x1c0] sm:$0xff] %v5807
    %5904 = vst [vmem:[#allocation11 + $0x1c8] sm:$0xff] %v5808
    %5905 = vst [vmem:[#allocation11 + $0x1d0] sm:$0xff] %v5809
    %5906 = vst [vmem:[#allocation11 + $0x1d8] sm:$0xff] %v5810
    %5907 = vst [vmem:[#allocation11 + $0x1e0] sm:$0xff] %v5811
    %5908 = vst [vmem:[#allocation11 + $0x1e8] sm:$0xff] %v5812
    %5909 = vst [vmem:[#allocation11 + $0x1f0] sm:$0xff] %v5813
    %5910 = vst [vmem:[#allocation11 + $0x1f8] sm:$0xff] %v5814
    %5911 = vst [vmem:[#allocation11 + $0x200] sm:$0xff] %v5815
    %5912 = vst [vmem:[#allocation11 + $0x208] sm:$0xff] %v5816
    %5913 = vst [vmem:[#allocation11 + $0x210] sm:$0xff] %v5817
    %5914 = vst [vmem:[#allocation11 + $0x218] sm:$0xff] %v5818
    %5915 = vst [vmem:[#allocation11 + $0x220] sm:$0xff] %v5819
    %5916 = vst [vmem:[#allocation11 + $0x228] sm:$0xff] %v5820
    %5917 = vst [vmem:[#allocation11 + $0x230] sm:$0xff] %v5821
    %5918 = vst [vmem:[#allocation11 + $0x238] sm:$0xff] %v5822
    %5919 = vst [vmem:[#allocation11 + $0x240] sm:$0xff] %v5823
    %5920 = vst [vmem:[#allocation11 + $0x248] sm:$0xff] %v5824
    %5921 = vst [vmem:[#allocation11 + $0x250] sm:$0xff] %v5825
    %5922 = vst [vmem:[#allocation11 + $0x258] sm:$0xff] %v5826
    %5923 = vst [vmem:[#allocation11 + $0x260] sm:$0xff] %v5827
    %5924 = vst [vmem:[#allocation11 + $0x268] sm:$0xff] %v5828
    %5925 = vst [vmem:[#allocation11 + $0x270] sm:$0xff] %v5829
    %5926 = vst [vmem:[#allocation11 + $0x278] sm:$0xff] %v5830
    %5927 = vst [vmem:[#allocation11 + $0x280] sm:$0xff] %v5831
    %5928 = vst [vmem:[#allocation11 + $0x288] sm:$0xff] %v5832
    %5929 = vst [vmem:[#allocation11 + $0x290] sm:$0xff] %v5833
    %5930 = vst [vmem:[#allocation11 + $0x298] sm:$0xff] %v5834
    %5931 = vst [vmem:[#allocation11 + $0x2a0] sm:$0xff] %v5835
    %5932 = vst [vmem:[#allocation11 + $0x2a8] sm:$0xff] %v5836
    %5933 = vst [vmem:[#allocation11 + $0x2b0] sm:$0xff] %v5837
    %5934 = vst [vmem:[#allocation11 + $0x2b8] sm:$0xff] %v5838
    %5935 = vst [vmem:[#allocation11 + $0x2c0] sm:$0xff] %v5839
    %5936 = vst [vmem:[#allocation11 + $0x2c8] sm:$0xff] %v5840
    %5937 = vst [vmem:[#allocation11 + $0x2d0] sm:$0xff] %v5841
    %5938 = vst [vmem:[#allocation11 + $0x2d8] sm:$0xff] %v5842
    %5939 = vst [vmem:[#allocation11 + $0x2e0] sm:$0xff] %v5843
    %5940 = vst [vmem:[#allocation11 + $0x2e8] sm:$0xff] %v5844
    %5941 = vst [vmem:[#allocation11 + $0x2f0] sm:$0xff] %v5845
    %5942 = vst [vmem:[#allocation11 + $0x2f8] sm:$0xff] %v5846
    // Predicated region
    $region54: #{tpu_custom_call.1} parent=1 // pred_check
      _
    $region55: #{tpu_custom_call.1} parent=1 // pred_check_branch
      %5944 = sbr.rel (0) target = $region57
    $region56: #{tpu_custom_call.1} parent=1 // pred_region
      %s5946 = ssub.s32 12288, 12288
      %5947 = vsyncadd [#allocation4], %s5946
      %s5948 = sshll.u32 [#allocation11], 4
      %s5949 = int_to_ptr.vmem [resolvable:$true] %s5948
      %5954 = dma.vmem_to_hbm [thread:$0]  %s5949, 12288, %s8, [#allocation4], 384, 384, 24
    $region57: #{tpu_custom_call.1} parent=1 // pred_fallthru
      _
    // Predicated region
    $region58: #{tpu_custom_call.1} parent=1 // pred_check
      _
    $region59: #{tpu_custom_call.1} parent=1 // pred_check_branch
      %5956 = sbr.rel (0) target = $region61
    $region60: #{tpu_custom_call.1} parent=1 // pred_region
      %5957 = dma.done [#allocation4], 12288
    $region61: #{tpu_custom_call.1} parent=1 // pred_fallthru
      _
    %5958 = vsyncpa [#allocation3], 1
    %5959 = vsyncpa [#allocation6], 1
    %5960 = vsyncpa [#allocation9], 1
    %5961 = vsyncpa [#allocation4], 1

</llo_original>
